<compile_context>
chip_gen: v7x
topology: tpu7x:2x2x1
jax: 0.10.0
libtpu: 0.0.40
codegen_flags: <defaults>
</compile_context>

<pallas_src>
import math

import jax
import jax.numpy as jnp
from jax import lax
from jax.experimental import pallas as pl
from jax.experimental.pallas import tpu as pltpu


# ------------------------------ Pallas kernel ------------------------------ #

def spectral_gcn_kernel(x_ref, wih_ref, whh_ref, bih_ref, bhh_ref,
                        p_ref, cw_ref, wlin_ref, blin_ref, o_ref, gi_ref):
    """Fused forward for ONE chunk of Bc folded batch elements.

    x_ref:    [T*R, F]   time-major rows, R = Bc*N, row = t*R + b_local*N + n
    wih_ref:  [F, 3H]    concatenated input  weights (gate order r, z, n on lanes)
    whh_ref:  [H, 3H]    concatenated recurrent weights
    bih_ref:  [1, 3H]    input  biases (r, z, n)
    bhh_ref:  [1, 3H]    hidden biases (r, z, n)  (b_hn stays inside r*(...) term)
    p_ref:    [R, R]     block-diagonal rank-K spectral projector kron(I_Bc, U_k S_k U_k^T)
    cw_ref:   [L, H, H]  conv weights
    wlin_ref: [H, O_pad], blin_ref: [1, O_pad]   (zero-padded to lane-dense width)
    o_ref:    [R, O_pad]
    gi_ref:   VMEM scratch [T*R, 3H] for the hoisted input projection
    """
    TR = x_ref.shape[0]
    R = p_ref.shape[0]
    H = whh_ref.shape[0]
    T = TR // R
    nlayers = cw_ref.shape[0]
    f32 = jnp.float32

    # ---- hoisted GRU input projection for ALL time steps: one wide matmul,
    #      staged in VMEM scratch so it never sits in vregs across the loop.
    gi_ref[...] = (jnp.dot(x_ref[...], wih_ref[...], preferred_element_type=f32)
                   + bih_ref[...])

    whh = whh_ref[...]
    bhh = bhh_ref[...]

    # ---- recurrent loop: one [R,H]x[H,3H] matmul per step, gates by lane slice
    def step(t, h):
        lo = pl.multiple_of(t * R, R)
        gi = gi_ref[pl.ds(lo, R), :]                                      # [R, 3H]
        gh = jnp.dot(h, whh, preferred_element_type=f32) + bhh            # [R, 3H]
        r = jax.nn.sigmoid(gi[:, 0:H] + gh[:, 0:H])
        z = jax.nn.sigmoid(gi[:, H:2 * H] + gh[:, H:2 * H])
        n = jnp.tanh(gi[:, 2 * H:3 * H] + r * gh[:, 2 * H:3 * H])
        return (1.0 - z) * n + z * h

    h = lax.fori_loop(0, T, step, jnp.zeros((R, H), f32), unroll=True)

    # ---- spectral conv stack: y = relu(P @ (h @ W_l)) + h  (ReLU + residual fused)
    p = p_ref[...]
    for l in range(nlayers):
        hw = jnp.dot(h, cw_ref[l], preferred_element_type=f32)            # [R, H]
        h = jnp.maximum(jnp.dot(p, hw, preferred_element_type=f32), 0.0) + h

    # ---- linear head (lane-dense, padded to O_pad)
    o_ref[...] = jnp.dot(h, wlin_ref[...], preferred_element_type=f32) + blin_ref[...]


# ------------------------------ parameter init ----------------------------- #

def init_params(key, node_features, hidden_dim, num_layers, out_dim):
    keys = jax.random.split(key, 6 + num_layers)
    s = 1.0 / jnp.sqrt(hidden_dim)
    kb = jnp.sqrt(6.0 / hidden_dim)  # kaiming-uniform-style bound for conv weights
    params = {
        "wih": jax.random.uniform(keys[0], (3 * hidden_dim, node_features), jnp.float32, -s, s),
        "whh": jax.random.uniform(keys[1], (3 * hidden_dim, hidden_dim), jnp.float32, -s, s),
        "bih": jax.random.uniform(keys[2], (3 * hidden_dim,), jnp.float32, -s, s),
        "bhh": jax.random.uniform(keys[3], (3 * hidden_dim,), jnp.float32, -s, s),
        "conv_ws": [
            jax.random.uniform(keys[4 + i], (hidden_dim, hidden_dim), jnp.float32, -kb, kb)
            for i in range(num_layers)
        ],
        "w_lin": jax.random.uniform(keys[4 + num_layers], (out_dim, hidden_dim), jnp.float32, -s, s),
        "b_lin": jax.random.uniform(keys[5 + num_layers], (out_dim,), jnp.float32, -s, s),
    }
    return params


# -------------------------- spectral projector glue ------------------------ #

def build_spectral_projector(edge_index, edge_weight, num_nodes, K):
    """P = U_k diag(S_k) U_k^T for the normalized Laplacian of the shared graph.

    The graph is identical for every batch element (and every forward call), so
    the single SVD is done once here; cache the result outside the forward.
    """
    A = jnp.zeros((num_nodes, num_nodes), jnp.float32).at[
        edge_index[0], edge_index[1]].add(edge_weight)
    d = A.sum(axis=1)
    dinv = jnp.where(d > 0, 1.0 / jnp.sqrt(d), 0.0)   # guard against zero-degree nodes
    Lap = (jnp.eye(num_nodes, dtype=jnp.float32)
           - dinv[:, None] * A * dinv[None, :])
    # TODO(synk): SVD has no Pallas equivalent; computed once in plain JAX glue
    # (same first-K-largest-singular-triplet selection as torch.linalg.svd).
    U, S, _ = jnp.linalg.svd(Lap, full_matrices=False)
    return (U[:, :K] * S[:K][None, :]) @ U[:, :K].T                       # [N, N]


def _default_grid_chunks(batch_size):
    """1 chunk (full batch fold) on single-TC chips; 2 on v7x (2 TensorCores)."""
    try:
        kind = jax.devices()[0].device_kind.lower()
    except Exception:
        kind = ""
    n_tc = 2 if "v7" in kind else 1
    return max(1, math.gcd(batch_size, n_tc))


# ------------------------------ model forward ------------------------------ #

def spectral_gcn_forward(x, P, params, grid_chunks=None):
    """x: [B, N, node_features, T], P: [N, N] spectral projector  ->  out: [B, N, 12]"""
    B, N, F_feat, T = x.shape
    H = params["whh"].shape[1]
    L = len(params["conv_ws"])
    out_dim = params["w_lin"].shape[0]
    O_pad = ((out_dim + 127) // 128) * 128            # lane-dense output width

    G = _default_grid_chunks(B) if grid_chunks is None else grid_chunks
    assert B % G == 0, (B, G)
    Bc = B // G                                       # batch elements folded per grid step
    R = Bc * N                                        # rows per grid step

    # temporal layout per chunk: [Bc, T, N, F] -> [T, Bc, N, F] -> [T*Bc*N, F]
    # (row = t*R + b_local*N + n, so each time step is one contiguous [R, F] slab)
    x_tm = jnp.transpose(x, (0, 3, 1, 2))             # [B, T, N, F]
    x_tm = x_tm.reshape(G, Bc, T, N, F_feat)
    x_tm = jnp.transpose(x_tm, (0, 2, 1, 3, 4)).reshape(G, T * R, F_feat)

    # GRU weights: concatenated along lanes (gate order r, z, n), pre-transposed
    wih_cat = params["wih"].T                         # [F, 3H]
    whh_cat = params["whh"].T                         # [H, 3H]
    bih = params["bih"].reshape(1, 3 * H)
    bhh = params["bhh"].reshape(1, 3 * H)

    # block-diagonal projector over the folded batch (graph shared -> identical blocks)
    P_blk = jnp.kron(jnp.eye(Bc, dtype=jnp.float32), P)                  # [R, R]

    cw = jnp.stack(params["conv_ws"])                                    # [L, H, H]
    w_lin = jnp.zeros((H, O_pad), jnp.float32).at[:, :out_dim].set(params["w_lin"].T)
    b_lin = jnp.zeros((1, O_pad), jnp.float32).at[:, :out_dim].set(params["b_lin"])

    flops = G * (2 * T * R * F_feat * 3 * H            # hoisted input projection
                 + T * 2 * R * H * 3 * H               # recurrent matmuls
                 + L * (2 * R * H * H + 2 * R * R * H)  # conv stack
                 + 2 * R * H * O_pad)                  # linear head
    transcendentals = G * T * R * 3 * H
    bytes_accessed = 4 * (x_tm.size + wih_cat.size + whh_cat.size + bih.size
                          + bhh.size + P_blk.size + cw.size + w_lin.size
                          + b_lin.size + G * R * O_pad)

    out = pl.pallas_call(
        spectral_gcn_kernel,
        out_shape=jax.ShapeDtypeStruct((G, R, O_pad), jnp.float32),
        grid=(G,),
        in_specs=[
            pl.BlockSpec((None, T * R, F_feat), lambda g: (g, 0, 0)),     # x (per chunk)
            pl.BlockSpec((F_feat, 3 * H), lambda g: (0, 0)),              # wih (shared)
            pl.BlockSpec((H, 3 * H), lambda g: (0, 0)),                   # whh
            pl.BlockSpec((1, 3 * H), lambda g: (0, 0)),                   # b_ih
            pl.BlockSpec((1, 3 * H), lambda g: (0, 0)),                   # b_hh
            pl.BlockSpec((R, R), lambda g: (0, 0)),                       # block-diag P
            pl.BlockSpec((L, H, H), lambda g: (0, 0, 0)),                 # conv weights
            pl.BlockSpec((H, O_pad), lambda g: (0, 0)),                   # linear W (padded)
            pl.BlockSpec((1, O_pad), lambda g: (0, 0)),                   # linear b (padded)
        ],
        out_specs=pl.BlockSpec((None, R, O_pad), lambda g: (g, 0, 0)),
        scratch_shapes=[pltpu.VMEM((T * R, 3 * H), jnp.float32)],         # staged gi
        compiler_params=pltpu.CompilerParams(dimension_semantics=("parallel",)),
        cost_estimate=pl.CostEstimate(flops=flops,
                                      transcendentals=transcendentals,
                                      bytes_accessed=bytes_accessed),
    )(x_tm, wih_cat, whh_cat, bih, bhh, P_blk, cw, w_lin, b_lin)

    # un-fold the batch and drop the lane padding
    out = out.reshape(B, N, O_pad)[:, :, :out_dim]
    return out


# ---------------------------------- main ----------------------------------- #

if __name__ == "__main__":
    B, N, F_feat, T = 2, 16, 4, 8
    H, K, num_layers, out_dim = 32, 10, 3, 12

    root = jax.random.PRNGKey(0)
    k_param, k_x, k_w = jax.random.split(root, 3)
    params = init_params(k_param, F_feat, H, num_layers, out_dim)

    # deterministic inputs: ring graph (both directions) + self loops -> degree > 0
    src = jnp.arange(N, dtype=jnp.int32)
    dst = (src + 1) % N
    edge_index = jnp.stack([jnp.concatenate([src, dst, src]),
                            jnp.concatenate([dst, src, src])])            # [2, 3N]
    edge_weight = jax.random.uniform(k_w, (edge_index.shape[1],), jnp.float32, 0.5, 1.5)

    x = jax.random.normal(k_x, (B, N, F_feat, T), jnp.float32)

    # projector built once (static graph) and reused by every forward call
    P = build_spectral_projector(edge_index, edge_weight, N, K)

    out = spectral_gcn_forward(x, P, params)
    out = jax.block_until_ready(out)
    assert out.shape == (B, N, out_dim), out.shape
    assert jnp.all(jnp.isfinite(out))
    print("KERNEL_OK")
</pallas_src>

<mosaic_0001>
module attributes {stable_mosaic.version = 11 : i64} {
  func.func @spectral_gcn_kernel(%arg0: i32, %arg1: memref<1x256x4xf32, #tpu.memory_space<vmem>>, %arg2: memref<4x96xf32, #tpu.memory_space<vmem>>, %arg3: memref<32x96xf32, #tpu.memory_space<vmem>>, %arg4: memref<1x96xf32, #tpu.memory_space<vmem>>, %arg5: memref<1x96xf32, #tpu.memory_space<vmem>>, %arg6: memref<32x32xf32, #tpu.memory_space<vmem>>, %arg7: memref<3x32x32xf32, #tpu.memory_space<vmem>>, %arg8: memref<32x128xf32, #tpu.memory_space<vmem>>, %arg9: memref<1x128xf32, #tpu.memory_space<vmem>>, %arg10: memref<1x32x128xf32, #tpu.memory_space<vmem>>, %arg11: memref<256x96xf32, #tpu.memory_space<vmem>>) attributes {dimension_semantics = [#tpu.dimension_semantics<parallel>], iteration_bounds = array<i64: 1>, scalar_prefetch = 0 : i64, scratch_operands = 1 : i64, tpu.core_type = #tpu.core_type<tc>, window_params = [{transform_indices = @transform_0, window_bounds = array<i64: 1, 256, 4>}, {pipeline_mode = #tpu.pipeline_mode<synchronous>, transform_indices = @transform_1, window_bounds = array<i64: 4, 96>}, {pipeline_mode = #tpu.pipeline_mode<synchronous>, transform_indices = @transform_2, window_bounds = array<i64: 32, 96>}, {pipeline_mode = #tpu.pipeline_mode<synchronous>, transform_indices = @transform_3, window_bounds = array<i64: 1, 96>}, {pipeline_mode = #tpu.pipeline_mode<synchronous>, transform_indices = @transform_4, window_bounds = array<i64: 1, 96>}, {pipeline_mode = #tpu.pipeline_mode<synchronous>, transform_indices = @transform_5, window_bounds = array<i64: 32, 32>}, {pipeline_mode = #tpu.pipeline_mode<synchronous>, transform_indices = @transform_6, window_bounds = array<i64: 3, 32, 32>}, {pipeline_mode = #tpu.pipeline_mode<synchronous>, transform_indices = @transform_7, window_bounds = array<i64: 32, 128>}, {pipeline_mode = #tpu.pipeline_mode<synchronous>, transform_indices = @transform_8, window_bounds = array<i64: 1, 128>}, {transform_indices = @transform_9, window_bounds = array<i64: 1, 32, 128>}]} {
    %c0 = arith.constant 0 : index
    %c0_0 = arith.constant 0 : index
    %c0_1 = arith.constant 0 : index
    %0 = vector.load %arg1[%c0, %c0_0, %c0_1] : memref<1x256x4xf32, #tpu.memory_space<vmem>>, vector<1x256x4xf32>
    %1 = vector.shape_cast %0 : vector<1x256x4xf32> to vector<256x4xf32>
    %c0_2 = arith.constant 0 : index
    %c0_3 = arith.constant 0 : index
    %2 = vector.load %arg2[%c0_2, %c0_3] : memref<4x96xf32, #tpu.memory_space<vmem>>, vector<4x96xf32>
    %cst = arith.constant dense<0.000000e+00> : vector<256x96xf32>
    %3 = tpu.matmul %1, %2, %cst {dimension_numbers = #tpu.dot_dimension_numbers<[1], [0], [0], [1], [0, 0, 1, 1], [], []>} : vector<256x4xf32>, vector<4x96xf32>, vector<256x96xf32> -> vector<256x96xf32>
    %c0_4 = arith.constant 0 : index
    %c0_5 = arith.constant 0 : index
    %4 = vector.load %arg4[%c0_4, %c0_5] : memref<1x96xf32, #tpu.memory_space<vmem>>, vector<1x96xf32>
    %5 = vector.broadcast %4 : vector<1x96xf32> to vector<256x96xf32>
    %6 = arith.addf %3, %5 : vector<256x96xf32>
    %c0_6 = arith.constant 0 : index
    %c0_7 = arith.constant 0 : index
    %7 = vector.load %arg11[%c0_6, %c0_7] : memref<256x96xf32, #tpu.memory_space<vmem>>, vector<256x96xf32>
    tpu.vector_store %arg11[%c0_6, %c0_7], %6 {strides = array<i32>} : memref<256x96xf32, #tpu.memory_space<vmem>>, vector<256x96xf32>,
    %c0_8 = arith.constant 0 : index
    %c0_9 = arith.constant 0 : index
    %8 = vector.load %arg3[%c0_8, %c0_9] : memref<32x96xf32, #tpu.memory_space<vmem>>, vector<32x96xf32>
    %c0_10 = arith.constant 0 : index
    %c0_11 = arith.constant 0 : index
    %9 = vector.load %arg5[%c0_10, %c0_11] : memref<1x96xf32, #tpu.memory_space<vmem>>, vector<1x96xf32>
    %cst_12 = arith.constant 0.000000e+00 : f32
    %10 = vector.broadcast %cst_12 : f32 to vector<32x32xf32>
    %c0_i32 = arith.constant 0 : i32
    %c32_i32 = arith.constant 32 : i32
    %11 = arith.muli %c0_i32, %c32_i32 : i32
    %12 = tpu.assume_multiple %11, 32 : i32
    %13 = arith.index_cast %12 : i32 to index
    %c0_13 = arith.constant 0 : index
    %14 = vector.load %arg11[%13, %c0_13] : memref<256x96xf32, #tpu.memory_space<vmem>>, vector<32x96xf32>
    %cst_14 = arith.constant dense<0.000000e+00> : vector<32x96xf32>
    %15 = tpu.matmul %10, %8, %cst_14 {dimension_numbers = #tpu.dot_dimension_numbers<[1], [0], [0], [1], [0, 0, 1, 1], [], []>} : vector<32x32xf32>, vector<32x96xf32>, vector<32x96xf32> -> vector<32x96xf32>
    %16 = vector.broadcast %9 : vector<1x96xf32> to vector<32x96xf32>
    %17 = arith.addf %15, %16 : vector<32x96xf32>
    %18 = vector.extract_strided_slice %14 {offsets = [0, 0], sizes = [32, 32], strides = [1, 1]} : vector<32x96xf32> to vector<32x32xf32>
    %19 = vector.extract_strided_slice %17 {offsets = [0, 0], sizes = [32, 32], strides = [1, 1]} : vector<32x96xf32> to vector<32x32xf32>
    %20 = arith.addf %18, %19 : vector<32x32xf32>
    %21 = arith.negf %20 : vector<32x32xf32>
    %22 = math.exp %21 : vector<32x32xf32>
    %cst_15 = arith.constant 1.000000e+00 : f32
    %23 = vector.broadcast %cst_15 : f32 to vector<32x32xf32>
    %24 = arith.addf %23, %22 : vector<32x32xf32>
    %25 = arith.divf %23, %24 : vector<32x32xf32>
    %26 = vector.extract_strided_slice %14 {offsets = [0, 32], sizes = [32, 32], strides = [1, 1]} : vector<32x96xf32> to vector<32x32xf32>
    %27 = vector.extract_strided_slice %17 {offsets = [0, 32], sizes = [32, 32], strides = [1, 1]} : vector<32x96xf32> to vector<32x32xf32>
    %28 = arith.addf %26, %27 : vector<32x32xf32>
    %29 = arith.negf %28 : vector<32x32xf32>
    %30 = math.exp %29 : vector<32x32xf32>
    %cst_16 = arith.constant 1.000000e+00 : f32
    %31 = vector.broadcast %cst_16 : f32 to vector<32x32xf32>
    %32 = arith.addf %31, %30 : vector<32x32xf32>
    %33 = arith.divf %31, %32 : vector<32x32xf32>
    %34 = vector.extract_strided_slice %14 {offsets = [0, 64], sizes = [32, 32], strides = [1, 1]} : vector<32x96xf32> to vector<32x32xf32>
    %35 = vector.extract_strided_slice %17 {offsets = [0, 64], sizes = [32, 32], strides = [1, 1]} : vector<32x96xf32> to vector<32x32xf32>
    %36 = arith.mulf %25, %35 : vector<32x32xf32>
    %37 = arith.addf %34, %36 : vector<32x32xf32>
    %38 = math.tanh %37 : vector<32x32xf32>
    %cst_17 = arith.constant 1.000000e+00 : f32
    %39 = vector.broadcast %cst_17 : f32 to vector<32x32xf32>
    %40 = arith.subf %39, %33 : vector<32x32xf32>
    %41 = arith.mulf %40, %38 : vector<32x32xf32>
    %42 = arith.mulf %33, %10 : vector<32x32xf32>
    %43 = arith.addf %41, %42 : vector<32x32xf32>
    %c1_i32 = arith.constant 1 : i32
    %c32_i32_18 = arith.constant 32 : i32
    %44 = arith.muli %c1_i32, %c32_i32_18 : i32
    %45 = tpu.assume_multiple %44, 32 : i32
    %46 = arith.index_cast %45 : i32 to index
    %c0_19 = arith.constant 0 : index
    %47 = vector.load %arg11[%46, %c0_19] : memref<256x96xf32, #tpu.memory_space<vmem>>, vector<32x96xf32>
    %cst_20 = arith.constant dense<0.000000e+00> : vector<32x96xf32>
    %48 = tpu.matmul %43, %8, %cst_20 {dimension_numbers = #tpu.dot_dimension_numbers<[1], [0], [0], [1], [0, 0, 1, 1], [], []>} : vector<32x32xf32>, vector<32x96xf32>, vector<32x96xf32> -> vector<32x96xf32>
    %49 = vector.broadcast %9 : vector<1x96xf32> to vector<32x96xf32>
    %50 = arith.addf %48, %49 : vector<32x96xf32>
    %51 = vector.extract_strided_slice %47 {offsets = [0, 0], sizes = [32, 32], strides = [1, 1]} : vector<32x96xf32> to vector<32x32xf32>
    %52 = vector.extract_strided_slice %50 {offsets = [0, 0], sizes = [32, 32], strides = [1, 1]} : vector<32x96xf32> to vector<32x32xf32>
    %53 = arith.addf %51, %52 : vector<32x32xf32>
    %54 = arith.negf %53 : vector<32x32xf32>
    %55 = math.exp %54 : vector<32x32xf32>
    %cst_21 = arith.constant 1.000000e+00 : f32
    %56 = vector.broadcast %cst_21 : f32 to vector<32x32xf32>
    %57 = arith.addf %56, %55 : vector<32x32xf32>
    %58 = arith.divf %56, %57 : vector<32x32xf32>
    %59 = vector.extract_strided_slice %47 {offsets = [0, 32], sizes = [32, 32], strides = [1, 1]} : vector<32x96xf32> to vector<32x32xf32>
    %60 = vector.extract_strided_slice %50 {offsets = [0, 32], sizes = [32, 32], strides = [1, 1]} : vector<32x96xf32> to vector<32x32xf32>
    %61 = arith.addf %59, %60 : vector<32x32xf32>
    %62 = arith.negf %61 : vector<32x32xf32>
    %63 = math.exp %62 : vector<32x32xf32>
    %cst_22 = arith.constant 1.000000e+00 : f32
    %64 = vector.broadcast %cst_22 : f32 to vector<32x32xf32>
    %65 = arith.addf %64, %63 : vector<32x32xf32>
    %66 = arith.divf %64, %65 : vector<32x32xf32>
    %67 = vector.extract_strided_slice %47 {offsets = [0, 64], sizes = [32, 32], strides = [1, 1]} : vector<32x96xf32> to vector<32x32xf32>
    %68 = vector.extract_strided_slice %50 {offsets = [0, 64], sizes = [32, 32], strides = [1, 1]} : vector<32x96xf32> to vector<32x32xf32>
    %69 = arith.mulf %58, %68 : vector<32x32xf32>
    %70 = arith.addf %67, %69 : vector<32x32xf32>
    %71 = math.tanh %70 : vector<32x32xf32>
    %cst_23 = arith.constant 1.000000e+00 : f32
    %72 = vector.broadcast %cst_23 : f32 to vector<32x32xf32>
    %73 = arith.subf %72, %66 : vector<32x32xf32>
    %74 = arith.mulf %73, %71 : vector<32x32xf32>
    %75 = arith.mulf %66, %43 : vector<32x32xf32>
    %76 = arith.addf %74, %75 : vector<32x32xf32>
    %c2_i32 = arith.constant 2 : i32
    %c32_i32_24 = arith.constant 32 : i32
    %77 = arith.muli %c2_i32, %c32_i32_24 : i32
    %78 = tpu.assume_multiple %77, 32 : i32
    %79 = arith.index_cast %78 : i32 to index
    %c0_25 = arith.constant 0 : index
    %80 = vector.load %arg11[%79, %c0_25] : memref<256x96xf32, #tpu.memory_space<vmem>>, vector<32x96xf32>
    %cst_26 = arith.constant dense<0.000000e+00> : vector<32x96xf32>
    %81 = tpu.matmul %76, %8, %cst_26 {dimension_numbers = #tpu.dot_dimension_numbers<[1], [0], [0], [1], [0, 0, 1, 1], [], []>} : vector<32x32xf32>, vector<32x96xf32>, vector<32x96xf32> -> vector<32x96xf32>
    %82 = vector.broadcast %9 : vector<1x96xf32> to vector<32x96xf32>
    %83 = arith.addf %81, %82 : vector<32x96xf32>
    %84 = vector.extract_strided_slice %80 {offsets = [0, 0], sizes = [32, 32], strides = [1, 1]} : vector<32x96xf32> to vector<32x32xf32>
    %85 = vector.extract_strided_slice %83 {offsets = [0, 0], sizes = [32, 32], strides = [1, 1]} : vector<32x96xf32> to vector<32x32xf32>
    %86 = arith.addf %84, %85 : vector<32x32xf32>
    %87 = arith.negf %86 : vector<32x32xf32>
    %88 = math.exp %87 : vector<32x32xf32>
    %cst_27 = arith.constant 1.000000e+00 : f32
    %89 = vector.broadcast %cst_27 : f32 to vector<32x32xf32>
    %90 = arith.addf %89, %88 : vector<32x32xf32>
    %91 = arith.divf %89, %90 : vector<32x32xf32>
    %92 = vector.extract_strided_slice %80 {offsets = [0, 32], sizes = [32, 32], strides = [1, 1]} : vector<32x96xf32> to vector<32x32xf32>
    %93 = vector.extract_strided_slice %83 {offsets = [0, 32], sizes = [32, 32], strides = [1, 1]} : vector<32x96xf32> to vector<32x32xf32>
    %94 = arith.addf %92, %93 : vector<32x32xf32>
    %95 = arith.negf %94 : vector<32x32xf32>
    %96 = math.exp %95 : vector<32x32xf32>
    %cst_28 = arith.constant 1.000000e+00 : f32
    %97 = vector.broadcast %cst_28 : f32 to vector<32x32xf32>
    %98 = arith.addf %97, %96 : vector<32x32xf32>
    %99 = arith.divf %97, %98 : vector<32x32xf32>
    %100 = vector.extract_strided_slice %80 {offsets = [0, 64], sizes = [32, 32], strides = [1, 1]} : vector<32x96xf32> to vector<32x32xf32>
    %101 = vector.extract_strided_slice %83 {offsets = [0, 64], sizes = [32, 32], strides = [1, 1]} : vector<32x96xf32> to vector<32x32xf32>
    %102 = arith.mulf %91, %101 : vector<32x32xf32>
    %103 = arith.addf %100, %102 : vector<32x32xf32>
    %104 = math.tanh %103 : vector<32x32xf32>
    %cst_29 = arith.constant 1.000000e+00 : f32
    %105 = vector.broadcast %cst_29 : f32 to vector<32x32xf32>
    %106 = arith.subf %105, %99 : vector<32x32xf32>
    %107 = arith.mulf %106, %104 : vector<32x32xf32>
    %108 = arith.mulf %99, %76 : vector<32x32xf32>
    %109 = arith.addf %107, %108 : vector<32x32xf32>
    %c3_i32 = arith.constant 3 : i32
    %c32_i32_30 = arith.constant 32 : i32
    %110 = arith.muli %c3_i32, %c32_i32_30 : i32
    %111 = tpu.assume_multiple %110, 32 : i32
    %112 = arith.index_cast %111 : i32 to index
    %c0_31 = arith.constant 0 : index
    %113 = vector.load %arg11[%112, %c0_31] : memref<256x96xf32, #tpu.memory_space<vmem>>, vector<32x96xf32>
    %cst_32 = arith.constant dense<0.000000e+00> : vector<32x96xf32>
    %114 = tpu.matmul %109, %8, %cst_32 {dimension_numbers = #tpu.dot_dimension_numbers<[1], [0], [0], [1], [0, 0, 1, 1], [], []>} : vector<32x32xf32>, vector<32x96xf32>, vector<32x96xf32> -> vector<32x96xf32>
    %115 = vector.broadcast %9 : vector<1x96xf32> to vector<32x96xf32>
    %116 = arith.addf %114, %115 : vector<32x96xf32>
    %117 = vector.extract_strided_slice %113 {offsets = [0, 0], sizes = [32, 32], strides = [1, 1]} : vector<32x96xf32> to vector<32x32xf32>
    %118 = vector.extract_strided_slice %116 {offsets = [0, 0], sizes = [32, 32], strides = [1, 1]} : vector<32x96xf32> to vector<32x32xf32>
    %119 = arith.addf %117, %118 : vector<32x32xf32>
    %120 = arith.negf %119 : vector<32x32xf32>
    %121 = math.exp %120 : vector<32x32xf32>
    %cst_33 = arith.constant 1.000000e+00 : f32
    %122 = vector.broadcast %cst_33 : f32 to vector<32x32xf32>
    %123 = arith.addf %122, %121 : vector<32x32xf32>
    %124 = arith.divf %122, %123 : vector<32x32xf32>
    %125 = vector.extract_strided_slice %113 {offsets = [0, 32], sizes = [32, 32], strides = [1, 1]} : vector<32x96xf32> to vector<32x32xf32>
    %126 = vector.extract_strided_slice %116 {offsets = [0, 32], sizes = [32, 32], strides = [1, 1]} : vector<32x96xf32> to vector<32x32xf32>
    %127 = arith.addf %125, %126 : vector<32x32xf32>
    %128 = arith.negf %127 : vector<32x32xf32>
    %129 = math.exp %128 : vector<32x32xf32>
    %cst_34 = arith.constant 1.000000e+00 : f32
    %130 = vector.broadcast %cst_34 : f32 to vector<32x32xf32>
    %131 = arith.addf %130, %129 : vector<32x32xf32>
    %132 = arith.divf %130, %131 : vector<32x32xf32>
    %133 = vector.extract_strided_slice %113 {offsets = [0, 64], sizes = [32, 32], strides = [1, 1]} : vector<32x96xf32> to vector<32x32xf32>
    %134 = vector.extract_strided_slice %116 {offsets = [0, 64], sizes = [32, 32], strides = [1, 1]} : vector<32x96xf32> to vector<32x32xf32>
    %135 = arith.mulf %124, %134 : vector<32x32xf32>
    %136 = arith.addf %133, %135 : vector<32x32xf32>
    %137 = math.tanh %136 : vector<32x32xf32>
    %cst_35 = arith.constant 1.000000e+00 : f32
    %138 = vector.broadcast %cst_35 : f32 to vector<32x32xf32>
    %139 = arith.subf %138, %132 : vector<32x32xf32>
    %140 = arith.mulf %139, %137 : vector<32x32xf32>
    %141 = arith.mulf %132, %109 : vector<32x32xf32>
    %142 = arith.addf %140, %141 : vector<32x32xf32>
    %c4_i32 = arith.constant 4 : i32
    %c32_i32_36 = arith.constant 32 : i32
    %143 = arith.muli %c4_i32, %c32_i32_36 : i32
    %144 = tpu.assume_multiple %143, 32 : i32
    %145 = arith.index_cast %144 : i32 to index
    %c0_37 = arith.constant 0 : index
    %146 = vector.load %arg11[%145, %c0_37] : memref<256x96xf32, #tpu.memory_space<vmem>>, vector<32x96xf32>
    %cst_38 = arith.constant dense<0.000000e+00> : vector<32x96xf32>
    %147 = tpu.matmul %142, %8, %cst_38 {dimension_numbers = #tpu.dot_dimension_numbers<[1], [0], [0], [1], [0, 0, 1, 1], [], []>} : vector<32x32xf32>, vector<32x96xf32>, vector<32x96xf32> -> vector<32x96xf32>
    %148 = vector.broadcast %9 : vector<1x96xf32> to vector<32x96xf32>
    %149 = arith.addf %147, %148 : vector<32x96xf32>
    %150 = vector.extract_strided_slice %146 {offsets = [0, 0], sizes = [32, 32], strides = [1, 1]} : vector<32x96xf32> to vector<32x32xf32>
    %151 = vector.extract_strided_slice %149 {offsets = [0, 0], sizes = [32, 32], strides = [1, 1]} : vector<32x96xf32> to vector<32x32xf32>
    %152 = arith.addf %150, %151 : vector<32x32xf32>
    %153 = arith.negf %152 : vector<32x32xf32>
    %154 = math.exp %153 : vector<32x32xf32>
    %cst_39 = arith.constant 1.000000e+00 : f32
    %155 = vector.broadcast %cst_39 : f32 to vector<32x32xf32>
    %156 = arith.addf %155, %154 : vector<32x32xf32>
    %157 = arith.divf %155, %156 : vector<32x32xf32>
    %158 = vector.extract_strided_slice %146 {offsets = [0, 32], sizes = [32, 32], strides = [1, 1]} : vector<32x96xf32> to vector<32x32xf32>
    %159 = vector.extract_strided_slice %149 {offsets = [0, 32], sizes = [32, 32], strides = [1, 1]} : vector<32x96xf32> to vector<32x32xf32>
    %160 = arith.addf %158, %159 : vector<32x32xf32>
    %161 = arith.negf %160 : vector<32x32xf32>
    %162 = math.exp %161 : vector<32x32xf32>
    %cst_40 = arith.constant 1.000000e+00 : f32
    %163 = vector.broadcast %cst_40 : f32 to vector<32x32xf32>
    %164 = arith.addf %163, %162 : vector<32x32xf32>
    %165 = arith.divf %163, %164 : vector<32x32xf32>
    %166 = vector.extract_strided_slice %146 {offsets = [0, 64], sizes = [32, 32], strides = [1, 1]} : vector<32x96xf32> to vector<32x32xf32>
    %167 = vector.extract_strided_slice %149 {offsets = [0, 64], sizes = [32, 32], strides = [1, 1]} : vector<32x96xf32> to vector<32x32xf32>
    %168 = arith.mulf %157, %167 : vector<32x32xf32>
    %169 = arith.addf %166, %168 : vector<32x32xf32>
    %170 = math.tanh %169 : vector<32x32xf32>
    %cst_41 = arith.constant 1.000000e+00 : f32
    %171 = vector.broadcast %cst_41 : f32 to vector<32x32xf32>
    %172 = arith.subf %171, %165 : vector<32x32xf32>
    %173 = arith.mulf %172, %170 : vector<32x32xf32>
    %174 = arith.mulf %165, %142 : vector<32x32xf32>
    %175 = arith.addf %173, %174 : vector<32x32xf32>
    %c5_i32 = arith.constant 5 : i32
    %c32_i32_42 = arith.constant 32 : i32
    %176 = arith.muli %c5_i32, %c32_i32_42 : i32
    %177 = tpu.assume_multiple %176, 32 : i32
    %178 = arith.index_cast %177 : i32 to index
    %c0_43 = arith.constant 0 : index
    %179 = vector.load %arg11[%178, %c0_43] : memref<256x96xf32, #tpu.memory_space<vmem>>, vector<32x96xf32>
    %cst_44 = arith.constant dense<0.000000e+00> : vector<32x96xf32>
    %180 = tpu.matmul %175, %8, %cst_44 {dimension_numbers = #tpu.dot_dimension_numbers<[1], [0], [0], [1], [0, 0, 1, 1], [], []>} : vector<32x32xf32>, vector<32x96xf32>, vector<32x96xf32> -> vector<32x96xf32>
    %181 = vector.broadcast %9 : vector<1x96xf32> to vector<32x96xf32>
    %182 = arith.addf %180, %181 : vector<32x96xf32>
    %183 = vector.extract_strided_slice %179 {offsets = [0, 0], sizes = [32, 32], strides = [1, 1]} : vector<32x96xf32> to vector<32x32xf32>
    %184 = vector.extract_strided_slice %182 {offsets = [0, 0], sizes = [32, 32], strides = [1, 1]} : vector<32x96xf32> to vector<32x32xf32>
    %185 = arith.addf %183, %184 : vector<32x32xf32>
    %186 = arith.negf %185 : vector<32x32xf32>
    %187 = math.exp %186 : vector<32x32xf32>
    %cst_45 = arith.constant 1.000000e+00 : f32
    %188 = vector.broadcast %cst_45 : f32 to vector<32x32xf32>
    %189 = arith.addf %188, %187 : vector<32x32xf32>
    %190 = arith.divf %188, %189 : vector<32x32xf32>
    %191 = vector.extract_strided_slice %179 {offsets = [0, 32], sizes = [32, 32], strides = [1, 1]} : vector<32x96xf32> to vector<32x32xf32>
    %192 = vector.extract_strided_slice %182 {offsets = [0, 32], sizes = [32, 32], strides = [1, 1]} : vector<32x96xf32> to vector<32x32xf32>
    %193 = arith.addf %191, %192 : vector<32x32xf32>
    %194 = arith.negf %193 : vector<32x32xf32>
    %195 = math.exp %194 : vector<32x32xf32>
    %cst_46 = arith.constant 1.000000e+00 : f32
    %196 = vector.broadcast %cst_46 : f32 to vector<32x32xf32>
    %197 = arith.addf %196, %195 : vector<32x32xf32>
    %198 = arith.divf %196, %197 : vector<32x32xf32>
    %199 = vector.extract_strided_slice %179 {offsets = [0, 64], sizes = [32, 32], strides = [1, 1]} : vector<32x96xf32> to vector<32x32xf32>
    %200 = vector.extract_strided_slice %182 {offsets = [0, 64], sizes = [32, 32], strides = [1, 1]} : vector<32x96xf32> to vector<32x32xf32>
    %201 = arith.mulf %190, %200 : vector<32x32xf32>
    %202 = arith.addf %199, %201 : vector<32x32xf32>
    %203 = math.tanh %202 : vector<32x32xf32>
    %cst_47 = arith.constant 1.000000e+00 : f32
    %204 = vector.broadcast %cst_47 : f32 to vector<32x32xf32>
    %205 = arith.subf %204, %198 : vector<32x32xf32>
    %206 = arith.mulf %205, %203 : vector<32x32xf32>
    %207 = arith.mulf %198, %175 : vector<32x32xf32>
    %208 = arith.addf %206, %207 : vector<32x32xf32>
    %c6_i32 = arith.constant 6 : i32
    %c32_i32_48 = arith.constant 32 : i32
    %209 = arith.muli %c6_i32, %c32_i32_48 : i32
    %210 = tpu.assume_multiple %209, 32 : i32
    %211 = arith.index_cast %210 : i32 to index
    %c0_49 = arith.constant 0 : index
    %212 = vector.load %arg11[%211, %c0_49] : memref<256x96xf32, #tpu.memory_space<vmem>>, vector<32x96xf32>
    %cst_50 = arith.constant dense<0.000000e+00> : vector<32x96xf32>
    %213 = tpu.matmul %208, %8, %cst_50 {dimension_numbers = #tpu.dot_dimension_numbers<[1], [0], [0], [1], [0, 0, 1, 1], [], []>} : vector<32x32xf32>, vector<32x96xf32>, vector<32x96xf32> -> vector<32x96xf32>
    %214 = vector.broadcast %9 : vector<1x96xf32> to vector<32x96xf32>
    %215 = arith.addf %213, %214 : vector<32x96xf32>
    %216 = vector.extract_strided_slice %212 {offsets = [0, 0], sizes = [32, 32], strides = [1, 1]} : vector<32x96xf32> to vector<32x32xf32>
    %217 = vector.extract_strided_slice %215 {offsets = [0, 0], sizes = [32, 32], strides = [1, 1]} : vector<32x96xf32> to vector<32x32xf32>
    %218 = arith.addf %216, %217 : vector<32x32xf32>
    %219 = arith.negf %218 : vector<32x32xf32>
    %220 = math.exp %219 : vector<32x32xf32>
    %cst_51 = arith.constant 1.000000e+00 : f32
    %221 = vector.broadcast %cst_51 : f32 to vector<32x32xf32>
    %222 = arith.addf %221, %220 : vector<32x32xf32>
    %223 = arith.divf %221, %222 : vector<32x32xf32>
    %224 = vector.extract_strided_slice %212 {offsets = [0, 32], sizes = [32, 32], strides = [1, 1]} : vector<32x96xf32> to vector<32x32xf32>
    %225 = vector.extract_strided_slice %215 {offsets = [0, 32], sizes = [32, 32], strides = [1, 1]} : vector<32x96xf32> to vector<32x32xf32>
    %226 = arith.addf %224, %225 : vector<32x32xf32>
    %227 = arith.negf %226 : vector<32x32xf32>
    %228 = math.exp %227 : vector<32x32xf32>
    %cst_52 = arith.constant 1.000000e+00 : f32
    %229 = vector.broadcast %cst_52 : f32 to vector<32x32xf32>
    %230 = arith.addf %229, %228 : vector<32x32xf32>
    %231 = arith.divf %229, %230 : vector<32x32xf32>
    %232 = vector.extract_strided_slice %212 {offsets = [0, 64], sizes = [32, 32], strides = [1, 1]} : vector<32x96xf32> to vector<32x32xf32>
    %233 = vector.extract_strided_slice %215 {offsets = [0, 64], sizes = [32, 32], strides = [1, 1]} : vector<32x96xf32> to vector<32x32xf32>
    %234 = arith.mulf %223, %233 : vector<32x32xf32>
    %235 = arith.addf %232, %234 : vector<32x32xf32>
    %236 = math.tanh %235 : vector<32x32xf32>
    %cst_53 = arith.constant 1.000000e+00 : f32
    %237 = vector.broadcast %cst_53 : f32 to vector<32x32xf32>
    %238 = arith.subf %237, %231 : vector<32x32xf32>
    %239 = arith.mulf %238, %236 : vector<32x32xf32>
    %240 = arith.mulf %231, %208 : vector<32x32xf32>
    %241 = arith.addf %239, %240 : vector<32x32xf32>
    %c7_i32 = arith.constant 7 : i32
    %c32_i32_54 = arith.constant 32 : i32
    %242 = arith.muli %c7_i32, %c32_i32_54 : i32
    %243 = tpu.assume_multiple %242, 32 : i32
    %244 = arith.index_cast %243 : i32 to index
    %c0_55 = arith.constant 0 : index
    %245 = vector.load %arg11[%244, %c0_55] : memref<256x96xf32, #tpu.memory_space<vmem>>, vector<32x96xf32>
    %cst_56 = arith.constant dense<0.000000e+00> : vector<32x96xf32>
    %246 = tpu.matmul %241, %8, %cst_56 {dimension_numbers = #tpu.dot_dimension_numbers<[1], [0], [0], [1], [0, 0, 1, 1], [], []>} : vector<32x32xf32>, vector<32x96xf32>, vector<32x96xf32> -> vector<32x96xf32>
    %247 = vector.broadcast %9 : vector<1x96xf32> to vector<32x96xf32>
    %248 = arith.addf %246, %247 : vector<32x96xf32>
    %249 = vector.extract_strided_slice %245 {offsets = [0, 0], sizes = [32, 32], strides = [1, 1]} : vector<32x96xf32> to vector<32x32xf32>
    %250 = vector.extract_strided_slice %248 {offsets = [0, 0], sizes = [32, 32], strides = [1, 1]} : vector<32x96xf32> to vector<32x32xf32>
    %251 = arith.addf %249, %250 : vector<32x32xf32>
    %252 = arith.negf %251 : vector<32x32xf32>
    %253 = math.exp %252 : vector<32x32xf32>
    %cst_57 = arith.constant 1.000000e+00 : f32
    %254 = vector.broadcast %cst_57 : f32 to vector<32x32xf32>
    %255 = arith.addf %254, %253 : vector<32x32xf32>
    %256 = arith.divf %254, %255 : vector<32x32xf32>
    %257 = vector.extract_strided_slice %245 {offsets = [0, 32], sizes = [32, 32], strides = [1, 1]} : vector<32x96xf32> to vector<32x32xf32>
    %258 = vector.extract_strided_slice %248 {offsets = [0, 32], sizes = [32, 32], strides = [1, 1]} : vector<32x96xf32> to vector<32x32xf32>
    %259 = arith.addf %257, %258 : vector<32x32xf32>
    %260 = arith.negf %259 : vector<32x32xf32>
    %261 = math.exp %260 : vector<32x32xf32>
    %cst_58 = arith.constant 1.000000e+00 : f32
    %262 = vector.broadcast %cst_58 : f32 to vector<32x32xf32>
    %263 = arith.addf %262, %261 : vector<32x32xf32>
    %264 = arith.divf %262, %263 : vector<32x32xf32>
    %265 = vector.extract_strided_slice %245 {offsets = [0, 64], sizes = [32, 32], strides = [1, 1]} : vector<32x96xf32> to vector<32x32xf32>
    %266 = vector.extract_strided_slice %248 {offsets = [0, 64], sizes = [32, 32], strides = [1, 1]} : vector<32x96xf32> to vector<32x32xf32>
    %267 = arith.mulf %256, %266 : vector<32x32xf32>
    %268 = arith.addf %265, %267 : vector<32x32xf32>
    %269 = math.tanh %268 : vector<32x32xf32>
    %cst_59 = arith.constant 1.000000e+00 : f32
    %270 = vector.broadcast %cst_59 : f32 to vector<32x32xf32>
    %271 = arith.subf %270, %264 : vector<32x32xf32>
    %272 = arith.mulf %271, %269 : vector<32x32xf32>
    %273 = arith.mulf %264, %241 : vector<32x32xf32>
    %274 = arith.addf %272, %273 : vector<32x32xf32>
    %c8_i32 = arith.constant 8 : i32
    %c0_60 = arith.constant 0 : index
    %c0_61 = arith.constant 0 : index
    %275 = vector.load %arg6[%c0_60, %c0_61] : memref<32x32xf32, #tpu.memory_space<vmem>>, vector<32x32xf32>
    %c0_62 = arith.constant 0 : index
    %c0_63 = arith.constant 0 : index
    %c0_64 = arith.constant 0 : index
    %276 = vector.load %arg7[%c0_62, %c0_63, %c0_64] : memref<3x32x32xf32, #tpu.memory_space<vmem>>, vector<1x32x32xf32>
    %277 = vector.shape_cast %276 : vector<1x32x32xf32> to vector<32x32xf32>
    %cst_65 = arith.constant dense<0.000000e+00> : vector<32x32xf32>
    %278 = tpu.matmul %274, %277, %cst_65 {dimension_numbers = #tpu.dot_dimension_numbers<[1], [0], [0], [1], [0, 0, 1, 1], [], []>} : vector<32x32xf32>, vector<32x32xf32>, vector<32x32xf32> -> vector<32x32xf32>
    %cst_66 = arith.constant dense<0.000000e+00> : vector<32x32xf32>
    %279 = tpu.matmul %275, %278, %cst_66 {dimension_numbers = #tpu.dot_dimension_numbers<[1], [0], [0], [1], [0, 0, 1, 1], [], []>} : vector<32x32xf32>, vector<32x32xf32>, vector<32x32xf32> -> vector<32x32xf32>
    %cst_67 = arith.constant 0.000000e+00 : f32
    %280 = vector.broadcast %cst_67 : f32 to vector<32x32xf32>
    %281 = arith.maximumf %279, %280 : vector<32x32xf32>
    %282 = arith.addf %281, %274 : vector<32x32xf32>
    %c1 = arith.constant 1 : index
    %c0_68 = arith.constant 0 : index
    %c0_69 = arith.constant 0 : index
    %283 = vector.load %arg7[%c1, %c0_68, %c0_69] : memref<3x32x32xf32, #tpu.memory_space<vmem>>, vector<1x32x32xf32>
    %284 = vector.shape_cast %283 : vector<1x32x32xf32> to vector<32x32xf32>
    %cst_70 = arith.constant dense<0.000000e+00> : vector<32x32xf32>
    %285 = tpu.matmul %282, %284, %cst_70 {dimension_numbers = #tpu.dot_dimension_numbers<[1], [0], [0], [1], [0, 0, 1, 1], [], []>} : vector<32x32xf32>, vector<32x32xf32>, vector<32x32xf32> -> vector<32x32xf32>
    %cst_71 = arith.constant dense<0.000000e+00> : vector<32x32xf32>
    %286 = tpu.matmul %275, %285, %cst_71 {dimension_numbers = #tpu.dot_dimension_numbers<[1], [0], [0], [1], [0, 0, 1, 1], [], []>} : vector<32x32xf32>, vector<32x32xf32>, vector<32x32xf32> -> vector<32x32xf32>
    %cst_72 = arith.constant 0.000000e+00 : f32
    %287 = vector.broadcast %cst_72 : f32 to vector<32x32xf32>
    %288 = arith.maximumf %286, %287 : vector<32x32xf32>
    %289 = arith.addf %288, %282 : vector<32x32xf32>
    %c2 = arith.constant 2 : index
    %c0_73 = arith.constant 0 : index
    %c0_74 = arith.constant 0 : index
    %290 = vector.load %arg7[%c2, %c0_73, %c0_74] : memref<3x32x32xf32, #tpu.memory_space<vmem>>, vector<1x32x32xf32>
    %291 = vector.shape_cast %290 : vector<1x32x32xf32> to vector<32x32xf32>
    %cst_75 = arith.constant dense<0.000000e+00> : vector<32x32xf32>
    %292 = tpu.matmul %289, %291, %cst_75 {dimension_numbers = #tpu.dot_dimension_numbers<[1], [0], [0], [1], [0, 0, 1, 1], [], []>} : vector<32x32xf32>, vector<32x32xf32>, vector<32x32xf32> -> vector<32x32xf32>
    %cst_76 = arith.constant dense<0.000000e+00> : vector<32x32xf32>
    %293 = tpu.matmul %275, %292, %cst_76 {dimension_numbers = #tpu.dot_dimension_numbers<[1], [0], [0], [1], [0, 0, 1, 1], [], []>} : vector<32x32xf32>, vector<32x32xf32>, vector<32x32xf32> -> vector<32x32xf32>
    %cst_77 = arith.constant 0.000000e+00 : f32
    %294 = vector.broadcast %cst_77 : f32 to vector<32x32xf32>
    %295 = arith.maximumf %293, %294 : vector<32x32xf32>
    %296 = arith.addf %295, %289 : vector<32x32xf32>
    %c0_78 = arith.constant 0 : index
    %c0_79 = arith.constant 0 : index
    %297 = vector.load %arg8[%c0_78, %c0_79] : memref<32x128xf32, #tpu.memory_space<vmem>>, vector<32x128xf32>
    %cst_80 = arith.constant dense<0.000000e+00> : vector<32x128xf32>
    %298 = tpu.matmul %296, %297, %cst_80 {dimension_numbers = #tpu.dot_dimension_numbers<[1], [0], [0], [1], [0, 0, 1, 1], [], []>} : vector<32x32xf32>, vector<32x128xf32>, vector<32x128xf32> -> vector<32x128xf32>
    %c0_81 = arith.constant 0 : index
    %c0_82 = arith.constant 0 : index
    %299 = vector.load %arg9[%c0_81, %c0_82] : memref<1x128xf32, #tpu.memory_space<vmem>>, vector<1x128xf32>
    %300 = vector.broadcast %299 : vector<1x128xf32> to vector<32x128xf32>
    %301 = arith.addf %298, %300 : vector<32x128xf32>
    %c0_83 = arith.constant 0 : index
    %c0_84 = arith.constant 0 : index
    %c0_85 = arith.constant 0 : index
    %302 = vector.load %arg10[%c0_83, %c0_84, %c0_85] : memref<1x32x128xf32, #tpu.memory_space<vmem>>, vector<1x32x128xf32>
    %303 = vector.shape_cast %302 : vector<1x32x128xf32> to vector<32x128xf32>
    %304 = vector.shape_cast %301 : vector<32x128xf32> to vector<1x32x128xf32>
    tpu.vector_store %arg10[%c0_83, %c0_84, %c0_85], %304 {strides = array<i32>} : memref<1x32x128xf32, #tpu.memory_space<vmem>>, vector<1x32x128xf32>,
    return
  }
  func.func @transform_0(%arg0: i32) -> (i32, i32, i32) {
    %c0_i32 = arith.constant 0 : i32
    %c0_i32_0 = arith.constant 0 : i32
    %c0_i32_1 = arith.constant 0 : i32
    return %arg0, %c0_i32, %c0_i32_0 : i32, i32, i32
  }
  func.func @transform_1(%arg0: i32) -> (i32, i32) {
    %c0_i32 = arith.constant 0 : i32
    %c0_i32_0 = arith.constant 0 : i32
    %c0_i32_1 = arith.constant 0 : i32
    return %c0_i32, %c0_i32_0 : i32, i32
  }
  func.func @transform_2(%arg0: i32) -> (i32, i32) {
    %c0_i32 = arith.constant 0 : i32
    %c0_i32_0 = arith.constant 0 : i32
    %c0_i32_1 = arith.constant 0 : i32
    return %c0_i32, %c0_i32_0 : i32, i32
  }
  func.func @transform_3(%arg0: i32) -> (i32, i32) {
    %c0_i32 = arith.constant 0 : i32
    %c0_i32_0 = arith.constant 0 : i32
    %c0_i32_1 = arith.constant 0 : i32
    return %c0_i32, %c0_i32_0 : i32, i32
  }
  func.func @transform_4(%arg0: i32) -> (i32, i32) {
    %c0_i32 = arith.constant 0 : i32
    %c0_i32_0 = arith.constant 0 : i32
    %c0_i32_1 = arith.constant 0 : i32
    return %c0_i32, %c0_i32_0 : i32, i32
  }
  func.func @transform_5(%arg0: i32) -> (i32, i32) {
    %c0_i32 = arith.constant 0 : i32
    %c0_i32_0 = arith.constant 0 : i32
    %c0_i32_1 = arith.constant 0 : i32
    return %c0_i32, %c0_i32_0 : i32, i32
  }
  func.func @transform_6(%arg0: i32) -> (i32, i32, i32) {
    %c0_i32 = arith.constant 0 : i32
    %c0_i32_0 = arith.constant 0 : i32
    %c0_i32_1 = arith.constant 0 : i32
    %c0_i32_2 = arith.constant 0 : i32
    return %c0_i32, %c0_i32_0, %c0_i32_1 : i32, i32, i32
  }
  func.func @transform_7(%arg0: i32) -> (i32, i32) {
    %c0_i32 = arith.constant 0 : i32
    %c0_i32_0 = arith.constant 0 : i32
    %c0_i32_1 = arith.constant 0 : i32
    return %c0_i32, %c0_i32_0 : i32, i32
  }
  func.func @transform_8(%arg0: i32) -> (i32, i32) {
    %c0_i32 = arith.constant 0 : i32
    %c0_i32_0 = arith.constant 0 : i32
    %c0_i32_1 = arith.constant 0 : i32
    return %c0_i32, %c0_i32_0 : i32, i32
  }
  func.func @transform_9(%arg0: i32) -> (i32, i32, i32) {
    %c0_i32 = arith.constant 0 : i32
    %c0_i32_0 = arith.constant 0 : i32
    %c0_i32_1 = arith.constant 0 : i32
    return %arg0, %c0_i32, %c0_i32_0 : i32, i32, i32
  }
}

</mosaic_0001>

<llo_original>
// kernel: tpu_custom_call.1
$region0: #{tpu_custom_call.1}
  #allocation0 [shape = 'u32[]', space=smem, size = 0x4, offset = 0x4, fixed_abs, tag = 'smem constant byte address 0x4 - core index']
  #allocation1 [shape = 'u32[144,128]{1,0:T(1,128)}', space=vmem, size = 0x12000, scoped, tag = 'internal scratch']
  #allocation2 [shape = 'f32[256,96]{1,0:T(8,128)}', space=vmem, size = 0x20000, scoped, tag = 'scratch operand']
  %s0 = inlined_call_operand.vmem [shape: f32[1,256,4], index: 0, kind: input, shape index: {}]
  %s1 = inlined_call_operand.vmem [shape: f32[4,96], index: 1, kind: input, shape index: {}]
  %s2 = inlined_call_operand.vmem [shape: f32[32,96], index: 2, kind: input, shape index: {}]
  %s3 = inlined_call_operand.vmem [shape: f32[1,96], index: 3, kind: input, shape index: {}]
  %s4 = inlined_call_operand.vmem [shape: f32[1,96], index: 4, kind: input, shape index: {}]
  %s5 = inlined_call_operand.vmem [shape: f32[32,32], index: 5, kind: input, shape index: {}]
  %s6 = inlined_call_operand.vmem [shape: f32[3,32,32], index: 6, kind: input, shape index: {}]
  %s7 = inlined_call_operand.vmem [shape: f32[32,128], index: 7, kind: input, shape index: {}]
  %s8 = inlined_call_operand.vmem [shape: f32[1,128], index: 8, kind: input, shape index: {}]
  %s9 = inlined_call_operand.hbm [shape: f32[1,32,128], index: 9, kind: output, shape index: {}]
  %s10 = sld [smem:[#allocation0]]
  $region46: #{tpu_custom_call.1} parent=0
    _
  %s12 = ssub.s32 1, %s10
  %s13 = scalar_select 0, %s12, %s10
  $region1: #{tpu_custom_call.1} parent=0
    #allocation3 [shape = 'u8[16384]{0}', space=vmem, size = 0x4000, scoped, tag = 'output window, operand 0, single buffered']
    #allocation4 [shape = 's32[1]{0}', space=sflag, size = 0x4, scoped, tag = 'scoped memory for tpu_custom_call.1']
    %14 = vsyncpa [#allocation4], 0
    // Predicated region
    $region2: #{tpu_custom_call.1} parent=1 // pred_check
      _
    $region3: #{tpu_custom_call.1} parent=1 // pred_check_branch
      %16 = sbr.rel (0) target = $region5
    $region4: #{tpu_custom_call.1} parent=1 // pred_region
      _
    $region5: #{tpu_custom_call.1} parent=1 // pred_fallthru
      _
    // Predicated region
    $region6: #{tpu_custom_call.1} parent=1 // pred_check
      _
    $region7: #{tpu_custom_call.1} parent=1 // pred_check_branch
      %18 = sbr.rel (0) target = $region9
    $region8: #{tpu_custom_call.1} parent=1 // pred_region
      _
    $region9: #{tpu_custom_call.1} parent=1 // pred_fallthru
      _
    // Predicated region
    $region10: #{tpu_custom_call.1} parent=1 // pred_check
      _
    $region11: #{tpu_custom_call.1} parent=1 // pred_check_branch
      %20 = sbr.rel (0) target = $region13
    $region12: #{tpu_custom_call.1} parent=1 // pred_region
      _
    $region13: #{tpu_custom_call.1} parent=1 // pred_fallthru
      _
    // Predicated region
    $region14: #{tpu_custom_call.1} parent=1 // pred_check
      _
    $region15: #{tpu_custom_call.1} parent=1 // pred_check_branch
      %22 = sbr.rel (0) target = $region17
    $region16: #{tpu_custom_call.1} parent=1 // pred_region
      _
    $region17: #{tpu_custom_call.1} parent=1 // pred_fallthru
      _
    // Predicated region
    $region18: #{tpu_custom_call.1} parent=1 // pred_check
      _
    $region19: #{tpu_custom_call.1} parent=1 // pred_check_branch
      %24 = sbr.rel (0) target = $region21
    $region20: #{tpu_custom_call.1} parent=1 // pred_region
      _
    $region21: #{tpu_custom_call.1} parent=1 // pred_fallthru
      _
    // Predicated region
    $region22: #{tpu_custom_call.1} parent=1 // pred_check
      _
    $region23: #{tpu_custom_call.1} parent=1 // pred_check_branch
      %26 = sbr.rel (0) target = $region25
    $region24: #{tpu_custom_call.1} parent=1 // pred_region
      _
    $region25: #{tpu_custom_call.1} parent=1 // pred_fallthru
      _
    // Predicated region
    $region26: #{tpu_custom_call.1} parent=1 // pred_check
      _
    $region27: #{tpu_custom_call.1} parent=1 // pred_check_branch
      %28 = sbr.rel (0) target = $region29
    $region28: #{tpu_custom_call.1} parent=1 // pred_region
      _
    $region29: #{tpu_custom_call.1} parent=1 // pred_fallthru
      _
    // Predicated region
    $region30: #{tpu_custom_call.1} parent=1 // pred_check
      _
    $region31: #{tpu_custom_call.1} parent=1 // pred_check_branch
      %30 = sbr.rel (0) target = $region33
    $region32: #{tpu_custom_call.1} parent=1 // pred_region
      _
    $region33: #{tpu_custom_call.1} parent=1 // pred_fallthru
      _
    // Predicated region
    $region34: #{tpu_custom_call.1} parent=1 // pred_check
      _
    $region35: #{tpu_custom_call.1} parent=1 // pred_check_branch
      %32 = sbr.rel (0) target = $region37
    $region36: #{tpu_custom_call.1} parent=1 // pred_region
      _
    $region37: #{tpu_custom_call.1} parent=1 // pred_fallthru
      _
    %v33 = vld [vmem:[%s0] sm:$0xff]
    %v34 = vld [vmem:[%s0 + $0x8] sm:$0xff]
    %v35 = vld [vmem:[%s0 + $0x10] sm:$0xff]
    %v36 = vld [vmem:[%s0 + $0x18] sm:$0xff]
    %v37 = vld [vmem:[%s0 + $0x20] sm:$0xff]
    %v38 = vld [vmem:[%s0 + $0x28] sm:$0xff]
    %v39 = vld [vmem:[%s0 + $0x30] sm:$0xff]
    %v40 = vld [vmem:[%s0 + $0x38] sm:$0xff]
    %v41 = vld [vmem:[%s0 + $0x40] sm:$0xff]
    %v42 = vld [vmem:[%s0 + $0x48] sm:$0xff]
    %v43 = vld [vmem:[%s0 + $0x50] sm:$0xff]
    %v44 = vld [vmem:[%s0 + $0x58] sm:$0xff]
    %v45 = vld [vmem:[%s0 + $0x60] sm:$0xff]
    %v46 = vld [vmem:[%s0 + $0x68] sm:$0xff]
    %v47 = vld [vmem:[%s0 + $0x70] sm:$0xff]
    %v48 = vld [vmem:[%s0 + $0x78] sm:$0xff]
    %v49 = vld [vmem:[%s0 + $0x80] sm:$0xff]
    %v50 = vld [vmem:[%s0 + $0x88] sm:$0xff]
    %v51 = vld [vmem:[%s0 + $0x90] sm:$0xff]
    %v52 = vld [vmem:[%s0 + $0x98] sm:$0xff]
    %v53 = vld [vmem:[%s0 + $0xa0] sm:$0xff]
    %v54 = vld [vmem:[%s0 + $0xa8] sm:$0xff]
    %v55 = vld [vmem:[%s0 + $0xb0] sm:$0xff]
    %v56 = vld [vmem:[%s0 + $0xb8] sm:$0xff]
    %v57 = vld [vmem:[%s0 + $0xc0] sm:$0xff]
    %v58 = vld [vmem:[%s0 + $0xc8] sm:$0xff]
    %v59 = vld [vmem:[%s0 + $0xd0] sm:$0xff]
    %v60 = vld [vmem:[%s0 + $0xd8] sm:$0xff]
    %v61 = vld [vmem:[%s0 + $0xe0] sm:$0xff]
    %v62 = vld [vmem:[%s0 + $0xe8] sm:$0xff]
    %v63 = vld [vmem:[%s0 + $0xf0] sm:$0xff]
    %v64 = vld [vmem:[%s0 + $0xf8] sm:$0xff]
    %v65 = vld [vmem:[%s1] sm:$0xf]
    %v66 = vld [vmem:[%s3] sm:$0x1]
    %v68 = vlaneseq
    %v69 = vshrl.u32 %v68, 7
    %v70 = vsub.s32 0, %v69
    %v71 = vrot.slane %v66, %v70
    %vm73 = vcmask 31744
    %v75 = vsel %vm73, %v33, 0
    %v78 = vsel %vm73, %v34, 0
    %v81 = vsel %vm73, %v35, 0
    %v84 = vsel %vm73, %v36, 0
    %v87 = vsel %vm73, %v37, 0
    %v90 = vsel %vm73, %v38, 0
    %v93 = vsel %vm73, %v39, 0
    %v96 = vsel %vm73, %v40, 0
    %v99 = vsel %vm73, %v41, 0
    %v102 = vsel %vm73, %v42, 0
    %v105 = vsel %vm73, %v43, 0
    %v108 = vsel %vm73, %v44, 0
    %v111 = vsel %vm73, %v45, 0
    %v114 = vsel %vm73, %v46, 0
    %v117 = vsel %vm73, %v47, 0
    %v120 = vsel %vm73, %v48, 0
    %v123 = vsel %vm73, %v49, 0
    %v126 = vsel %vm73, %v50, 0
    %v129 = vsel %vm73, %v51, 0
    %v132 = vsel %vm73, %v52, 0
    %v135 = vsel %vm73, %v53, 0
    %v138 = vsel %vm73, %v54, 0
    %v141 = vsel %vm73, %v55, 0
    %v144 = vsel %vm73, %v56, 0
    %v147 = vsel %vm73, %v57, 0
    %v150 = vsel %vm73, %v58, 0
    %v153 = vsel %vm73, %v59, 0
    %v156 = vsel %vm73, %v60, 0
    %v159 = vsel %vm73, %v61, 0
    %v162 = vsel %vm73, %v62, 0
    %v165 = vsel %vm73, %v63, 0
    %v168 = vsel %vm73, %v64, 0
    %vm170 = vcmask 1043456
    %v172 = vsel %vm170, %v65, 0
    %174 = vmatprep.subr.mxu0 0.0
    %175 = vmatpush1.msra.mxu0 %v172
    %176 = vmatprep.subr.mxu0 0.0
    %177 = vmatpush1.msra.mxu0 0.0
    %178 = vmatprep.subr.mxu0 0.0
    %179 = vmatpush1.msra.mxu0 0.0
    %180 = vmatprep.subr.mxu0 0.0
    %181 = vmatpush1.msra.mxu0 0.0
    %182 = vmatprep.subr.mxu0 0.0
    %183 = vmatpush1.msra.mxu0 0.0
    %184 = vmatprep.subr.mxu0 0.0
    %185 = vmatpush1.msra.mxu0 0.0
    %186 = vmatprep.subr.mxu0 0.0
    %187 = vmatpush1.msra.mxu0 0.0
    %188 = vmatprep.subr.mxu0 0.0
    %189 = vmatpush1.msra.mxu0 0.0
    %190 = vmatprep.subr.mxu0 0.0
    %191 = vmatpush1.msra.mxu0 0.0
    %192 = vmatprep.subr.mxu0 0.0
    %193 = vmatpush1.msra.mxu0 0.0
    %194 = vmatprep.subr.mxu0 0.0
    %195 = vmatpush1.msra.mxu0 0.0
    %196 = vmatprep.subr.mxu0 0.0
    %197 = vmatpush1.msra.mxu0 0.0
    %198 = vmatprep.subr.mxu0 0.0
    %199 = vmatpush1.msra.mxu0 0.0
    %200 = vmatprep.subr.mxu0 0.0
    %201 = vmatpush1.msra.mxu0 0.0
    %202 = vmatprep.subr.mxu0 0.0
    %203 = vmatpush1.msra.mxu0 0.0
    %204 = vmatprep.subr.mxu0 0.0
    %205 = vmatpush1.msra.mxu0 0.0
    %206 = vmatprep.subr.mxu0 0.0
    %207 = vmatpush1.msra.mxu0 0.0
    %208 = vmatprep.subr.mxu0 0.0
    %209 = vmatpush1.msra.mxu0 0.0
    %210 = vmatprep.subr.mxu0 0.0
    %211 = vmatpush1.msra.mxu0 0.0
    %212 = vmatprep.subr.mxu0 0.0
    %213 = vmatpush1.msra.mxu0 0.0
    %214 = vmatprep.subr.mxu0 0.0
    %215 = vmatpush1.msra.mxu0 0.0
    %216 = vmatprep.subr.mxu0 0.0
    %217 = vmatpush1.msra.mxu0 0.0
    %218 = vmatprep.subr.mxu0 0.0
    %219 = vmatpush1.msra.mxu0 0.0
    %220 = vmatprep.subr.mxu0 0.0
    %221 = vmatpush1.msra.mxu0 0.0
    %222 = vmatprep.subr.mxu0 0.0
    %223 = vmatpush1.msra.mxu0 0.0
    %224 = vmatprep.subr.mxu0 0.0
    %225 = vmatpush1.msra.mxu0 0.0
    %226 = vmatprep.subr.mxu0 0.0
    %227 = vmatpush1.msra.mxu0 0.0
    %228 = vmatprep.subr.mxu0 0.0
    %229 = vmatpush1.msra.mxu0 0.0
    %230 = vmatprep.subr.mxu0 0.0
    %231 = vmatpush1.msra.mxu0 0.0
    %232 = vmatprep.subr.mxu0 0.0
    %233 = vmatpush1.msra.mxu0 0.0
    %234 = vmatprep.subr.mxu0 0.0
    %235 = vmatpush1.msra.mxu0 0.0
    %236 = vmatprep.subr.mxu0 0.0
    %237 = vmatpush1.msra.mxu0 0.0
    %238 = vmatprep.mubr.f32.mxu0 0.0
    %239 = vmatmul.mubr.f32.gmra.mrb[0].mxu0 %v75
    %v240 = vpop.f32.mrb[0].mxu0
    %v241 = vadd.f32 %v71, %v240
    %v242 = vpop.f32.mrb[0].mxu0
    %243 = vmatprep.mubr.f32.mxu0 0.0
    %244 = vmatmul.mubr.f32.gmra.mrb[0].mxu0 %v78
    %v245 = vpop.f32.mrb[0].mxu0
    %v246 = vadd.f32 %v71, %v245
    %v247 = vpop.f32.mrb[0].mxu0
    %248 = vmatprep.mubr.f32.mxu0 0.0
    %249 = vmatmul.mubr.f32.gmra.mrb[0].mxu0 %v81
    %v250 = vpop.f32.mrb[0].mxu0
    %v251 = vadd.f32 %v71, %v250
    %v252 = vpop.f32.mrb[0].mxu0
    %253 = vmatprep.mubr.f32.mxu0 0.0
    %254 = vmatmul.mubr.f32.gmra.mrb[0].mxu0 %v84
    %v255 = vpop.f32.mrb[0].mxu0
    %v256 = vadd.f32 %v71, %v255
    %v257 = vpop.f32.mrb[0].mxu0
    %258 = vmatprep.mubr.f32.mxu0 0.0
    %259 = vmatmul.mubr.f32.gmra.mrb[0].mxu0 %v87
    %v260 = vpop.f32.mrb[0].mxu0
    %v261 = vadd.f32 %v71, %v260
    %v262 = vpop.f32.mrb[0].mxu0
    %263 = vmatprep.mubr.f32.mxu0 0.0
    %264 = vmatmul.mubr.f32.gmra.mrb[0].mxu0 %v90
    %v265 = vpop.f32.mrb[0].mxu0
    %v266 = vadd.f32 %v71, %v265
    %v267 = vpop.f32.mrb[0].mxu0
    %268 = vmatprep.mubr.f32.mxu0 0.0
    %269 = vmatmul.mubr.f32.gmra.mrb[0].mxu0 %v93
    %v270 = vpop.f32.mrb[0].mxu0
    %v271 = vadd.f32 %v71, %v270
    %v272 = vpop.f32.mrb[0].mxu0
    %273 = vmatprep.mubr.f32.mxu0 0.0
    %274 = vmatmul.mubr.f32.gmra.mrb[0].mxu0 %v96
    %v275 = vpop.f32.mrb[0].mxu0
    %v276 = vadd.f32 %v71, %v275
    %v277 = vpop.f32.mrb[0].mxu0
    %278 = vmatprep.mubr.f32.mxu0 0.0
    %279 = vmatmul.mubr.f32.gmra.mrb[0].mxu0 %v99
    %v280 = vpop.f32.mrb[0].mxu0
    %v281 = vadd.f32 %v71, %v280
    %v282 = vpop.f32.mrb[0].mxu0
    %283 = vmatprep.mubr.f32.mxu0 0.0
    %284 = vmatmul.mubr.f32.gmra.mrb[0].mxu0 %v102
    %v285 = vpop.f32.mrb[0].mxu0
    %v286 = vadd.f32 %v71, %v285
    %v287 = vpop.f32.mrb[0].mxu0
    %288 = vmatprep.mubr.f32.mxu0 0.0
    %289 = vmatmul.mubr.f32.gmra.mrb[0].mxu0 %v105
    %v290 = vpop.f32.mrb[0].mxu0
    %v291 = vadd.f32 %v71, %v290
    %v292 = vpop.f32.mrb[0].mxu0
    %293 = vmatprep.mubr.f32.mxu0 0.0
    %294 = vmatmul.mubr.f32.gmra.mrb[0].mxu0 %v108
    %v295 = vpop.f32.mrb[0].mxu0
    %v296 = vadd.f32 %v71, %v295
    %v297 = vpop.f32.mrb[0].mxu0
    %298 = vmatprep.mubr.f32.mxu0 0.0
    %299 = vmatmul.mubr.f32.gmra.mrb[0].mxu0 %v111
    %v300 = vpop.f32.mrb[0].mxu0
    %v301 = vadd.f32 %v71, %v300
    %v302 = vpop.f32.mrb[0].mxu0
    %303 = vmatprep.mubr.f32.mxu0 0.0
    %304 = vmatmul.mubr.f32.gmra.mrb[0].mxu0 %v114
    %v305 = vpop.f32.mrb[0].mxu0
    %v306 = vadd.f32 %v71, %v305
    %v307 = vpop.f32.mrb[0].mxu0
    %308 = vmatprep.mubr.f32.mxu0 0.0
    %309 = vmatmul.mubr.f32.gmra.mrb[0].mxu0 %v117
    %v310 = vpop.f32.mrb[0].mxu0
    %v311 = vadd.f32 %v71, %v310
    %v312 = vpop.f32.mrb[0].mxu0
    %313 = vmatprep.mubr.f32.mxu0 0.0
    %314 = vmatmul.mubr.f32.gmra.mrb[0].mxu0 %v120
    %v315 = vpop.f32.mrb[0].mxu0
    %v316 = vadd.f32 %v71, %v315
    %v317 = vpop.f32.mrb[0].mxu0
    %318 = vmatprep.mubr.f32.mxu0 0.0
    %319 = vmatmul.mubr.f32.gmra.mrb[0].mxu0 %v123
    %v320 = vpop.f32.mrb[0].mxu0
    %v321 = vadd.f32 %v71, %v320
    %v322 = vpop.f32.mrb[0].mxu0
    %323 = vmatprep.mubr.f32.mxu0 0.0
    %324 = vmatmul.mubr.f32.gmra.mrb[0].mxu0 %v126
    %v325 = vpop.f32.mrb[0].mxu0
    %v326 = vadd.f32 %v71, %v325
    %v327 = vpop.f32.mrb[0].mxu0
    %328 = vmatprep.mubr.f32.mxu0 0.0
    %329 = vmatmul.mubr.f32.gmra.mrb[0].mxu0 %v129
    %v330 = vpop.f32.mrb[0].mxu0
    %v331 = vadd.f32 %v71, %v330
    %v332 = vpop.f32.mrb[0].mxu0
    %333 = vmatprep.mubr.f32.mxu0 0.0
    %334 = vmatmul.mubr.f32.gmra.mrb[0].mxu0 %v132
    %v335 = vpop.f32.mrb[0].mxu0
    %v336 = vadd.f32 %v71, %v335
    %v337 = vpop.f32.mrb[0].mxu0
    %338 = vmatprep.mubr.f32.mxu0 0.0
    %339 = vmatmul.mubr.f32.gmra.mrb[0].mxu0 %v135
    %v340 = vpop.f32.mrb[0].mxu0
    %v341 = vadd.f32 %v71, %v340
    %v342 = vpop.f32.mrb[0].mxu0
    %343 = vmatprep.mubr.f32.mxu0 0.0
    %344 = vmatmul.mubr.f32.gmra.mrb[0].mxu0 %v138
    %v345 = vpop.f32.mrb[0].mxu0
    %v346 = vadd.f32 %v71, %v345
    %v347 = vpop.f32.mrb[0].mxu0
    %348 = vmatprep.mubr.f32.mxu0 0.0
    %349 = vmatmul.mubr.f32.gmra.mrb[0].mxu0 %v141
    %v350 = vpop.f32.mrb[0].mxu0
    %v351 = vadd.f32 %v71, %v350
    %v352 = vpop.f32.mrb[0].mxu0
    %353 = vmatprep.mubr.f32.mxu0 0.0
    %354 = vmatmul.mubr.f32.gmra.mrb[0].mxu0 %v144
    %v355 = vpop.f32.mrb[0].mxu0
    %v356 = vadd.f32 %v71, %v355
    %v357 = vpop.f32.mrb[0].mxu0
    %358 = vmatprep.mubr.f32.mxu0 0.0
    %359 = vmatmul.mubr.f32.gmra.mrb[0].mxu0 %v147
    %v360 = vpop.f32.mrb[0].mxu0
    %v361 = vadd.f32 %v71, %v360
    %v362 = vpop.f32.mrb[0].mxu0
    %363 = vmatprep.mubr.f32.mxu0 0.0
    %364 = vmatmul.mubr.f32.gmra.mrb[0].mxu0 %v150
    %v365 = vpop.f32.mrb[0].mxu0
    %v366 = vadd.f32 %v71, %v365
    %v367 = vpop.f32.mrb[0].mxu0
    %368 = vmatprep.mubr.f32.mxu0 0.0
    %369 = vmatmul.mubr.f32.gmra.mrb[0].mxu0 %v153
    %v370 = vpop.f32.mrb[0].mxu0
    %v371 = vadd.f32 %v71, %v370
    %v372 = vpop.f32.mrb[0].mxu0
    %373 = vmatprep.mubr.f32.mxu0 0.0
    %374 = vmatmul.mubr.f32.gmra.mrb[0].mxu0 %v156
    %v375 = vpop.f32.mrb[0].mxu0
    %v376 = vadd.f32 %v71, %v375
    %v377 = vpop.f32.mrb[0].mxu0
    %378 = vmatprep.mubr.f32.mxu0 0.0
    %379 = vmatmul.mubr.f32.gmra.mrb[0].mxu0 %v159
    %v380 = vpop.f32.mrb[0].mxu0
    %v381 = vadd.f32 %v71, %v380
    %v382 = vpop.f32.mrb[0].mxu0
    %383 = vmatprep.mubr.f32.mxu0 0.0
    %384 = vmatmul.mubr.f32.gmra.mrb[0].mxu0 %v162
    %v385 = vpop.f32.mrb[0].mxu0
    %v386 = vadd.f32 %v71, %v385
    %v387 = vpop.f32.mrb[0].mxu0
    %388 = vmatprep.mubr.f32.mxu0 0.0
    %389 = vmatmul.mubr.f32.gmra.mrb[0].mxu0 %v165
    %v390 = vpop.f32.mrb[0].mxu0
    %v391 = vadd.f32 %v71, %v390
    %v392 = vpop.f32.mrb[0].mxu0
    %393 = vmatprep.mubr.f32.mxu0 0.0
    %394 = vmatmul.mubr.f32.gmra.mrb[0].mxu0 %v168
    %v395 = vpop.f32.mrb[0].mxu0
    %v396 = vadd.f32 %v71, %v395
    %v397 = vpop.f32.mrb[0].mxu0
    %398 = vdwg.mxu0
    %vm399 = vcmask 785408
    %400 = vst.msk [vmem:[#allocation2] sm:$0xff] %vm399, %v241
    %401 = vst.msk [vmem:[#allocation2 + $0x8] sm:$0xff] %vm399, %v246
    %402 = vst.msk [vmem:[#allocation2 + $0x10] sm:$0xff] %vm399, %v251
    %403 = vst.msk [vmem:[#allocation2 + $0x18] sm:$0xff] %vm399, %v256
    %404 = vst.msk [vmem:[#allocation2 + $0x20] sm:$0xff] %vm399, %v261
    %405 = vst.msk [vmem:[#allocation2 + $0x28] sm:$0xff] %vm399, %v266
    %406 = vst.msk [vmem:[#allocation2 + $0x30] sm:$0xff] %vm399, %v271
    %407 = vst.msk [vmem:[#allocation2 + $0x38] sm:$0xff] %vm399, %v276
    %408 = vst.msk [vmem:[#allocation2 + $0x40] sm:$0xff] %vm399, %v281
    %409 = vst.msk [vmem:[#allocation2 + $0x48] sm:$0xff] %vm399, %v286
    %410 = vst.msk [vmem:[#allocation2 + $0x50] sm:$0xff] %vm399, %v291
    %411 = vst.msk [vmem:[#allocation2 + $0x58] sm:$0xff] %vm399, %v296
    %412 = vst.msk [vmem:[#allocation2 + $0x60] sm:$0xff] %vm399, %v301
    %413 = vst.msk [vmem:[#allocation2 + $0x68] sm:$0xff] %vm399, %v306
    %414 = vst.msk [vmem:[#allocation2 + $0x70] sm:$0xff] %vm399, %v311
    %415 = vst.msk [vmem:[#allocation2 + $0x78] sm:$0xff] %vm399, %v316
    %416 = vst.msk [vmem:[#allocation2 + $0x80] sm:$0xff] %vm399, %v321
    %417 = vst.msk [vmem:[#allocation2 + $0x88] sm:$0xff] %vm399, %v326
    %418 = vst.msk [vmem:[#allocation2 + $0x90] sm:$0xff] %vm399, %v331
    %419 = vst.msk [vmem:[#allocation2 + $0x98] sm:$0xff] %vm399, %v336
    %420 = vst.msk [vmem:[#allocation2 + $0xa0] sm:$0xff] %vm399, %v341
    %421 = vst.msk [vmem:[#allocation2 + $0xa8] sm:$0xff] %vm399, %v346
    %422 = vst.msk [vmem:[#allocation2 + $0xb0] sm:$0xff] %vm399, %v351
    %423 = vst.msk [vmem:[#allocation2 + $0xb8] sm:$0xff] %vm399, %v356
    %424 = vst.msk [vmem:[#allocation2 + $0xc0] sm:$0xff] %vm399, %v361
    %425 = vst.msk [vmem:[#allocation2 + $0xc8] sm:$0xff] %vm399, %v366
    %426 = vst.msk [vmem:[#allocation2 + $0xd0] sm:$0xff] %vm399, %v371
    %427 = vst.msk [vmem:[#allocation2 + $0xd8] sm:$0xff] %vm399, %v376
    %428 = vst.msk [vmem:[#allocation2 + $0xe0] sm:$0xff] %vm399, %v381
    %429 = vst.msk [vmem:[#allocation2 + $0xe8] sm:$0xff] %vm399, %v386
    %430 = vst.msk [vmem:[#allocation2 + $0xf0] sm:$0xff] %vm399, %v391
    %431 = vst.msk [vmem:[#allocation2 + $0xf8] sm:$0xff] %vm399, %v396
    %v432 = vld [vmem:[%s2] sm:$0xff]
    %v433 = vld [vmem:[%s2 + $0x8] sm:$0xff]
    %v434 = vld [vmem:[%s2 + $0x10] sm:$0xff]
    %v435 = vld [vmem:[%s2 + $0x18] sm:$0xff]
    %v436 = vld [vmem:[%s4] sm:$0x1]
    %v437 = vld [vmem:[#allocation2] sm:$0xff]
    %v438 = vld [vmem:[#allocation2 + $0x8] sm:$0xff]
    %v439 = vld [vmem:[#allocation2 + $0x10] sm:$0xff]
    %v440 = vld [vmem:[#allocation2 + $0x18] sm:$0xff]
    %v442 = vlaneseq
    %v443 = vshrl.u32 %v442, 7
    %v444 = vsub.s32 0, %v443
    %v445 = vrot.slane %v436, %v444
    %vm447 = vcmask 261120
    %v449 = vsel %vm447, 0.0, 0
    %451 = vmatprep.subr.mxu0 0.0
    %452 = vmatpush1.msra.mxu0 %v432
    %453 = vmatprep.subr.mxu0 0.0
    %454 = vmatpush1.msra.mxu0 %v433
    %455 = vmatprep.subr.mxu0 0.0
    %456 = vmatpush1.msra.mxu0 %v434
    %457 = vmatprep.subr.mxu0 0.0
    %458 = vmatpush1.msra.mxu0 %v435
    %459 = vmatprep.subr.mxu0 0.0
    %460 = vmatpush1.msra.mxu0 0.0
    %461 = vmatprep.subr.mxu0 0.0
    %462 = vmatpush1.msra.mxu0 0.0
    %463 = vmatprep.subr.mxu0 0.0
    %464 = vmatpush1.msra.mxu0 0.0
    %465 = vmatprep.subr.mxu0 0.0
    %466 = vmatpush1.msra.mxu0 0.0
    %467 = vmatprep.subr.mxu0 0.0
    %468 = vmatpush1.msra.mxu0 0.0
    %469 = vmatprep.subr.mxu0 0.0
    %470 = vmatpush1.msra.mxu0 0.0
    %471 = vmatprep.subr.mxu0 0.0
    %472 = vmatpush1.msra.mxu0 0.0
    %473 = vmatprep.subr.mxu0 0.0
    %474 = vmatpush1.msra.mxu0 0.0
    %475 = vmatprep.subr.mxu0 0.0
    %476 = vmatpush1.msra.mxu0 0.0
    %477 = vmatprep.subr.mxu0 0.0
    %478 = vmatpush1.msra.mxu0 0.0
    %479 = vmatprep.subr.mxu0 0.0
    %480 = vmatpush1.msra.mxu0 0.0
    %481 = vmatprep.subr.mxu0 0.0
    %482 = vmatpush1.msra.mxu0 0.0
    %483 = vmatprep.subr.mxu0 0.0
    %484 = vmatpush1.msra.mxu0 0.0
    %485 = vmatprep.subr.mxu0 0.0
    %486 = vmatpush1.msra.mxu0 0.0
    %487 = vmatprep.subr.mxu0 0.0
    %488 = vmatpush1.msra.mxu0 0.0
    %489 = vmatprep.subr.mxu0 0.0
    %490 = vmatpush1.msra.mxu0 0.0
    %491 = vmatprep.subr.mxu0 0.0
    %492 = vmatpush1.msra.mxu0 0.0
    %493 = vmatprep.subr.mxu0 0.0
    %494 = vmatpush1.msra.mxu0 0.0
    %495 = vmatprep.subr.mxu0 0.0
    %496 = vmatpush1.msra.mxu0 0.0
    %497 = vmatprep.subr.mxu0 0.0
    %498 = vmatpush1.msra.mxu0 0.0
    %499 = vmatprep.subr.mxu0 0.0
    %500 = vmatpush1.msra.mxu0 0.0
    %501 = vmatprep.subr.mxu0 0.0
    %502 = vmatpush1.msra.mxu0 0.0
    %503 = vmatprep.subr.mxu0 0.0
    %504 = vmatpush1.msra.mxu0 0.0
    %505 = vmatprep.subr.mxu0 0.0
    %506 = vmatpush1.msra.mxu0 0.0
    %507 = vmatprep.subr.mxu0 0.0
    %508 = vmatpush1.msra.mxu0 0.0
    %509 = vmatprep.subr.mxu0 0.0
    %510 = vmatpush1.msra.mxu0 0.0
    %511 = vmatprep.subr.mxu0 0.0
    %512 = vmatpush1.msra.mxu0 0.0
    %513 = vmatprep.subr.mxu0 0.0
    %514 = vmatpush1.msra.mxu0 0.0
    %515 = vmatprep.mubr.f32.mxu0 0.0
    %516 = vmatmul.mubr.f32.gmra.mrb[0].mxu0 %v449
    %v517 = vpop.f32.mrb[0].mxu0
    %v518 = vadd.f32 %v445, %v517
    %v519 = vpop.f32.mrb[0].mxu0
    %520 = vmatprep.mubr.f32.mxu0 0.0
    %521 = vmatmul.mubr.f32.gmra.mrb[0].mxu0 %v449
    %v522 = vpop.f32.mrb[0].mxu0
    %v523 = vadd.f32 %v445, %v522
    %v524 = vpop.f32.mrb[0].mxu0
    %525 = vmatprep.mubr.f32.mxu0 0.0
    %526 = vmatmul.mubr.f32.gmra.mrb[0].mxu0 %v449
    %v527 = vpop.f32.mrb[0].mxu0
    %v528 = vadd.f32 %v445, %v527
    %v529 = vpop.f32.mrb[0].mxu0
    %530 = vmatprep.mubr.f32.mxu0 0.0
    %531 = vmatmul.mubr.f32.gmra.mrb[0].mxu0 %v449
    %v532 = vpop.f32.mrb[0].mxu0
    %v533 = vadd.f32 %v445, %v532
    %v534 = vpop.f32.mrb[0].mxu0
    %535 = vdwg.mxu0
    %v536 = vadd.f32 %v437, %v518
    %v537 = vadd.f32 %v438, %v523
    %v538 = vadd.f32 %v439, %v528
    %v539 = vadd.f32 %v440, %v533
    %v540 = vxor.u32 %v536, 2147483648
    %v541 = vxor.u32 %v537, 2147483648
    %v542 = vxor.u32 %v538, 2147483648
    %v543 = vxor.u32 %v539, 2147483648
    %v544 = vmul.f32 %v540, 1.442695
    %v545 = vpow.pop %v544
    %v546 = vmul.f32 %v541, 1.442695
    %v547 = vpow.pop %v546
    %v548 = vmul.f32 %v542, 1.442695
    %v549 = vpow.pop %v548
    %v550 = vmul.f32 %v543, 1.442695
    %v551 = vpow.pop %v550
    %v552 = vadd.f32 %v545, 1.0
    %v553 = vadd.f32 %v547, 1.0
    %v554 = vadd.f32 %v549, 1.0
    %v555 = vadd.f32 %v551, 1.0
    %v556 = vrcp.pop %v552
    %v557 = vmul.f32 1.0, %v556
    %v558 = vrcp.pop %v553
    %v559 = vmul.f32 1.0, %v558
    %v560 = vrcp.pop %v554
    %v561 = vmul.f32 1.0, %v560
    %v562 = vrcp.pop %v555
    %v563 = vmul.f32 1.0, %v562
    %568 = vrot.lane.b32.xlu0 %v518, 64
    %v569 = vpop.permute.xlu0 %568
    %570 = vrot.lane.b32.xlu0 %v523, 64
    %v571 = vpop.permute.xlu0 %570
    %572 = vrot.lane.b32.xlu0 %v528, 64
    %v573 = vpop.permute.xlu0 %572
    %574 = vrot.lane.b32.xlu0 %v533, 64
    %v575 = vpop.permute.xlu0 %574
    %v580 = vmul.f32 %v557, %v569
    %v581 = vmul.f32 %v559, %v571
    %v582 = vmul.f32 %v561, %v573
    %v583 = vmul.f32 %v563, %v575
    %588 = vrot.lane.b32.xlu0 %v580, 64
    %v589 = vpop.permute.xlu0 %588
    %590 = vrot.lane.b32.xlu0 %v581, 64
    %v591 = vpop.permute.xlu0 %590
    %592 = vrot.lane.b32.xlu0 %v582, 64
    %v593 = vpop.permute.xlu0 %592
    %594 = vrot.lane.b32.xlu0 %v583, 64
    %v595 = vpop.permute.xlu0 %594
    %v600 = vadd.f32 %v437, %v589
    %v601 = vadd.f32 %v438, %v591
    %v602 = vadd.f32 %v439, %v593
    %v603 = vadd.f32 %v440, %v595
    %v604 = vtanh.pop %v600
    %v605 = vtanh.pop %v601
    %v606 = vtanh.pop %v602
    %v607 = vtanh.pop %v603
    %v608 = vsub.f32 1.0, %v557
    %v609 = vsub.f32 1.0, %v559
    %v610 = vsub.f32 1.0, %v561
    %v611 = vsub.f32 1.0, %v563
    %616 = vrot.lane.b32.xlu0 %v604, 96
    %v617 = vpop.permute.xlu0 %616
    %618 = vrot.lane.b32.xlu0 %v605, 96
    %v619 = vpop.permute.xlu0 %618
    %620 = vrot.lane.b32.xlu0 %v606, 96
    %v621 = vpop.permute.xlu0 %620
    %622 = vrot.lane.b32.xlu0 %v607, 96
    %v623 = vpop.permute.xlu0 %622
    %v628 = vmul.f32 %v608, %v617
    %v629 = vmul.f32 %v609, %v619
    %v630 = vmul.f32 %v610, %v621
    %v631 = vmul.f32 %v611, %v623
    %v632 = vmul.f32 %v557, 0.0
    %v633 = vmul.f32 %v559, 0.0
    %v634 = vmul.f32 %v561, 0.0
    %v635 = vmul.f32 %v563, 0.0
    %v636 = vadd.f32 %v628, %v632
    %v637 = vadd.f32 %v629, %v633
    %v638 = vadd.f32 %v630, %v634
    %v639 = vadd.f32 %v631, %v635
    %s640 = scalar_lea.vmem [#allocation2], 32
    %v641 = vld [vmem:[%s640] sm:$0xff]
    %v642 = vld [vmem:[%s640 + $0x8] sm:$0xff]
    %v643 = vld [vmem:[%s640 + $0x10] sm:$0xff]
    %v644 = vld [vmem:[%s640 + $0x18] sm:$0xff]
    %649 = vrot.lane.b32.xlu0 %v636, 96
    %v650 = vpop.permute.xlu0 %649
    %651 = vrot.lane.b32.xlu0 %v637, 96
    %v652 = vpop.permute.xlu0 %651
    %653 = vrot.lane.b32.xlu0 %v638, 96
    %v654 = vpop.permute.xlu0 %653
    %655 = vrot.lane.b32.xlu0 %v639, 96
    %v656 = vpop.permute.xlu0 %655
    %v657 = vsel %vm447, %v650, 0
    %v659 = vsel %vm447, %v652, 0
    %v661 = vsel %vm447, %v654, 0
    %v663 = vsel %vm447, %v656, 0
    %665 = vmatprep.subr.mxu0 0.0
    %666 = vmatpush1.msra.mxu0 %v432
    %667 = vmatprep.subr.mxu0 0.0
    %668 = vmatpush1.msra.mxu0 %v433
    %669 = vmatprep.subr.mxu0 0.0
    %670 = vmatpush1.msra.mxu0 %v434
    %671 = vmatprep.subr.mxu0 0.0
    %672 = vmatpush1.msra.mxu0 %v435
    %673 = vmatprep.subr.mxu0 0.0
    %674 = vmatpush1.msra.mxu0 0.0
    %675 = vmatprep.subr.mxu0 0.0
    %676 = vmatpush1.msra.mxu0 0.0
    %677 = vmatprep.subr.mxu0 0.0
    %678 = vmatpush1.msra.mxu0 0.0
    %679 = vmatprep.subr.mxu0 0.0
    %680 = vmatpush1.msra.mxu0 0.0
    %681 = vmatprep.subr.mxu0 0.0
    %682 = vmatpush1.msra.mxu0 0.0
    %683 = vmatprep.subr.mxu0 0.0
    %684 = vmatpush1.msra.mxu0 0.0
    %685 = vmatprep.subr.mxu0 0.0
    %686 = vmatpush1.msra.mxu0 0.0
    %687 = vmatprep.subr.mxu0 0.0
    %688 = vmatpush1.msra.mxu0 0.0
    %689 = vmatprep.subr.mxu0 0.0
    %690 = vmatpush1.msra.mxu0 0.0
    %691 = vmatprep.subr.mxu0 0.0
    %692 = vmatpush1.msra.mxu0 0.0
    %693 = vmatprep.subr.mxu0 0.0
    %694 = vmatpush1.msra.mxu0 0.0
    %695 = vmatprep.subr.mxu0 0.0
    %696 = vmatpush1.msra.mxu0 0.0
    %697 = vmatprep.subr.mxu0 0.0
    %698 = vmatpush1.msra.mxu0 0.0
    %699 = vmatprep.subr.mxu0 0.0
    %700 = vmatpush1.msra.mxu0 0.0
    %701 = vmatprep.subr.mxu0 0.0
    %702 = vmatpush1.msra.mxu0 0.0
    %703 = vmatprep.subr.mxu0 0.0
    %704 = vmatpush1.msra.mxu0 0.0
    %705 = vmatprep.subr.mxu0 0.0
    %706 = vmatpush1.msra.mxu0 0.0
    %707 = vmatprep.subr.mxu0 0.0
    %708 = vmatpush1.msra.mxu0 0.0
    %709 = vmatprep.subr.mxu0 0.0
    %710 = vmatpush1.msra.mxu0 0.0
    %711 = vmatprep.subr.mxu0 0.0
    %712 = vmatpush1.msra.mxu0 0.0
    %713 = vmatprep.subr.mxu0 0.0
    %714 = vmatpush1.msra.mxu0 0.0
    %715 = vmatprep.subr.mxu0 0.0
    %716 = vmatpush1.msra.mxu0 0.0
    %717 = vmatprep.subr.mxu0 0.0
    %718 = vmatpush1.msra.mxu0 0.0
    %719 = vmatprep.subr.mxu0 0.0
    %720 = vmatpush1.msra.mxu0 0.0
    %721 = vmatprep.subr.mxu0 0.0
    %722 = vmatpush1.msra.mxu0 0.0
    %723 = vmatprep.subr.mxu0 0.0
    %724 = vmatpush1.msra.mxu0 0.0
    %725 = vmatprep.subr.mxu0 0.0
    %726 = vmatpush1.msra.mxu0 0.0
    %727 = vmatprep.subr.mxu0 0.0
    %728 = vmatpush1.msra.mxu0 0.0
    %729 = vmatprep.mubr.f32.mxu0 0.0
    %730 = vmatmul.mubr.f32.gmra.mrb[0].mxu0 %v657
    %v731 = vpop.f32.mrb[0].mxu0
    %v732 = vadd.f32 %v445, %v731
    %v733 = vpop.f32.mrb[0].mxu0
    %734 = vmatprep.mubr.f32.mxu0 0.0
    %735 = vmatmul.mubr.f32.gmra.mrb[0].mxu0 %v659
    %v736 = vpop.f32.mrb[0].mxu0
    %v737 = vadd.f32 %v445, %v736
    %v738 = vpop.f32.mrb[0].mxu0
    %739 = vmatprep.mubr.f32.mxu0 0.0
    %740 = vmatmul.mubr.f32.gmra.mrb[0].mxu0 %v661
    %v741 = vpop.f32.mrb[0].mxu0
    %v742 = vadd.f32 %v445, %v741
    %v743 = vpop.f32.mrb[0].mxu0
    %744 = vmatprep.mubr.f32.mxu0 0.0
    %745 = vmatmul.mubr.f32.gmra.mrb[0].mxu0 %v663
    %v746 = vpop.f32.mrb[0].mxu0
    %v747 = vadd.f32 %v445, %v746
    %v748 = vpop.f32.mrb[0].mxu0
    %749 = vdwg.mxu0
    %v750 = vadd.f32 %v641, %v732
    %v751 = vadd.f32 %v642, %v737
    %v752 = vadd.f32 %v643, %v742
    %v753 = vadd.f32 %v644, %v747
    %v754 = vxor.u32 %v750, 2147483648
    %v755 = vxor.u32 %v751, 2147483648
    %v756 = vxor.u32 %v752, 2147483648
    %v757 = vxor.u32 %v753, 2147483648
    %v758 = vmul.f32 %v754, 1.442695
    %v759 = vpow.pop %v758
    %v760 = vmul.f32 %v755, 1.442695
    %v761 = vpow.pop %v760
    %v762 = vmul.f32 %v756, 1.442695
    %v763 = vpow.pop %v762
    %v764 = vmul.f32 %v757, 1.442695
    %v765 = vpow.pop %v764
    %v766 = vadd.f32 %v759, 1.0
    %v767 = vadd.f32 %v761, 1.0
    %v768 = vadd.f32 %v763, 1.0
    %v769 = vadd.f32 %v765, 1.0
    %v770 = vrcp.pop %v766
    %v771 = vmul.f32 1.0, %v770
    %v772 = vrcp.pop %v767
    %v773 = vmul.f32 1.0, %v772
    %v774 = vrcp.pop %v768
    %v775 = vmul.f32 1.0, %v774
    %v776 = vrcp.pop %v769
    %v777 = vmul.f32 1.0, %v776
    %782 = vrot.lane.b32.xlu0 %v732, 64
    %v783 = vpop.permute.xlu0 %782
    %784 = vrot.lane.b32.xlu0 %v737, 64
    %v785 = vpop.permute.xlu0 %784
    %786 = vrot.lane.b32.xlu0 %v742, 64
    %v787 = vpop.permute.xlu0 %786
    %788 = vrot.lane.b32.xlu0 %v747, 64
    %v789 = vpop.permute.xlu0 %788
    %v794 = vmul.f32 %v771, %v783
    %v795 = vmul.f32 %v773, %v785
    %v796 = vmul.f32 %v775, %v787
    %v797 = vmul.f32 %v777, %v789
    %802 = vrot.lane.b32.xlu0 %v794, 64
    %v803 = vpop.permute.xlu0 %802
    %804 = vrot.lane.b32.xlu0 %v795, 64
    %v805 = vpop.permute.xlu0 %804
    %806 = vrot.lane.b32.xlu0 %v796, 64
    %v807 = vpop.permute.xlu0 %806
    %808 = vrot.lane.b32.xlu0 %v797, 64
    %v809 = vpop.permute.xlu0 %808
    %v814 = vadd.f32 %v641, %v803
    %v815 = vadd.f32 %v642, %v805
    %v816 = vadd.f32 %v643, %v807
    %v817 = vadd.f32 %v644, %v809
    %v818 = vtanh.pop %v814
    %v819 = vtanh.pop %v815
    %v820 = vtanh.pop %v816
    %v821 = vtanh.pop %v817
    %v822 = vsub.f32 1.0, %v771
    %v823 = vsub.f32 1.0, %v773
    %v824 = vsub.f32 1.0, %v775
    %v825 = vsub.f32 1.0, %v777
    %830 = vrot.lane.b32.xlu0 %v818, 96
    %v831 = vpop.permute.xlu0 %830
    %832 = vrot.lane.b32.xlu0 %v819, 96
    %v833 = vpop.permute.xlu0 %832
    %834 = vrot.lane.b32.xlu0 %v820, 96
    %v835 = vpop.permute.xlu0 %834
    %836 = vrot.lane.b32.xlu0 %v821, 96
    %v837 = vpop.permute.xlu0 %836
    %v842 = vmul.f32 %v822, %v831
    %v843 = vmul.f32 %v823, %v833
    %v844 = vmul.f32 %v824, %v835
    %v845 = vmul.f32 %v825, %v837
    %v846 = vmul.f32 %v771, %v636
    %v847 = vmul.f32 %v773, %v637
    %v848 = vmul.f32 %v775, %v638
    %v849 = vmul.f32 %v777, %v639
    %v850 = vadd.f32 %v842, %v846
    %v851 = vadd.f32 %v843, %v847
    %v852 = vadd.f32 %v844, %v848
    %v853 = vadd.f32 %v845, %v849
    %s854 = scalar_lea.vmem [#allocation2], 64
    %v855 = vld [vmem:[%s854] sm:$0xff]
    %v856 = vld [vmem:[%s854 + $0x8] sm:$0xff]
    %v857 = vld [vmem:[%s854 + $0x10] sm:$0xff]
    %v858 = vld [vmem:[%s854 + $0x18] sm:$0xff]
    %863 = vrot.lane.b32.xlu0 %v850, 96
    %v864 = vpop.permute.xlu0 %863
    %865 = vrot.lane.b32.xlu0 %v851, 96
    %v866 = vpop.permute.xlu0 %865
    %867 = vrot.lane.b32.xlu0 %v852, 96
    %v868 = vpop.permute.xlu0 %867
    %869 = vrot.lane.b32.xlu0 %v853, 96
    %v870 = vpop.permute.xlu0 %869
    %v871 = vsel %vm447, %v864, 0
    %v873 = vsel %vm447, %v866, 0
    %v875 = vsel %vm447, %v868, 0
    %v877 = vsel %vm447, %v870, 0
    %879 = vmatprep.subr.mxu0 0.0
    %880 = vmatpush1.msra.mxu0 %v432
    %881 = vmatprep.subr.mxu0 0.0
    %882 = vmatpush1.msra.mxu0 %v433
    %883 = vmatprep.subr.mxu0 0.0
    %884 = vmatpush1.msra.mxu0 %v434
    %885 = vmatprep.subr.mxu0 0.0
    %886 = vmatpush1.msra.mxu0 %v435
    %887 = vmatprep.subr.mxu0 0.0
    %888 = vmatpush1.msra.mxu0 0.0
    %889 = vmatprep.subr.mxu0 0.0
    %890 = vmatpush1.msra.mxu0 0.0
    %891 = vmatprep.subr.mxu0 0.0
    %892 = vmatpush1.msra.mxu0 0.0
    %893 = vmatprep.subr.mxu0 0.0
    %894 = vmatpush1.msra.mxu0 0.0
    %895 = vmatprep.subr.mxu0 0.0
    %896 = vmatpush1.msra.mxu0 0.0
    %897 = vmatprep.subr.mxu0 0.0
    %898 = vmatpush1.msra.mxu0 0.0
    %899 = vmatprep.subr.mxu0 0.0
    %900 = vmatpush1.msra.mxu0 0.0
    %901 = vmatprep.subr.mxu0 0.0
    %902 = vmatpush1.msra.mxu0 0.0
    %903 = vmatprep.subr.mxu0 0.0
    %904 = vmatpush1.msra.mxu0 0.0
    %905 = vmatprep.subr.mxu0 0.0
    %906 = vmatpush1.msra.mxu0 0.0
    %907 = vmatprep.subr.mxu0 0.0
    %908 = vmatpush1.msra.mxu0 0.0
    %909 = vmatprep.subr.mxu0 0.0
    %910 = vmatpush1.msra.mxu0 0.0
    %911 = vmatprep.subr.mxu0 0.0
    %912 = vmatpush1.msra.mxu0 0.0
    %913 = vmatprep.subr.mxu0 0.0
    %914 = vmatpush1.msra.mxu0 0.0
    %915 = vmatprep.subr.mxu0 0.0
    %916 = vmatpush1.msra.mxu0 0.0
    %917 = vmatprep.subr.mxu0 0.0
    %918 = vmatpush1.msra.mxu0 0.0
    %919 = vmatprep.subr.mxu0 0.0
    %920 = vmatpush1.msra.mxu0 0.0
    %921 = vmatprep.subr.mxu0 0.0
    %922 = vmatpush1.msra.mxu0 0.0
    %923 = vmatprep.subr.mxu0 0.0
    %924 = vmatpush1.msra.mxu0 0.0
    %925 = vmatprep.subr.mxu0 0.0
    %926 = vmatpush1.msra.mxu0 0.0
    %927 = vmatprep.subr.mxu0 0.0
    %928 = vmatpush1.msra.mxu0 0.0
    %929 = vmatprep.subr.mxu0 0.0
    %930 = vmatpush1.msra.mxu0 0.0
    %931 = vmatprep.subr.mxu0 0.0
    %932 = vmatpush1.msra.mxu0 0.0
    %933 = vmatprep.subr.mxu0 0.0
    %934 = vmatpush1.msra.mxu0 0.0
    %935 = vmatprep.subr.mxu0 0.0
    %936 = vmatpush1.msra.mxu0 0.0
    %937 = vmatprep.subr.mxu0 0.0
    %938 = vmatpush1.msra.mxu0 0.0
    %939 = vmatprep.subr.mxu0 0.0
    %940 = vmatpush1.msra.mxu0 0.0
    %941 = vmatprep.subr.mxu0 0.0
    %942 = vmatpush1.msra.mxu0 0.0
    %943 = vmatprep.mubr.f32.mxu0 0.0
    %944 = vmatmul.mubr.f32.gmra.mrb[0].mxu0 %v871
    %v945 = vpop.f32.mrb[0].mxu0
    %v946 = vadd.f32 %v445, %v945
    %v947 = vpop.f32.mrb[0].mxu0
    %948 = vmatprep.mubr.f32.mxu0 0.0
    %949 = vmatmul.mubr.f32.gmra.mrb[0].mxu0 %v873
    %v950 = vpop.f32.mrb[0].mxu0
    %v951 = vadd.f32 %v445, %v950
    %v952 = vpop.f32.mrb[0].mxu0
    %953 = vmatprep.mubr.f32.mxu0 0.0
    %954 = vmatmul.mubr.f32.gmra.mrb[0].mxu0 %v875
    %v955 = vpop.f32.mrb[0].mxu0
    %v956 = vadd.f32 %v445, %v955
    %v957 = vpop.f32.mrb[0].mxu0
    %958 = vmatprep.mubr.f32.mxu0 0.0
    %959 = vmatmul.mubr.f32.gmra.mrb[0].mxu0 %v877
    %v960 = vpop.f32.mrb[0].mxu0
    %v961 = vadd.f32 %v445, %v960
    %v962 = vpop.f32.mrb[0].mxu0
    %963 = vdwg.mxu0
    %v964 = vadd.f32 %v855, %v946
    %v965 = vadd.f32 %v856, %v951
    %v966 = vadd.f32 %v857, %v956
    %v967 = vadd.f32 %v858, %v961
    %v968 = vxor.u32 %v964, 2147483648
    %v969 = vxor.u32 %v965, 2147483648
    %v970 = vxor.u32 %v966, 2147483648
    %v971 = vxor.u32 %v967, 2147483648
    %v972 = vmul.f32 %v968, 1.442695
    %v973 = vpow.pop %v972
    %v974 = vmul.f32 %v969, 1.442695
    %v975 = vpow.pop %v974
    %v976 = vmul.f32 %v970, 1.442695
    %v977 = vpow.pop %v976
    %v978 = vmul.f32 %v971, 1.442695
    %v979 = vpow.pop %v978
    %v980 = vadd.f32 %v973, 1.0
    %v981 = vadd.f32 %v975, 1.0
    %v982 = vadd.f32 %v977, 1.0
    %v983 = vadd.f32 %v979, 1.0
    %v984 = vrcp.pop %v980
    %v985 = vmul.f32 1.0, %v984
    %v986 = vrcp.pop %v981
    %v987 = vmul.f32 1.0, %v986
    %v988 = vrcp.pop %v982
    %v989 = vmul.f32 1.0, %v988
    %v990 = vrcp.pop %v983
    %v991 = vmul.f32 1.0, %v990
    %996 = vrot.lane.b32.xlu0 %v946, 64
    %v997 = vpop.permute.xlu0 %996
    %998 = vrot.lane.b32.xlu0 %v951, 64
    %v999 = vpop.permute.xlu0 %998
    %1000 = vrot.lane.b32.xlu0 %v956, 64
    %v1001 = vpop.permute.xlu0 %1000
    %1002 = vrot.lane.b32.xlu0 %v961, 64
    %v1003 = vpop.permute.xlu0 %1002
    %v1008 = vmul.f32 %v985, %v997
    %v1009 = vmul.f32 %v987, %v999
    %v1010 = vmul.f32 %v989, %v1001
    %v1011 = vmul.f32 %v991, %v1003
    %1016 = vrot.lane.b32.xlu0 %v1008, 64
    %v1017 = vpop.permute.xlu0 %1016
    %1018 = vrot.lane.b32.xlu0 %v1009, 64
    %v1019 = vpop.permute.xlu0 %1018
    %1020 = vrot.lane.b32.xlu0 %v1010, 64
    %v1021 = vpop.permute.xlu0 %1020
    %1022 = vrot.lane.b32.xlu0 %v1011, 64
    %v1023 = vpop.permute.xlu0 %1022
    %v1028 = vadd.f32 %v855, %v1017
    %v1029 = vadd.f32 %v856, %v1019
    %v1030 = vadd.f32 %v857, %v1021
    %v1031 = vadd.f32 %v858, %v1023
    %v1032 = vtanh.pop %v1028
    %v1033 = vtanh.pop %v1029
    %v1034 = vtanh.pop %v1030
    %v1035 = vtanh.pop %v1031
    %v1036 = vsub.f32 1.0, %v985
    %v1037 = vsub.f32 1.0, %v987
    %v1038 = vsub.f32 1.0, %v989
    %v1039 = vsub.f32 1.0, %v991
    %1044 = vrot.lane.b32.xlu0 %v1032, 96
    %v1045 = vpop.permute.xlu0 %1044
    %1046 = vrot.lane.b32.xlu0 %v1033, 96
    %v1047 = vpop.permute.xlu0 %1046
    %1048 = vrot.lane.b32.xlu0 %v1034, 96
    %v1049 = vpop.permute.xlu0 %1048
    %1050 = vrot.lane.b32.xlu0 %v1035, 96
    %v1051 = vpop.permute.xlu0 %1050
    %v1056 = vmul.f32 %v1036, %v1045
    %v1057 = vmul.f32 %v1037, %v1047
    %v1058 = vmul.f32 %v1038, %v1049
    %v1059 = vmul.f32 %v1039, %v1051
    %v1060 = vmul.f32 %v985, %v850
    %v1061 = vmul.f32 %v987, %v851
    %v1062 = vmul.f32 %v989, %v852
    %v1063 = vmul.f32 %v991, %v853
    %v1064 = vadd.f32 %v1056, %v1060
    %v1065 = vadd.f32 %v1057, %v1061
    %v1066 = vadd.f32 %v1058, %v1062
    %v1067 = vadd.f32 %v1059, %v1063
    %s1068 = scalar_lea.vmem [#allocation2], 96
    %v1069 = vld [vmem:[%s1068] sm:$0xff]
    %v1070 = vld [vmem:[%s1068 + $0x8] sm:$0xff]
    %v1071 = vld [vmem:[%s1068 + $0x10] sm:$0xff]
    %v1072 = vld [vmem:[%s1068 + $0x18] sm:$0xff]
    %1077 = vrot.lane.b32.xlu0 %v1064, 96
    %v1078 = vpop.permute.xlu0 %1077
    %1079 = vrot.lane.b32.xlu0 %v1065, 96
    %v1080 = vpop.permute.xlu0 %1079
    %1081 = vrot.lane.b32.xlu0 %v1066, 96
    %v1082 = vpop.permute.xlu0 %1081
    %1083 = vrot.lane.b32.xlu0 %v1067, 96
    %v1084 = vpop.permute.xlu0 %1083
    %v1085 = vsel %vm447, %v1078, 0
    %v1087 = vsel %vm447, %v1080, 0
    %v1089 = vsel %vm447, %v1082, 0
    %v1091 = vsel %vm447, %v1084, 0
    %1093 = vmatprep.subr.mxu0 0.0
    %1094 = vmatpush1.msra.mxu0 %v432
    %1095 = vmatprep.subr.mxu0 0.0
    %1096 = vmatpush1.msra.mxu0 %v433
    %1097 = vmatprep.subr.mxu0 0.0
    %1098 = vmatpush1.msra.mxu0 %v434
    %1099 = vmatprep.subr.mxu0 0.0
    %1100 = vmatpush1.msra.mxu0 %v435
    %1101 = vmatprep.subr.mxu0 0.0
    %1102 = vmatpush1.msra.mxu0 0.0
    %1103 = vmatprep.subr.mxu0 0.0
    %1104 = vmatpush1.msra.mxu0 0.0
    %1105 = vmatprep.subr.mxu0 0.0
    %1106 = vmatpush1.msra.mxu0 0.0
    %1107 = vmatprep.subr.mxu0 0.0
    %1108 = vmatpush1.msra.mxu0 0.0
    %1109 = vmatprep.subr.mxu0 0.0
    %1110 = vmatpush1.msra.mxu0 0.0
    %1111 = vmatprep.subr.mxu0 0.0
    %1112 = vmatpush1.msra.mxu0 0.0
    %1113 = vmatprep.subr.mxu0 0.0
    %1114 = vmatpush1.msra.mxu0 0.0
    %1115 = vmatprep.subr.mxu0 0.0
    %1116 = vmatpush1.msra.mxu0 0.0
    %1117 = vmatprep.subr.mxu0 0.0
    %1118 = vmatpush1.msra.mxu0 0.0
    %1119 = vmatprep.subr.mxu0 0.0
    %1120 = vmatpush1.msra.mxu0 0.0
    %1121 = vmatprep.subr.mxu0 0.0
    %1122 = vmatpush1.msra.mxu0 0.0
    %1123 = vmatprep.subr.mxu0 0.0
    %1124 = vmatpush1.msra.mxu0 0.0
    %1125 = vmatprep.subr.mxu0 0.0
    %1126 = vmatpush1.msra.mxu0 0.0
    %1127 = vmatprep.subr.mxu0 0.0
    %1128 = vmatpush1.msra.mxu0 0.0
    %1129 = vmatprep.subr.mxu0 0.0
    %1130 = vmatpush1.msra.mxu0 0.0
    %1131 = vmatprep.subr.mxu0 0.0
    %1132 = vmatpush1.msra.mxu0 0.0
    %1133 = vmatprep.subr.mxu0 0.0
    %1134 = vmatpush1.msra.mxu0 0.0
    %1135 = vmatprep.subr.mxu0 0.0
    %1136 = vmatpush1.msra.mxu0 0.0
    %1137 = vmatprep.subr.mxu0 0.0
    %1138 = vmatpush1.msra.mxu0 0.0
    %1139 = vmatprep.subr.mxu0 0.0
    %1140 = vmatpush1.msra.mxu0 0.0
    %1141 = vmatprep.subr.mxu0 0.0
    %1142 = vmatpush1.msra.mxu0 0.0
    %1143 = vmatprep.subr.mxu0 0.0
    %1144 = vmatpush1.msra.mxu0 0.0
    %1145 = vmatprep.subr.mxu0 0.0
    %1146 = vmatpush1.msra.mxu0 0.0
    %1147 = vmatprep.subr.mxu0 0.0
    %1148 = vmatpush1.msra.mxu0 0.0
    %1149 = vmatprep.subr.mxu0 0.0
    %1150 = vmatpush1.msra.mxu0 0.0
    %1151 = vmatprep.subr.mxu0 0.0
    %1152 = vmatpush1.msra.mxu0 0.0
    %1153 = vmatprep.subr.mxu0 0.0
    %1154 = vmatpush1.msra.mxu0 0.0
    %1155 = vmatprep.subr.mxu0 0.0
    %1156 = vmatpush1.msra.mxu0 0.0
    %1157 = vmatprep.mubr.f32.mxu0 0.0
    %1158 = vmatmul.mubr.f32.gmra.mrb[0].mxu0 %v1085
    %v1159 = vpop.f32.mrb[0].mxu0
    %v1160 = vadd.f32 %v445, %v1159
    %v1161 = vpop.f32.mrb[0].mxu0
    %1162 = vmatprep.mubr.f32.mxu0 0.0
    %1163 = vmatmul.mubr.f32.gmra.mrb[0].mxu0 %v1087
    %v1164 = vpop.f32.mrb[0].mxu0
    %v1165 = vadd.f32 %v445, %v1164
    %v1166 = vpop.f32.mrb[0].mxu0
    %1167 = vmatprep.mubr.f32.mxu0 0.0
    %1168 = vmatmul.mubr.f32.gmra.mrb[0].mxu0 %v1089
    %v1169 = vpop.f32.mrb[0].mxu0
    %v1170 = vadd.f32 %v445, %v1169
    %v1171 = vpop.f32.mrb[0].mxu0
    %1172 = vmatprep.mubr.f32.mxu0 0.0
    %1173 = vmatmul.mubr.f32.gmra.mrb[0].mxu0 %v1091
    %v1174 = vpop.f32.mrb[0].mxu0
    %v1175 = vadd.f32 %v445, %v1174
    %v1176 = vpop.f32.mrb[0].mxu0
    %1177 = vdwg.mxu0
    %v1178 = vadd.f32 %v1069, %v1160
    %v1179 = vadd.f32 %v1070, %v1165
    %v1180 = vadd.f32 %v1071, %v1170
    %v1181 = vadd.f32 %v1072, %v1175
    %v1182 = vxor.u32 %v1178, 2147483648
    %v1183 = vxor.u32 %v1179, 2147483648
    %v1184 = vxor.u32 %v1180, 2147483648
    %v1185 = vxor.u32 %v1181, 2147483648
    %v1186 = vmul.f32 %v1182, 1.442695
    %v1187 = vpow.pop %v1186
    %v1188 = vmul.f32 %v1183, 1.442695
    %v1189 = vpow.pop %v1188
    %v1190 = vmul.f32 %v1184, 1.442695
    %v1191 = vpow.pop %v1190
    %v1192 = vmul.f32 %v1185, 1.442695
    %v1193 = vpow.pop %v1192
    %v1194 = vadd.f32 %v1187, 1.0
    %v1195 = vadd.f32 %v1189, 1.0
    %v1196 = vadd.f32 %v1191, 1.0
    %v1197 = vadd.f32 %v1193, 1.0
    %v1198 = vrcp.pop %v1194
    %v1199 = vmul.f32 1.0, %v1198
    %v1200 = vrcp.pop %v1195
    %v1201 = vmul.f32 1.0, %v1200
    %v1202 = vrcp.pop %v1196
    %v1203 = vmul.f32 1.0, %v1202
    %v1204 = vrcp.pop %v1197
    %v1205 = vmul.f32 1.0, %v1204
    %1210 = vrot.lane.b32.xlu0 %v1160, 64
    %v1211 = vpop.permute.xlu0 %1210
    %1212 = vrot.lane.b32.xlu0 %v1165, 64
    %v1213 = vpop.permute.xlu0 %1212
    %1214 = vrot.lane.b32.xlu0 %v1170, 64
    %v1215 = vpop.permute.xlu0 %1214
    %1216 = vrot.lane.b32.xlu0 %v1175, 64
    %v1217 = vpop.permute.xlu0 %1216
    %v1222 = vmul.f32 %v1199, %v1211
    %v1223 = vmul.f32 %v1201, %v1213
    %v1224 = vmul.f32 %v1203, %v1215
    %v1225 = vmul.f32 %v1205, %v1217
    %1230 = vrot.lane.b32.xlu0 %v1222, 64
    %v1231 = vpop.permute.xlu0 %1230
    %1232 = vrot.lane.b32.xlu0 %v1223, 64
    %v1233 = vpop.permute.xlu0 %1232
    %1234 = vrot.lane.b32.xlu0 %v1224, 64
    %v1235 = vpop.permute.xlu0 %1234
    %1236 = vrot.lane.b32.xlu0 %v1225, 64
    %v1237 = vpop.permute.xlu0 %1236
    %v1242 = vadd.f32 %v1069, %v1231
    %v1243 = vadd.f32 %v1070, %v1233
    %v1244 = vadd.f32 %v1071, %v1235
    %v1245 = vadd.f32 %v1072, %v1237
    %v1246 = vtanh.pop %v1242
    %v1247 = vtanh.pop %v1243
    %v1248 = vtanh.pop %v1244
    %v1249 = vtanh.pop %v1245
    %v1250 = vsub.f32 1.0, %v1199
    %v1251 = vsub.f32 1.0, %v1201
    %v1252 = vsub.f32 1.0, %v1203
    %v1253 = vsub.f32 1.0, %v1205
    %1258 = vrot.lane.b32.xlu0 %v1246, 96
    %v1259 = vpop.permute.xlu0 %1258
    %1260 = vrot.lane.b32.xlu0 %v1247, 96
    %v1261 = vpop.permute.xlu0 %1260
    %1262 = vrot.lane.b32.xlu0 %v1248, 96
    %v1263 = vpop.permute.xlu0 %1262
    %1264 = vrot.lane.b32.xlu0 %v1249, 96
    %v1265 = vpop.permute.xlu0 %1264
    %v1270 = vmul.f32 %v1250, %v1259
    %v1271 = vmul.f32 %v1251, %v1261
    %v1272 = vmul.f32 %v1252, %v1263
    %v1273 = vmul.f32 %v1253, %v1265
    %v1274 = vmul.f32 %v1199, %v1064
    %v1275 = vmul.f32 %v1201, %v1065
    %v1276 = vmul.f32 %v1203, %v1066
    %v1277 = vmul.f32 %v1205, %v1067
    %v1278 = vadd.f32 %v1270, %v1274
    %v1279 = vadd.f32 %v1271, %v1275
    %v1280 = vadd.f32 %v1272, %v1276
    %v1281 = vadd.f32 %v1273, %v1277
    %s1282 = scalar_lea.vmem [#allocation2], 128
    %v1283 = vld [vmem:[%s1282] sm:$0xff]
    %v1284 = vld [vmem:[%s1282 + $0x8] sm:$0xff]
    %v1285 = vld [vmem:[%s1282 + $0x10] sm:$0xff]
    %v1286 = vld [vmem:[%s1282 + $0x18] sm:$0xff]
    %1291 = vrot.lane.b32.xlu0 %v1278, 96
    %v1292 = vpop.permute.xlu0 %1291
    %1293 = vrot.lane.b32.xlu0 %v1279, 96
    %v1294 = vpop.permute.xlu0 %1293
    %1295 = vrot.lane.b32.xlu0 %v1280, 96
    %v1296 = vpop.permute.xlu0 %1295
    %1297 = vrot.lane.b32.xlu0 %v1281, 96
    %v1298 = vpop.permute.xlu0 %1297
    %v1299 = vsel %vm447, %v1292, 0
    %v1301 = vsel %vm447, %v1294, 0
    %v1303 = vsel %vm447, %v1296, 0
    %v1305 = vsel %vm447, %v1298, 0
    %1307 = vmatprep.subr.mxu0 0.0
    %1308 = vmatpush1.msra.mxu0 %v432
    %1309 = vmatprep.subr.mxu0 0.0
    %1310 = vmatpush1.msra.mxu0 %v433
    %1311 = vmatprep.subr.mxu0 0.0
    %1312 = vmatpush1.msra.mxu0 %v434
    %1313 = vmatprep.subr.mxu0 0.0
    %1314 = vmatpush1.msra.mxu0 %v435
    %1315 = vmatprep.subr.mxu0 0.0
    %1316 = vmatpush1.msra.mxu0 0.0
    %1317 = vmatprep.subr.mxu0 0.0
    %1318 = vmatpush1.msra.mxu0 0.0
    %1319 = vmatprep.subr.mxu0 0.0
    %1320 = vmatpush1.msra.mxu0 0.0
    %1321 = vmatprep.subr.mxu0 0.0
    %1322 = vmatpush1.msra.mxu0 0.0
    %1323 = vmatprep.subr.mxu0 0.0
    %1324 = vmatpush1.msra.mxu0 0.0
    %1325 = vmatprep.subr.mxu0 0.0
    %1326 = vmatpush1.msra.mxu0 0.0
    %1327 = vmatprep.subr.mxu0 0.0
    %1328 = vmatpush1.msra.mxu0 0.0
    %1329 = vmatprep.subr.mxu0 0.0
    %1330 = vmatpush1.msra.mxu0 0.0
    %1331 = vmatprep.subr.mxu0 0.0
    %1332 = vmatpush1.msra.mxu0 0.0
    %1333 = vmatprep.subr.mxu0 0.0
    %1334 = vmatpush1.msra.mxu0 0.0
    %1335 = vmatprep.subr.mxu0 0.0
    %1336 = vmatpush1.msra.mxu0 0.0
    %1337 = vmatprep.subr.mxu0 0.0
    %1338 = vmatpush1.msra.mxu0 0.0
    %1339 = vmatprep.subr.mxu0 0.0
    %1340 = vmatpush1.msra.mxu0 0.0
    %1341 = vmatprep.subr.mxu0 0.0
    %1342 = vmatpush1.msra.mxu0 0.0
    %1343 = vmatprep.subr.mxu0 0.0
    %1344 = vmatpush1.msra.mxu0 0.0
    %1345 = vmatprep.subr.mxu0 0.0
    %1346 = vmatpush1.msra.mxu0 0.0
    %1347 = vmatprep.subr.mxu0 0.0
    %1348 = vmatpush1.msra.mxu0 0.0
    %1349 = vmatprep.subr.mxu0 0.0
    %1350 = vmatpush1.msra.mxu0 0.0
    %1351 = vmatprep.subr.mxu0 0.0
    %1352 = vmatpush1.msra.mxu0 0.0
    %1353 = vmatprep.subr.mxu0 0.0
    %1354 = vmatpush1.msra.mxu0 0.0
    %1355 = vmatprep.subr.mxu0 0.0
    %1356 = vmatpush1.msra.mxu0 0.0
    %1357 = vmatprep.subr.mxu0 0.0
    %1358 = vmatpush1.msra.mxu0 0.0
    %1359 = vmatprep.subr.mxu0 0.0
    %1360 = vmatpush1.msra.mxu0 0.0
    %1361 = vmatprep.subr.mxu0 0.0
    %1362 = vmatpush1.msra.mxu0 0.0
    %1363 = vmatprep.subr.mxu0 0.0
    %1364 = vmatpush1.msra.mxu0 0.0
    %1365 = vmatprep.subr.mxu0 0.0
    %1366 = vmatpush1.msra.mxu0 0.0
    %1367 = vmatprep.subr.mxu0 0.0
    %1368 = vmatpush1.msra.mxu0 0.0
    %1369 = vmatprep.subr.mxu0 0.0
    %1370 = vmatpush1.msra.mxu0 0.0
    %1371 = vmatprep.mubr.f32.mxu0 0.0
    %1372 = vmatmul.mubr.f32.gmra.mrb[0].mxu0 %v1299
    %v1373 = vpop.f32.mrb[0].mxu0
    %v1374 = vadd.f32 %v445, %v1373
    %v1375 = vpop.f32.mrb[0].mxu0
    %1376 = vmatprep.mubr.f32.mxu0 0.0
    %1377 = vmatmul.mubr.f32.gmra.mrb[0].mxu0 %v1301
    %v1378 = vpop.f32.mrb[0].mxu0
    %v1379 = vadd.f32 %v445, %v1378
    %v1380 = vpop.f32.mrb[0].mxu0
    %1381 = vmatprep.mubr.f32.mxu0 0.0
    %1382 = vmatmul.mubr.f32.gmra.mrb[0].mxu0 %v1303
    %v1383 = vpop.f32.mrb[0].mxu0
    %v1384 = vadd.f32 %v445, %v1383
    %v1385 = vpop.f32.mrb[0].mxu0
    %1386 = vmatprep.mubr.f32.mxu0 0.0
    %1387 = vmatmul.mubr.f32.gmra.mrb[0].mxu0 %v1305
    %v1388 = vpop.f32.mrb[0].mxu0
    %v1389 = vadd.f32 %v445, %v1388
    %v1390 = vpop.f32.mrb[0].mxu0
    %1391 = vdwg.mxu0
    %v1392 = vadd.f32 %v1283, %v1374
    %v1393 = vadd.f32 %v1284, %v1379
    %v1394 = vadd.f32 %v1285, %v1384
    %v1395 = vadd.f32 %v1286, %v1389
    %v1396 = vxor.u32 %v1392, 2147483648
    %v1397 = vxor.u32 %v1393, 2147483648
    %v1398 = vxor.u32 %v1394, 2147483648
    %v1399 = vxor.u32 %v1395, 2147483648
    %v1400 = vmul.f32 %v1396, 1.442695
    %v1401 = vpow.pop %v1400
    %v1402 = vmul.f32 %v1397, 1.442695
    %v1403 = vpow.pop %v1402
    %v1404 = vmul.f32 %v1398, 1.442695
    %v1405 = vpow.pop %v1404
    %v1406 = vmul.f32 %v1399, 1.442695
    %v1407 = vpow.pop %v1406
    %v1408 = vadd.f32 %v1401, 1.0
    %v1409 = vadd.f32 %v1403, 1.0
    %v1410 = vadd.f32 %v1405, 1.0
    %v1411 = vadd.f32 %v1407, 1.0
    %v1412 = vrcp.pop %v1408
    %v1413 = vmul.f32 1.0, %v1412
    %v1414 = vrcp.pop %v1409
    %v1415 = vmul.f32 1.0, %v1414
    %v1416 = vrcp.pop %v1410
    %v1417 = vmul.f32 1.0, %v1416
    %v1418 = vrcp.pop %v1411
    %v1419 = vmul.f32 1.0, %v1418
    %1424 = vrot.lane.b32.xlu0 %v1374, 64
    %v1425 = vpop.permute.xlu0 %1424
    %1426 = vrot.lane.b32.xlu0 %v1379, 64
    %v1427 = vpop.permute.xlu0 %1426
    %1428 = vrot.lane.b32.xlu0 %v1384, 64
    %v1429 = vpop.permute.xlu0 %1428
    %1430 = vrot.lane.b32.xlu0 %v1389, 64
    %v1431 = vpop.permute.xlu0 %1430
    %v1436 = vmul.f32 %v1413, %v1425
    %v1437 = vmul.f32 %v1415, %v1427
    %v1438 = vmul.f32 %v1417, %v1429
    %v1439 = vmul.f32 %v1419, %v1431
    %1444 = vrot.lane.b32.xlu0 %v1436, 64
    %v1445 = vpop.permute.xlu0 %1444
    %1446 = vrot.lane.b32.xlu0 %v1437, 64
    %v1447 = vpop.permute.xlu0 %1446
    %1448 = vrot.lane.b32.xlu0 %v1438, 64
    %v1449 = vpop.permute.xlu0 %1448
    %1450 = vrot.lane.b32.xlu0 %v1439, 64
    %v1451 = vpop.permute.xlu0 %1450
    %v1456 = vadd.f32 %v1283, %v1445
    %v1457 = vadd.f32 %v1284, %v1447
    %v1458 = vadd.f32 %v1285, %v1449
    %v1459 = vadd.f32 %v1286, %v1451
    %v1460 = vtanh.pop %v1456
    %v1461 = vtanh.pop %v1457
    %v1462 = vtanh.pop %v1458
    %v1463 = vtanh.pop %v1459
    %v1464 = vsub.f32 1.0, %v1413
    %v1465 = vsub.f32 1.0, %v1415
    %v1466 = vsub.f32 1.0, %v1417
    %v1467 = vsub.f32 1.0, %v1419
    %1472 = vrot.lane.b32.xlu0 %v1460, 96
    %v1473 = vpop.permute.xlu0 %1472
    %1474 = vrot.lane.b32.xlu0 %v1461, 96
    %v1475 = vpop.permute.xlu0 %1474
    %1476 = vrot.lane.b32.xlu0 %v1462, 96
    %v1477 = vpop.permute.xlu0 %1476
    %1478 = vrot.lane.b32.xlu0 %v1463, 96
    %v1479 = vpop.permute.xlu0 %1478
    %v1484 = vmul.f32 %v1464, %v1473
    %v1485 = vmul.f32 %v1465, %v1475
    %v1486 = vmul.f32 %v1466, %v1477
    %v1487 = vmul.f32 %v1467, %v1479
    %v1488 = vmul.f32 %v1413, %v1278
    %v1489 = vmul.f32 %v1415, %v1279
    %v1490 = vmul.f32 %v1417, %v1280
    %v1491 = vmul.f32 %v1419, %v1281
    %v1492 = vadd.f32 %v1484, %v1488
    %v1493 = vadd.f32 %v1485, %v1489
    %v1494 = vadd.f32 %v1486, %v1490
    %v1495 = vadd.f32 %v1487, %v1491
    %s1496 = scalar_lea.vmem [#allocation2], 160
    %v1497 = vld [vmem:[%s1496] sm:$0xff]
    %v1498 = vld [vmem:[%s1496 + $0x8] sm:$0xff]
    %v1499 = vld [vmem:[%s1496 + $0x10] sm:$0xff]
    %v1500 = vld [vmem:[%s1496 + $0x18] sm:$0xff]
    %1505 = vrot.lane.b32.xlu0 %v1492, 96
    %v1506 = vpop.permute.xlu0 %1505
    %1507 = vrot.lane.b32.xlu0 %v1493, 96
    %v1508 = vpop.permute.xlu0 %1507
    %1509 = vrot.lane.b32.xlu0 %v1494, 96
    %v1510 = vpop.permute.xlu0 %1509
    %1511 = vrot.lane.b32.xlu0 %v1495, 96
    %v1512 = vpop.permute.xlu0 %1511
    %v1513 = vsel %vm447, %v1506, 0
    %v1515 = vsel %vm447, %v1508, 0
    %v1517 = vsel %vm447, %v1510, 0
    %v1519 = vsel %vm447, %v1512, 0
    %1521 = vmatprep.subr.mxu0 0.0
    %1522 = vmatpush1.msra.mxu0 %v432
    %1523 = vmatprep.subr.mxu0 0.0
    %1524 = vmatpush1.msra.mxu0 %v433
    %1525 = vmatprep.subr.mxu0 0.0
    %1526 = vmatpush1.msra.mxu0 %v434
    %1527 = vmatprep.subr.mxu0 0.0
    %1528 = vmatpush1.msra.mxu0 %v435
    %1529 = vmatprep.subr.mxu0 0.0
    %1530 = vmatpush1.msra.mxu0 0.0
    %1531 = vmatprep.subr.mxu0 0.0
    %1532 = vmatpush1.msra.mxu0 0.0
    %1533 = vmatprep.subr.mxu0 0.0
    %1534 = vmatpush1.msra.mxu0 0.0
    %1535 = vmatprep.subr.mxu0 0.0
    %1536 = vmatpush1.msra.mxu0 0.0
    %1537 = vmatprep.subr.mxu0 0.0
    %1538 = vmatpush1.msra.mxu0 0.0
    %1539 = vmatprep.subr.mxu0 0.0
    %1540 = vmatpush1.msra.mxu0 0.0
    %1541 = vmatprep.subr.mxu0 0.0
    %1542 = vmatpush1.msra.mxu0 0.0
    %1543 = vmatprep.subr.mxu0 0.0
    %1544 = vmatpush1.msra.mxu0 0.0
    %1545 = vmatprep.subr.mxu0 0.0
    %1546 = vmatpush1.msra.mxu0 0.0
    %1547 = vmatprep.subr.mxu0 0.0
    %1548 = vmatpush1.msra.mxu0 0.0
    %1549 = vmatprep.subr.mxu0 0.0
    %1550 = vmatpush1.msra.mxu0 0.0
    %1551 = vmatprep.subr.mxu0 0.0
    %1552 = vmatpush1.msra.mxu0 0.0
    %1553 = vmatprep.subr.mxu0 0.0
    %1554 = vmatpush1.msra.mxu0 0.0
    %1555 = vmatprep.subr.mxu0 0.0
    %1556 = vmatpush1.msra.mxu0 0.0
    %1557 = vmatprep.subr.mxu0 0.0
    %1558 = vmatpush1.msra.mxu0 0.0
    %1559 = vmatprep.subr.mxu0 0.0
    %1560 = vmatpush1.msra.mxu0 0.0
    %1561 = vmatprep.subr.mxu0 0.0
    %1562 = vmatpush1.msra.mxu0 0.0
    %1563 = vmatprep.subr.mxu0 0.0
    %1564 = vmatpush1.msra.mxu0 0.0
    %1565 = vmatprep.subr.mxu0 0.0
    %1566 = vmatpush1.msra.mxu0 0.0
    %1567 = vmatprep.subr.mxu0 0.0
    %1568 = vmatpush1.msra.mxu0 0.0
    %1569 = vmatprep.subr.mxu0 0.0
    %1570 = vmatpush1.msra.mxu0 0.0
    %1571 = vmatprep.subr.mxu0 0.0
    %1572 = vmatpush1.msra.mxu0 0.0
    %1573 = vmatprep.subr.mxu0 0.0
    %1574 = vmatpush1.msra.mxu0 0.0
    %1575 = vmatprep.subr.mxu0 0.0
    %1576 = vmatpush1.msra.mxu0 0.0
    %1577 = vmatprep.subr.mxu0 0.0
    %1578 = vmatpush1.msra.mxu0 0.0
    %1579 = vmatprep.subr.mxu0 0.0
    %1580 = vmatpush1.msra.mxu0 0.0
    %1581 = vmatprep.subr.mxu0 0.0
    %1582 = vmatpush1.msra.mxu0 0.0
    %1583 = vmatprep.subr.mxu0 0.0
    %1584 = vmatpush1.msra.mxu0 0.0
    %1585 = vmatprep.mubr.f32.mxu0 0.0
    %1586 = vmatmul.mubr.f32.gmra.mrb[0].mxu0 %v1513
    %v1587 = vpop.f32.mrb[0].mxu0
    %v1588 = vadd.f32 %v445, %v1587
    %v1589 = vpop.f32.mrb[0].mxu0
    %1590 = vmatprep.mubr.f32.mxu0 0.0
    %1591 = vmatmul.mubr.f32.gmra.mrb[0].mxu0 %v1515
    %v1592 = vpop.f32.mrb[0].mxu0
    %v1593 = vadd.f32 %v445, %v1592
    %v1594 = vpop.f32.mrb[0].mxu0
    %1595 = vmatprep.mubr.f32.mxu0 0.0
    %1596 = vmatmul.mubr.f32.gmra.mrb[0].mxu0 %v1517
    %v1597 = vpop.f32.mrb[0].mxu0
    %v1598 = vadd.f32 %v445, %v1597
    %v1599 = vpop.f32.mrb[0].mxu0
    %1600 = vmatprep.mubr.f32.mxu0 0.0
    %1601 = vmatmul.mubr.f32.gmra.mrb[0].mxu0 %v1519
    %v1602 = vpop.f32.mrb[0].mxu0
    %v1603 = vadd.f32 %v445, %v1602
    %v1604 = vpop.f32.mrb[0].mxu0
    %1605 = vdwg.mxu0
    %v1606 = vadd.f32 %v1497, %v1588
    %v1607 = vadd.f32 %v1498, %v1593
    %v1608 = vadd.f32 %v1499, %v1598
    %v1609 = vadd.f32 %v1500, %v1603
    %v1610 = vxor.u32 %v1606, 2147483648
    %v1611 = vxor.u32 %v1607, 2147483648
    %v1612 = vxor.u32 %v1608, 2147483648
    %v1613 = vxor.u32 %v1609, 2147483648
    %v1614 = vmul.f32 %v1610, 1.442695
    %v1615 = vpow.pop %v1614
    %v1616 = vmul.f32 %v1611, 1.442695
    %v1617 = vpow.pop %v1616
    %v1618 = vmul.f32 %v1612, 1.442695
    %v1619 = vpow.pop %v1618
    %v1620 = vmul.f32 %v1613, 1.442695
    %v1621 = vpow.pop %v1620
    %v1622 = vadd.f32 %v1615, 1.0
    %v1623 = vadd.f32 %v1617, 1.0
    %v1624 = vadd.f32 %v1619, 1.0
    %v1625 = vadd.f32 %v1621, 1.0
    %v1626 = vrcp.pop %v1622
    %v1627 = vmul.f32 1.0, %v1626
    %v1628 = vrcp.pop %v1623
    %v1629 = vmul.f32 1.0, %v1628
    %v1630 = vrcp.pop %v1624
    %v1631 = vmul.f32 1.0, %v1630
    %v1632 = vrcp.pop %v1625
    %v1633 = vmul.f32 1.0, %v1632
    %1638 = vrot.lane.b32.xlu0 %v1588, 64
    %v1639 = vpop.permute.xlu0 %1638
    %1640 = vrot.lane.b32.xlu0 %v1593, 64
    %v1641 = vpop.permute.xlu0 %1640
    %1642 = vrot.lane.b32.xlu0 %v1598, 64
    %v1643 = vpop.permute.xlu0 %1642
    %1644 = vrot.lane.b32.xlu0 %v1603, 64
    %v1645 = vpop.permute.xlu0 %1644
    %v1650 = vmul.f32 %v1627, %v1639
    %v1651 = vmul.f32 %v1629, %v1641
    %v1652 = vmul.f32 %v1631, %v1643
    %v1653 = vmul.f32 %v1633, %v1645
    %1658 = vrot.lane.b32.xlu0 %v1650, 64
    %v1659 = vpop.permute.xlu0 %1658
    %1660 = vrot.lane.b32.xlu0 %v1651, 64
    %v1661 = vpop.permute.xlu0 %1660
    %1662 = vrot.lane.b32.xlu0 %v1652, 64
    %v1663 = vpop.permute.xlu0 %1662
    %1664 = vrot.lane.b32.xlu0 %v1653, 64
    %v1665 = vpop.permute.xlu0 %1664
    %v1670 = vadd.f32 %v1497, %v1659
    %v1671 = vadd.f32 %v1498, %v1661
    %v1672 = vadd.f32 %v1499, %v1663
    %v1673 = vadd.f32 %v1500, %v1665
    %v1674 = vtanh.pop %v1670
    %v1675 = vtanh.pop %v1671
    %v1676 = vtanh.pop %v1672
    %v1677 = vtanh.pop %v1673
    %v1678 = vsub.f32 1.0, %v1627
    %v1679 = vsub.f32 1.0, %v1629
    %v1680 = vsub.f32 1.0, %v1631
    %v1681 = vsub.f32 1.0, %v1633
    %1686 = vrot.lane.b32.xlu0 %v1674, 96
    %v1687 = vpop.permute.xlu0 %1686
    %1688 = vrot.lane.b32.xlu0 %v1675, 96
    %v1689 = vpop.permute.xlu0 %1688
    %1690 = vrot.lane.b32.xlu0 %v1676, 96
    %v1691 = vpop.permute.xlu0 %1690
    %1692 = vrot.lane.b32.xlu0 %v1677, 96
    %v1693 = vpop.permute.xlu0 %1692
    %v1698 = vmul.f32 %v1678, %v1687
    %v1699 = vmul.f32 %v1679, %v1689
    %v1700 = vmul.f32 %v1680, %v1691
    %v1701 = vmul.f32 %v1681, %v1693
    %v1702 = vmul.f32 %v1627, %v1492
    %v1703 = vmul.f32 %v1629, %v1493
    %v1704 = vmul.f32 %v1631, %v1494
    %v1705 = vmul.f32 %v1633, %v1495
    %v1706 = vadd.f32 %v1698, %v1702
    %v1707 = vadd.f32 %v1699, %v1703
    %v1708 = vadd.f32 %v1700, %v1704
    %v1709 = vadd.f32 %v1701, %v1705
    %s1710 = scalar_lea.vmem [#allocation2], 192
    %v1711 = vld [vmem:[%s1710] sm:$0xff]
    %v1712 = vld [vmem:[%s1710 + $0x8] sm:$0xff]
    %v1713 = vld [vmem:[%s1710 + $0x10] sm:$0xff]
    %v1714 = vld [vmem:[%s1710 + $0x18] sm:$0xff]
    %1719 = vrot.lane.b32.xlu0 %v1706, 96
    %v1720 = vpop.permute.xlu0 %1719
    %1721 = vrot.lane.b32.xlu0 %v1707, 96
    %v1722 = vpop.permute.xlu0 %1721
    %1723 = vrot.lane.b32.xlu0 %v1708, 96
    %v1724 = vpop.permute.xlu0 %1723
    %1725 = vrot.lane.b32.xlu0 %v1709, 96
    %v1726 = vpop.permute.xlu0 %1725
    %v1727 = vsel %vm447, %v1720, 0
    %v1729 = vsel %vm447, %v1722, 0
    %v1731 = vsel %vm447, %v1724, 0
    %v1733 = vsel %vm447, %v1726, 0
    %1735 = vmatprep.subr.mxu0 0.0
    %1736 = vmatpush1.msra.mxu0 %v432
    %1737 = vmatprep.subr.mxu0 0.0
    %1738 = vmatpush1.msra.mxu0 %v433
    %1739 = vmatprep.subr.mxu0 0.0
    %1740 = vmatpush1.msra.mxu0 %v434
    %1741 = vmatprep.subr.mxu0 0.0
    %1742 = vmatpush1.msra.mxu0 %v435
    %1743 = vmatprep.subr.mxu0 0.0
    %1744 = vmatpush1.msra.mxu0 0.0
    %1745 = vmatprep.subr.mxu0 0.0
    %1746 = vmatpush1.msra.mxu0 0.0
    %1747 = vmatprep.subr.mxu0 0.0
    %1748 = vmatpush1.msra.mxu0 0.0
    %1749 = vmatprep.subr.mxu0 0.0
    %1750 = vmatpush1.msra.mxu0 0.0
    %1751 = vmatprep.subr.mxu0 0.0
    %1752 = vmatpush1.msra.mxu0 0.0
    %1753 = vmatprep.subr.mxu0 0.0
    %1754 = vmatpush1.msra.mxu0 0.0
    %1755 = vmatprep.subr.mxu0 0.0
    %1756 = vmatpush1.msra.mxu0 0.0
    %1757 = vmatprep.subr.mxu0 0.0
    %1758 = vmatpush1.msra.mxu0 0.0
    %1759 = vmatprep.subr.mxu0 0.0
    %1760 = vmatpush1.msra.mxu0 0.0
    %1761 = vmatprep.subr.mxu0 0.0
    %1762 = vmatpush1.msra.mxu0 0.0
    %1763 = vmatprep.subr.mxu0 0.0
    %1764 = vmatpush1.msra.mxu0 0.0
    %1765 = vmatprep.subr.mxu0 0.0
    %1766 = vmatpush1.msra.mxu0 0.0
    %1767 = vmatprep.subr.mxu0 0.0
    %1768 = vmatpush1.msra.mxu0 0.0
    %1769 = vmatprep.subr.mxu0 0.0
    %1770 = vmatpush1.msra.mxu0 0.0
    %1771 = vmatprep.subr.mxu0 0.0
    %1772 = vmatpush1.msra.mxu0 0.0
    %1773 = vmatprep.subr.mxu0 0.0
    %1774 = vmatpush1.msra.mxu0 0.0
    %1775 = vmatprep.subr.mxu0 0.0
    %1776 = vmatpush1.msra.mxu0 0.0
    %1777 = vmatprep.subr.mxu0 0.0
    %1778 = vmatpush1.msra.mxu0 0.0
    %1779 = vmatprep.subr.mxu0 0.0
    %1780 = vmatpush1.msra.mxu0 0.0
    %1781 = vmatprep.subr.mxu0 0.0
    %1782 = vmatpush1.msra.mxu0 0.0
    %1783 = vmatprep.subr.mxu0 0.0
    %1784 = vmatpush1.msra.mxu0 0.0
    %1785 = vmatprep.subr.mxu0 0.0
    %1786 = vmatpush1.msra.mxu0 0.0
    %1787 = vmatprep.subr.mxu0 0.0
    %1788 = vmatpush1.msra.mxu0 0.0
    %1789 = vmatprep.subr.mxu0 0.0
    %1790 = vmatpush1.msra.mxu0 0.0
    %1791 = vmatprep.subr.mxu0 0.0
    %1792 = vmatpush1.msra.mxu0 0.0
    %1793 = vmatprep.subr.mxu0 0.0
    %1794 = vmatpush1.msra.mxu0 0.0
    %1795 = vmatprep.subr.mxu0 0.0
    %1796 = vmatpush1.msra.mxu0 0.0
    %1797 = vmatprep.subr.mxu0 0.0
    %1798 = vmatpush1.msra.mxu0 0.0
    %1799 = vmatprep.mubr.f32.mxu0 0.0
    %1800 = vmatmul.mubr.f32.gmra.mrb[0].mxu0 %v1727
    %v1801 = vpop.f32.mrb[0].mxu0
    %v1802 = vadd.f32 %v445, %v1801
    %v1803 = vpop.f32.mrb[0].mxu0
    %1804 = vmatprep.mubr.f32.mxu0 0.0
    %1805 = vmatmul.mubr.f32.gmra.mrb[0].mxu0 %v1729
    %v1806 = vpop.f32.mrb[0].mxu0
    %v1807 = vadd.f32 %v445, %v1806
    %v1808 = vpop.f32.mrb[0].mxu0
    %1809 = vmatprep.mubr.f32.mxu0 0.0
    %1810 = vmatmul.mubr.f32.gmra.mrb[0].mxu0 %v1731
    %v1811 = vpop.f32.mrb[0].mxu0
    %v1812 = vadd.f32 %v445, %v1811
    %v1813 = vpop.f32.mrb[0].mxu0
    %1814 = vmatprep.mubr.f32.mxu0 0.0
    %1815 = vmatmul.mubr.f32.gmra.mrb[0].mxu0 %v1733
    %v1816 = vpop.f32.mrb[0].mxu0
    %v1817 = vadd.f32 %v445, %v1816
    %v1818 = vpop.f32.mrb[0].mxu0
    %1819 = vdwg.mxu0
    %v1820 = vadd.f32 %v1711, %v1802
    %v1821 = vadd.f32 %v1712, %v1807
    %v1822 = vadd.f32 %v1713, %v1812
    %v1823 = vadd.f32 %v1714, %v1817
    %v1824 = vxor.u32 %v1820, 2147483648
    %v1825 = vxor.u32 %v1821, 2147483648
    %v1826 = vxor.u32 %v1822, 2147483648
    %v1827 = vxor.u32 %v1823, 2147483648
    %v1828 = vmul.f32 %v1824, 1.442695
    %v1829 = vpow.pop %v1828
    %v1830 = vmul.f32 %v1825, 1.442695
    %v1831 = vpow.pop %v1830
    %v1832 = vmul.f32 %v1826, 1.442695
    %v1833 = vpow.pop %v1832
    %v1834 = vmul.f32 %v1827, 1.442695
    %v1835 = vpow.pop %v1834
    %v1836 = vadd.f32 %v1829, 1.0
    %v1837 = vadd.f32 %v1831, 1.0
    %v1838 = vadd.f32 %v1833, 1.0
    %v1839 = vadd.f32 %v1835, 1.0
    %v1840 = vrcp.pop %v1836
    %v1841 = vmul.f32 1.0, %v1840
    %v1842 = vrcp.pop %v1837
    %v1843 = vmul.f32 1.0, %v1842
    %v1844 = vrcp.pop %v1838
    %v1845 = vmul.f32 1.0, %v1844
    %v1846 = vrcp.pop %v1839
    %v1847 = vmul.f32 1.0, %v1846
    %1852 = vrot.lane.b32.xlu0 %v1802, 64
    %v1853 = vpop.permute.xlu0 %1852
    %1854 = vrot.lane.b32.xlu0 %v1807, 64
    %v1855 = vpop.permute.xlu0 %1854
    %1856 = vrot.lane.b32.xlu0 %v1812, 64
    %v1857 = vpop.permute.xlu0 %1856
    %1858 = vrot.lane.b32.xlu0 %v1817, 64
    %v1859 = vpop.permute.xlu0 %1858
    %v1864 = vmul.f32 %v1841, %v1853
    %v1865 = vmul.f32 %v1843, %v1855
    %v1866 = vmul.f32 %v1845, %v1857
    %v1867 = vmul.f32 %v1847, %v1859
    %1872 = vrot.lane.b32.xlu0 %v1864, 64
    %v1873 = vpop.permute.xlu0 %1872
    %1874 = vrot.lane.b32.xlu0 %v1865, 64
    %v1875 = vpop.permute.xlu0 %1874
    %1876 = vrot.lane.b32.xlu0 %v1866, 64
    %v1877 = vpop.permute.xlu0 %1876
    %1878 = vrot.lane.b32.xlu0 %v1867, 64
    %v1879 = vpop.permute.xlu0 %1878
    %v1884 = vadd.f32 %v1711, %v1873
    %v1885 = vadd.f32 %v1712, %v1875
    %v1886 = vadd.f32 %v1713, %v1877
    %v1887 = vadd.f32 %v1714, %v1879
    %v1888 = vtanh.pop %v1884
    %v1889 = vtanh.pop %v1885
    %v1890 = vtanh.pop %v1886
    %v1891 = vtanh.pop %v1887
    %v1892 = vsub.f32 1.0, %v1841
    %v1893 = vsub.f32 1.0, %v1843
    %v1894 = vsub.f32 1.0, %v1845
    %v1895 = vsub.f32 1.0, %v1847
    %1900 = vrot.lane.b32.xlu0 %v1888, 96
    %v1901 = vpop.permute.xlu0 %1900
    %1902 = vrot.lane.b32.xlu0 %v1889, 96
    %v1903 = vpop.permute.xlu0 %1902
    %1904 = vrot.lane.b32.xlu0 %v1890, 96
    %v1905 = vpop.permute.xlu0 %1904
    %1906 = vrot.lane.b32.xlu0 %v1891, 96
    %v1907 = vpop.permute.xlu0 %1906
    %v1912 = vmul.f32 %v1892, %v1901
    %v1913 = vmul.f32 %v1893, %v1903
    %v1914 = vmul.f32 %v1894, %v1905
    %v1915 = vmul.f32 %v1895, %v1907
    %v1916 = vmul.f32 %v1841, %v1706
    %v1917 = vmul.f32 %v1843, %v1707
    %v1918 = vmul.f32 %v1845, %v1708
    %v1919 = vmul.f32 %v1847, %v1709
    %v1920 = vadd.f32 %v1912, %v1916
    %v1921 = vadd.f32 %v1913, %v1917
    %v1922 = vadd.f32 %v1914, %v1918
    %v1923 = vadd.f32 %v1915, %v1919
    %s1924 = scalar_lea.vmem [#allocation2], 224
    %v1925 = vld [vmem:[%s1924] sm:$0xff]
    %v1926 = vld [vmem:[%s1924 + $0x8] sm:$0xff]
    %v1927 = vld [vmem:[%s1924 + $0x10] sm:$0xff]
    %v1928 = vld [vmem:[%s1924 + $0x18] sm:$0xff]
    %1933 = vrot.lane.b32.xlu0 %v1920, 96
    %v1934 = vpop.permute.xlu0 %1933
    %1935 = vrot.lane.b32.xlu0 %v1921, 96
    %v1936 = vpop.permute.xlu0 %1935
    %1937 = vrot.lane.b32.xlu0 %v1922, 96
    %v1938 = vpop.permute.xlu0 %1937
    %1939 = vrot.lane.b32.xlu0 %v1923, 96
    %v1940 = vpop.permute.xlu0 %1939
    %v1941 = vsel %vm447, %v1934, 0
    %v1943 = vsel %vm447, %v1936, 0
    %v1945 = vsel %vm447, %v1938, 0
    %v1947 = vsel %vm447, %v1940, 0
    %1949 = vmatprep.subr.mxu0 0.0
    %1950 = vmatpush1.msra.mxu0 %v432
    %1951 = vmatprep.subr.mxu0 0.0
    %1952 = vmatpush1.msra.mxu0 %v433
    %1953 = vmatprep.subr.mxu0 0.0
    %1954 = vmatpush1.msra.mxu0 %v434
    %1955 = vmatprep.subr.mxu0 0.0
    %1956 = vmatpush1.msra.mxu0 %v435
    %1957 = vmatprep.subr.mxu0 0.0
    %1958 = vmatpush1.msra.mxu0 0.0
    %1959 = vmatprep.subr.mxu0 0.0
    %1960 = vmatpush1.msra.mxu0 0.0
    %1961 = vmatprep.subr.mxu0 0.0
    %1962 = vmatpush1.msra.mxu0 0.0
    %1963 = vmatprep.subr.mxu0 0.0
    %1964 = vmatpush1.msra.mxu0 0.0
    %1965 = vmatprep.subr.mxu0 0.0
    %1966 = vmatpush1.msra.mxu0 0.0
    %1967 = vmatprep.subr.mxu0 0.0
    %1968 = vmatpush1.msra.mxu0 0.0
    %1969 = vmatprep.subr.mxu0 0.0
    %1970 = vmatpush1.msra.mxu0 0.0
    %1971 = vmatprep.subr.mxu0 0.0
    %1972 = vmatpush1.msra.mxu0 0.0
    %1973 = vmatprep.subr.mxu0 0.0
    %1974 = vmatpush1.msra.mxu0 0.0
    %1975 = vmatprep.subr.mxu0 0.0
    %1976 = vmatpush1.msra.mxu0 0.0
    %1977 = vmatprep.subr.mxu0 0.0
    %1978 = vmatpush1.msra.mxu0 0.0
    %1979 = vmatprep.subr.mxu0 0.0
    %1980 = vmatpush1.msra.mxu0 0.0
    %1981 = vmatprep.subr.mxu0 0.0
    %1982 = vmatpush1.msra.mxu0 0.0
    %1983 = vmatprep.subr.mxu0 0.0
    %1984 = vmatpush1.msra.mxu0 0.0
    %1985 = vmatprep.subr.mxu0 0.0
    %1986 = vmatpush1.msra.mxu0 0.0
    %1987 = vmatprep.subr.mxu0 0.0
    %1988 = vmatpush1.msra.mxu0 0.0
    %1989 = vmatprep.subr.mxu0 0.0
    %1990 = vmatpush1.msra.mxu0 0.0
    %1991 = vmatprep.subr.mxu0 0.0
    %1992 = vmatpush1.msra.mxu0 0.0
    %1993 = vmatprep.subr.mxu0 0.0
    %1994 = vmatpush1.msra.mxu0 0.0
    %1995 = vmatprep.subr.mxu0 0.0
    %1996 = vmatpush1.msra.mxu0 0.0
    %1997 = vmatprep.subr.mxu0 0.0
    %1998 = vmatpush1.msra.mxu0 0.0
    %1999 = vmatprep.subr.mxu0 0.0
    %2000 = vmatpush1.msra.mxu0 0.0
    %2001 = vmatprep.subr.mxu0 0.0
    %2002 = vmatpush1.msra.mxu0 0.0
    %2003 = vmatprep.subr.mxu0 0.0
    %2004 = vmatpush1.msra.mxu0 0.0
    %2005 = vmatprep.subr.mxu0 0.0
    %2006 = vmatpush1.msra.mxu0 0.0
    %2007 = vmatprep.subr.mxu0 0.0
    %2008 = vmatpush1.msra.mxu0 0.0
    %2009 = vmatprep.subr.mxu0 0.0
    %2010 = vmatpush1.msra.mxu0 0.0
    %2011 = vmatprep.subr.mxu0 0.0
    %2012 = vmatpush1.msra.mxu0 0.0
    %2013 = vmatprep.mubr.f32.mxu0 0.0
    %2014 = vmatmul.mubr.f32.gmra.mrb[0].mxu0 %v1941
    %v2015 = vpop.f32.mrb[0].mxu0
    %v2016 = vadd.f32 %v445, %v2015
    %v2017 = vpop.f32.mrb[0].mxu0
    %2018 = vmatprep.mubr.f32.mxu0 0.0
    %2019 = vmatmul.mubr.f32.gmra.mrb[0].mxu0 %v1943
    %v2020 = vpop.f32.mrb[0].mxu0
    %v2021 = vadd.f32 %v445, %v2020
    %v2022 = vpop.f32.mrb[0].mxu0
    %2023 = vmatprep.mubr.f32.mxu0 0.0
    %2024 = vmatmul.mubr.f32.gmra.mrb[0].mxu0 %v1945
    %v2025 = vpop.f32.mrb[0].mxu0
    %v2026 = vadd.f32 %v445, %v2025
    %v2027 = vpop.f32.mrb[0].mxu0
    %2028 = vmatprep.mubr.f32.mxu0 0.0
    %2029 = vmatmul.mubr.f32.gmra.mrb[0].mxu0 %v1947
    %v2030 = vpop.f32.mrb[0].mxu0
    %v2031 = vadd.f32 %v445, %v2030
    %v2032 = vpop.f32.mrb[0].mxu0
    %2033 = vdwg.mxu0
    %v2034 = vadd.f32 %v1925, %v2016
    %v2035 = vadd.f32 %v1926, %v2021
    %v2036 = vadd.f32 %v1927, %v2026
    %v2037 = vadd.f32 %v1928, %v2031
    %v2038 = vxor.u32 %v2034, 2147483648
    %v2039 = vxor.u32 %v2035, 2147483648
    %v2040 = vxor.u32 %v2036, 2147483648
    %v2041 = vxor.u32 %v2037, 2147483648
    %v2042 = vmul.f32 %v2038, 1.442695
    %v2043 = vpow.pop %v2042
    %v2044 = vmul.f32 %v2039, 1.442695
    %v2045 = vpow.pop %v2044
    %v2046 = vmul.f32 %v2040, 1.442695
    %v2047 = vpow.pop %v2046
    %v2048 = vmul.f32 %v2041, 1.442695
    %v2049 = vpow.pop %v2048
    %v2050 = vadd.f32 %v2043, 1.0
    %v2051 = vadd.f32 %v2045, 1.0
    %v2052 = vadd.f32 %v2047, 1.0
    %v2053 = vadd.f32 %v2049, 1.0
    %v2054 = vrcp.pop %v2050
    %v2055 = vmul.f32 1.0, %v2054
    %v2056 = vrcp.pop %v2051
    %v2057 = vmul.f32 1.0, %v2056
    %v2058 = vrcp.pop %v2052
    %v2059 = vmul.f32 1.0, %v2058
    %v2060 = vrcp.pop %v2053
    %v2061 = vmul.f32 1.0, %v2060
    %2066 = vrot.lane.b32.xlu0 %v2016, 64
    %v2067 = vpop.permute.xlu0 %2066
    %2068 = vrot.lane.b32.xlu0 %v2021, 64
    %v2069 = vpop.permute.xlu0 %2068
    %2070 = vrot.lane.b32.xlu0 %v2026, 64
    %v2071 = vpop.permute.xlu0 %2070
    %2072 = vrot.lane.b32.xlu0 %v2031, 64
    %v2073 = vpop.permute.xlu0 %2072
    %v2078 = vmul.f32 %v2055, %v2067
    %v2079 = vmul.f32 %v2057, %v2069
    %v2080 = vmul.f32 %v2059, %v2071
    %v2081 = vmul.f32 %v2061, %v2073
    %2086 = vrot.lane.b32.xlu0 %v2078, 64
    %v2087 = vpop.permute.xlu0 %2086
    %2088 = vrot.lane.b32.xlu0 %v2079, 64
    %v2089 = vpop.permute.xlu0 %2088
    %2090 = vrot.lane.b32.xlu0 %v2080, 64
    %v2091 = vpop.permute.xlu0 %2090
    %2092 = vrot.lane.b32.xlu0 %v2081, 64
    %v2093 = vpop.permute.xlu0 %2092
    %v2098 = vadd.f32 %v1925, %v2087
    %v2099 = vadd.f32 %v1926, %v2089
    %v2100 = vadd.f32 %v1927, %v2091
    %v2101 = vadd.f32 %v1928, %v2093
    %v2102 = vtanh.pop %v2098
    %v2103 = vtanh.pop %v2099
    %v2104 = vtanh.pop %v2100
    %v2105 = vtanh.pop %v2101
    %v2106 = vsub.f32 1.0, %v2055
    %v2107 = vsub.f32 1.0, %v2057
    %v2108 = vsub.f32 1.0, %v2059
    %v2109 = vsub.f32 1.0, %v2061
    %2114 = vrot.lane.b32.xlu0 %v2102, 96
    %v2115 = vpop.permute.xlu0 %2114
    %2116 = vrot.lane.b32.xlu0 %v2103, 96
    %v2117 = vpop.permute.xlu0 %2116
    %2118 = vrot.lane.b32.xlu0 %v2104, 96
    %v2119 = vpop.permute.xlu0 %2118
    %2120 = vrot.lane.b32.xlu0 %v2105, 96
    %v2121 = vpop.permute.xlu0 %2120
    %v2126 = vmul.f32 %v2106, %v2115
    %v2127 = vmul.f32 %v2107, %v2117
    %v2128 = vmul.f32 %v2108, %v2119
    %v2129 = vmul.f32 %v2109, %v2121
    %v2130 = vmul.f32 %v2055, %v1920
    %v2131 = vmul.f32 %v2057, %v1921
    %v2132 = vmul.f32 %v2059, %v1922
    %v2133 = vmul.f32 %v2061, %v1923
    %v2134 = vadd.f32 %v2126, %v2130
    %v2135 = vadd.f32 %v2127, %v2131
    %v2136 = vadd.f32 %v2128, %v2132
    %v2137 = vadd.f32 %v2129, %v2133
    %v2138 = vld [vmem:[%s5] sm:$0xff]
    %v2139 = vld [vmem:[%s5 + $0x8] sm:$0xff]
    %v2140 = vld [vmem:[%s5 + $0x10] sm:$0xff]
    %v2141 = vld [vmem:[%s5 + $0x18] sm:$0xff]
    %v2142 = vld [vmem:[%s6] sm:$0xff]
    %v2143 = vld [vmem:[%s6 + $0x8] sm:$0xff]
    %v2144 = vld [vmem:[%s6 + $0x10] sm:$0xff]
    %v2145 = vld [vmem:[%s6 + $0x18] sm:$0xff]
    %2150 = vrot.lane.b32.xlu0 %v2134, 96
    %v2151 = vpop.permute.xlu0 %2150
    %2152 = vrot.lane.b32.xlu0 %v2135, 96
    %v2153 = vpop.permute.xlu0 %2152
    %2154 = vrot.lane.b32.xlu0 %v2136, 96
    %v2155 = vpop.permute.xlu0 %2154
    %2156 = vrot.lane.b32.xlu0 %v2137, 96
    %v2157 = vpop.permute.xlu0 %2156
    %v2158 = vsel %vm447, %v2151, 0
    %v2160 = vsel %vm447, %v2153, 0
    %v2162 = vsel %vm447, %v2155, 0
    %v2164 = vsel %vm447, %v2157, 0
    %2166 = vmatprep.subr.mxu0 0.0
    %2167 = vmatpush1.msra.mxu0 %v2142
    %2168 = vmatprep.subr.mxu0 0.0
    %2169 = vmatpush1.msra.mxu0 %v2143
    %2170 = vmatprep.subr.mxu0 0.0
    %2171 = vmatpush1.msra.mxu0 %v2144
    %2172 = vmatprep.subr.mxu0 0.0
    %2173 = vmatpush1.msra.mxu0 %v2145
    %2174 = vmatprep.subr.mxu0 0.0
    %2175 = vmatpush1.msra.mxu0 0.0
    %2176 = vmatprep.subr.mxu0 0.0
    %2177 = vmatpush1.msra.mxu0 0.0
    %2178 = vmatprep.subr.mxu0 0.0
    %2179 = vmatpush1.msra.mxu0 0.0
    %2180 = vmatprep.subr.mxu0 0.0
    %2181 = vmatpush1.msra.mxu0 0.0
    %2182 = vmatprep.subr.mxu0 0.0
    %2183 = vmatpush1.msra.mxu0 0.0
    %2184 = vmatprep.subr.mxu0 0.0
    %2185 = vmatpush1.msra.mxu0 0.0
    %2186 = vmatprep.subr.mxu0 0.0
    %2187 = vmatpush1.msra.mxu0 0.0
    %2188 = vmatprep.subr.mxu0 0.0
    %2189 = vmatpush1.msra.mxu0 0.0
    %2190 = vmatprep.subr.mxu0 0.0
    %2191 = vmatpush1.msra.mxu0 0.0
    %2192 = vmatprep.subr.mxu0 0.0
    %2193 = vmatpush1.msra.mxu0 0.0
    %2194 = vmatprep.subr.mxu0 0.0
    %2195 = vmatpush1.msra.mxu0 0.0
    %2196 = vmatprep.subr.mxu0 0.0
    %2197 = vmatpush1.msra.mxu0 0.0
    %2198 = vmatprep.subr.mxu0 0.0
    %2199 = vmatpush1.msra.mxu0 0.0
    %2200 = vmatprep.subr.mxu0 0.0
    %2201 = vmatpush1.msra.mxu0 0.0
    %2202 = vmatprep.subr.mxu0 0.0
    %2203 = vmatpush1.msra.mxu0 0.0
    %2204 = vmatprep.subr.mxu0 0.0
    %2205 = vmatpush1.msra.mxu0 0.0
    %2206 = vmatprep.subr.mxu0 0.0
    %2207 = vmatpush1.msra.mxu0 0.0
    %2208 = vmatprep.subr.mxu0 0.0
    %2209 = vmatpush1.msra.mxu0 0.0
    %2210 = vmatprep.subr.mxu0 0.0
    %2211 = vmatpush1.msra.mxu0 0.0
    %2212 = vmatprep.subr.mxu0 0.0
    %2213 = vmatpush1.msra.mxu0 0.0
    %2214 = vmatprep.subr.mxu0 0.0
    %2215 = vmatpush1.msra.mxu0 0.0
    %2216 = vmatprep.subr.mxu0 0.0
    %2217 = vmatpush1.msra.mxu0 0.0
    %2218 = vmatprep.subr.mxu0 0.0
    %2219 = vmatpush1.msra.mxu0 0.0
    %2220 = vmatprep.subr.mxu0 0.0
    %2221 = vmatpush1.msra.mxu0 0.0
    %2222 = vmatprep.subr.mxu0 0.0
    %2223 = vmatpush1.msra.mxu0 0.0
    %2224 = vmatprep.subr.mxu0 0.0
    %2225 = vmatpush1.msra.mxu0 0.0
    %2226 = vmatprep.subr.mxu0 0.0
    %2227 = vmatpush1.msra.mxu0 0.0
    %2228 = vmatprep.subr.mxu0 0.0
    %2229 = vmatpush1.msra.mxu0 0.0
    %2230 = vmatprep.mubr.f32.mxu0 0.0
    %2231 = vmatmul.mubr.f32.gmra.mrb[0].mxu0 %v2158
    %v2232 = vpop.f32.mrb[0].mxu0
    %v2233 = vadd.f32 0.0, %v2232
    %v2234 = vpop.f32.mrb[0].mxu0
    %2235 = vmatprep.mubr.f32.mxu0 0.0
    %2236 = vmatmul.mubr.f32.gmra.mrb[0].mxu0 %v2160
    %v2237 = vpop.f32.mrb[0].mxu0
    %v2238 = vadd.f32 0.0, %v2237
    %v2239 = vpop.f32.mrb[0].mxu0
    %2240 = vmatprep.mubr.f32.mxu0 0.0
    %2241 = vmatmul.mubr.f32.gmra.mrb[0].mxu0 %v2162
    %v2242 = vpop.f32.mrb[0].mxu0
    %v2243 = vadd.f32 0.0, %v2242
    %v2244 = vpop.f32.mrb[0].mxu0
    %2245 = vmatprep.mubr.f32.mxu0 0.0
    %2246 = vmatmul.mubr.f32.gmra.mrb[0].mxu0 %v2164
    %v2247 = vpop.f32.mrb[0].mxu0
    %v2248 = vadd.f32 0.0, %v2247
    %v2249 = vpop.f32.mrb[0].mxu0
    %2250 = vdwg.mxu0
    %v2252 = vsel %vm447, %v2138, 0
    %v2255 = vsel %vm447, %v2139, 0
    %v2258 = vsel %vm447, %v2140, 0
    %v2261 = vsel %vm447, %v2141, 0
    %2263 = vmatprep.subr.mxu0 0.0
    %2264 = vmatpush1.msra.mxu0 %v2233
    %2265 = vmatprep.subr.mxu0 0.0
    %2266 = vmatpush1.msra.mxu0 %v2238
    %2267 = vmatprep.subr.mxu0 0.0
    %2268 = vmatpush1.msra.mxu0 %v2243
    %2269 = vmatprep.subr.mxu0 0.0
    %2270 = vmatpush1.msra.mxu0 %v2248
    %2271 = vmatprep.subr.mxu0 0.0
    %2272 = vmatpush1.msra.mxu0 0.0
    %2273 = vmatprep.subr.mxu0 0.0
    %2274 = vmatpush1.msra.mxu0 0.0
    %2275 = vmatprep.subr.mxu0 0.0
    %2276 = vmatpush1.msra.mxu0 0.0
    %2277 = vmatprep.subr.mxu0 0.0
    %2278 = vmatpush1.msra.mxu0 0.0
    %2279 = vmatprep.subr.mxu0 0.0
    %2280 = vmatpush1.msra.mxu0 0.0
    %2281 = vmatprep.subr.mxu0 0.0
    %2282 = vmatpush1.msra.mxu0 0.0
    %2283 = vmatprep.subr.mxu0 0.0
    %2284 = vmatpush1.msra.mxu0 0.0
    %2285 = vmatprep.subr.mxu0 0.0
    %2286 = vmatpush1.msra.mxu0 0.0
    %2287 = vmatprep.subr.mxu0 0.0
    %2288 = vmatpush1.msra.mxu0 0.0
    %2289 = vmatprep.subr.mxu0 0.0
    %2290 = vmatpush1.msra.mxu0 0.0
    %2291 = vmatprep.subr.mxu0 0.0
    %2292 = vmatpush1.msra.mxu0 0.0
    %2293 = vmatprep.subr.mxu0 0.0
    %2294 = vmatpush1.msra.mxu0 0.0
    %2295 = vmatprep.subr.mxu0 0.0
    %2296 = vmatpush1.msra.mxu0 0.0
    %2297 = vmatprep.subr.mxu0 0.0
    %2298 = vmatpush1.msra.mxu0 0.0
    %2299 = vmatprep.subr.mxu0 0.0
    %2300 = vmatpush1.msra.mxu0 0.0
    %2301 = vmatprep.subr.mxu0 0.0
    %2302 = vmatpush1.msra.mxu0 0.0
    %2303 = vmatprep.subr.mxu0 0.0
    %2304 = vmatpush1.msra.mxu0 0.0
    %2305 = vmatprep.subr.mxu0 0.0
    %2306 = vmatpush1.msra.mxu0 0.0
    %2307 = vmatprep.subr.mxu0 0.0
    %2308 = vmatpush1.msra.mxu0 0.0
    %2309 = vmatprep.subr.mxu0 0.0
    %2310 = vmatpush1.msra.mxu0 0.0
    %2311 = vmatprep.subr.mxu0 0.0
    %2312 = vmatpush1.msra.mxu0 0.0
    %2313 = vmatprep.subr.mxu0 0.0
    %2314 = vmatpush1.msra.mxu0 0.0
    %2315 = vmatprep.subr.mxu0 0.0
    %2316 = vmatpush1.msra.mxu0 0.0
    %2317 = vmatprep.subr.mxu0 0.0
    %2318 = vmatpush1.msra.mxu0 0.0
    %2319 = vmatprep.subr.mxu0 0.0
    %2320 = vmatpush1.msra.mxu0 0.0
    %2321 = vmatprep.subr.mxu0 0.0
    %2322 = vmatpush1.msra.mxu0 0.0
    %2323 = vmatprep.subr.mxu0 0.0
    %2324 = vmatpush1.msra.mxu0 0.0
    %2325 = vmatprep.subr.mxu0 0.0
    %2326 = vmatpush1.msra.mxu0 0.0
    %2327 = vmatprep.mubr.f32.mxu0 0.0
    %2328 = vmatmul.mubr.f32.gmra.mrb[0].mxu0 %v2252
    %v2329 = vpop.f32.mrb[0].mxu0
    %v2330 = vadd.f32 0.0, %v2329
    %v2331 = vpop.f32.mrb[0].mxu0
    %2332 = vmatprep.mubr.f32.mxu0 0.0
    %2333 = vmatmul.mubr.f32.gmra.mrb[0].mxu0 %v2255
    %v2334 = vpop.f32.mrb[0].mxu0
    %v2335 = vadd.f32 0.0, %v2334
    %v2336 = vpop.f32.mrb[0].mxu0
    %2337 = vmatprep.mubr.f32.mxu0 0.0
    %2338 = vmatmul.mubr.f32.gmra.mrb[0].mxu0 %v2258
    %v2339 = vpop.f32.mrb[0].mxu0
    %v2340 = vadd.f32 0.0, %v2339
    %v2341 = vpop.f32.mrb[0].mxu0
    %2342 = vmatprep.mubr.f32.mxu0 0.0
    %2343 = vmatmul.mubr.f32.gmra.mrb[0].mxu0 %v2261
    %v2344 = vpop.f32.mrb[0].mxu0
    %v2345 = vadd.f32 0.0, %v2344
    %v2346 = vpop.f32.mrb[0].mxu0
    %2347 = vdwg.mxu0
    %v2348 = vmax.f32 %v2330, 0.0
    %v2349 = vmax.f32 %v2335, 0.0
    %v2350 = vmax.f32 %v2340, 0.0
    %v2351 = vmax.f32 %v2345, 0.0
    %v2356 = vadd.f32 %v2348, %v2151
    %v2357 = vadd.f32 %v2349, %v2153
    %v2358 = vadd.f32 %v2350, %v2155
    %v2359 = vadd.f32 %v2351, %v2157
    %s2360 = scalar_lea.vmem %s6, 32
    %v2361 = vld [vmem:[%s2360] sm:$0xff]
    %v2362 = vld [vmem:[%s2360 + $0x8] sm:$0xff]
    %v2363 = vld [vmem:[%s2360 + $0x10] sm:$0xff]
    %v2364 = vld [vmem:[%s2360 + $0x18] sm:$0xff]
    %v2366 = vsel %vm447, %v2356, 0
    %v2369 = vsel %vm447, %v2357, 0
    %v2372 = vsel %vm447, %v2358, 0
    %v2375 = vsel %vm447, %v2359, 0
    %2377 = vmatprep.subr.mxu0 0.0
    %2378 = vmatpush1.msra.mxu0 %v2361
    %2379 = vmatprep.subr.mxu0 0.0
    %2380 = vmatpush1.msra.mxu0 %v2362
    %2381 = vmatprep.subr.mxu0 0.0
    %2382 = vmatpush1.msra.mxu0 %v2363
    %2383 = vmatprep.subr.mxu0 0.0
    %2384 = vmatpush1.msra.mxu0 %v2364
    %2385 = vmatprep.subr.mxu0 0.0
    %2386 = vmatpush1.msra.mxu0 0.0
    %2387 = vmatprep.subr.mxu0 0.0
    %2388 = vmatpush1.msra.mxu0 0.0
    %2389 = vmatprep.subr.mxu0 0.0
    %2390 = vmatpush1.msra.mxu0 0.0
    %2391 = vmatprep.subr.mxu0 0.0
    %2392 = vmatpush1.msra.mxu0 0.0
    %2393 = vmatprep.subr.mxu0 0.0
    %2394 = vmatpush1.msra.mxu0 0.0
    %2395 = vmatprep.subr.mxu0 0.0
    %2396 = vmatpush1.msra.mxu0 0.0
    %2397 = vmatprep.subr.mxu0 0.0
    %2398 = vmatpush1.msra.mxu0 0.0
    %2399 = vmatprep.subr.mxu0 0.0
    %2400 = vmatpush1.msra.mxu0 0.0
    %2401 = vmatprep.subr.mxu0 0.0
    %2402 = vmatpush1.msra.mxu0 0.0
    %2403 = vmatprep.subr.mxu0 0.0
    %2404 = vmatpush1.msra.mxu0 0.0
    %2405 = vmatprep.subr.mxu0 0.0
    %2406 = vmatpush1.msra.mxu0 0.0
    %2407 = vmatprep.subr.mxu0 0.0
    %2408 = vmatpush1.msra.mxu0 0.0
    %2409 = vmatprep.subr.mxu0 0.0
    %2410 = vmatpush1.msra.mxu0 0.0
    %2411 = vmatprep.subr.mxu0 0.0
    %2412 = vmatpush1.msra.mxu0 0.0
    %2413 = vmatprep.subr.mxu0 0.0
    %2414 = vmatpush1.msra.mxu0 0.0
    %2415 = vmatprep.subr.mxu0 0.0
    %2416 = vmatpush1.msra.mxu0 0.0
    %2417 = vmatprep.subr.mxu0 0.0
    %2418 = vmatpush1.msra.mxu0 0.0
    %2419 = vmatprep.subr.mxu0 0.0
    %2420 = vmatpush1.msra.mxu0 0.0
    %2421 = vmatprep.subr.mxu0 0.0
    %2422 = vmatpush1.msra.mxu0 0.0
    %2423 = vmatprep.subr.mxu0 0.0
    %2424 = vmatpush1.msra.mxu0 0.0
    %2425 = vmatprep.subr.mxu0 0.0
    %2426 = vmatpush1.msra.mxu0 0.0
    %2427 = vmatprep.subr.mxu0 0.0
    %2428 = vmatpush1.msra.mxu0 0.0
    %2429 = vmatprep.subr.mxu0 0.0
    %2430 = vmatpush1.msra.mxu0 0.0
    %2431 = vmatprep.subr.mxu0 0.0
    %2432 = vmatpush1.msra.mxu0 0.0
    %2433 = vmatprep.subr.mxu0 0.0
    %2434 = vmatpush1.msra.mxu0 0.0
    %2435 = vmatprep.subr.mxu0 0.0
    %2436 = vmatpush1.msra.mxu0 0.0
    %2437 = vmatprep.subr.mxu0 0.0
    %2438 = vmatpush1.msra.mxu0 0.0
    %2439 = vmatprep.subr.mxu0 0.0
    %2440 = vmatpush1.msra.mxu0 0.0
    %2441 = vmatprep.mubr.f32.mxu0 0.0
    %2442 = vmatmul.mubr.f32.gmra.mrb[0].mxu0 %v2366
    %v2443 = vpop.f32.mrb[0].mxu0
    %v2444 = vadd.f32 0.0, %v2443
    %v2445 = vpop.f32.mrb[0].mxu0
    %2446 = vmatprep.mubr.f32.mxu0 0.0
    %2447 = vmatmul.mubr.f32.gmra.mrb[0].mxu0 %v2369
    %v2448 = vpop.f32.mrb[0].mxu0
    %v2449 = vadd.f32 0.0, %v2448
    %v2450 = vpop.f32.mrb[0].mxu0
    %2451 = vmatprep.mubr.f32.mxu0 0.0
    %2452 = vmatmul.mubr.f32.gmra.mrb[0].mxu0 %v2372
    %v2453 = vpop.f32.mrb[0].mxu0
    %v2454 = vadd.f32 0.0, %v2453
    %v2455 = vpop.f32.mrb[0].mxu0
    %2456 = vmatprep.mubr.f32.mxu0 0.0
    %2457 = vmatmul.mubr.f32.gmra.mrb[0].mxu0 %v2375
    %v2458 = vpop.f32.mrb[0].mxu0
    %v2459 = vadd.f32 0.0, %v2458
    %v2460 = vpop.f32.mrb[0].mxu0
    %2461 = vdwg.mxu0
    %2462 = vmatprep.subr.mxu0 0.0
    %2463 = vmatpush1.msra.mxu0 %v2444
    %2464 = vmatprep.subr.mxu0 0.0
    %2465 = vmatpush1.msra.mxu0 %v2449
    %2466 = vmatprep.subr.mxu0 0.0
    %2467 = vmatpush1.msra.mxu0 %v2454
    %2468 = vmatprep.subr.mxu0 0.0
    %2469 = vmatpush1.msra.mxu0 %v2459
    %2470 = vmatprep.subr.mxu0 0.0
    %2471 = vmatpush1.msra.mxu0 0.0
    %2472 = vmatprep.subr.mxu0 0.0
    %2473 = vmatpush1.msra.mxu0 0.0
    %2474 = vmatprep.subr.mxu0 0.0
    %2475 = vmatpush1.msra.mxu0 0.0
    %2476 = vmatprep.subr.mxu0 0.0
    %2477 = vmatpush1.msra.mxu0 0.0
    %2478 = vmatprep.subr.mxu0 0.0
    %2479 = vmatpush1.msra.mxu0 0.0
    %2480 = vmatprep.subr.mxu0 0.0
    %2481 = vmatpush1.msra.mxu0 0.0
    %2482 = vmatprep.subr.mxu0 0.0
    %2483 = vmatpush1.msra.mxu0 0.0
    %2484 = vmatprep.subr.mxu0 0.0
    %2485 = vmatpush1.msra.mxu0 0.0
    %2486 = vmatprep.subr.mxu0 0.0
    %2487 = vmatpush1.msra.mxu0 0.0
    %2488 = vmatprep.subr.mxu0 0.0
    %2489 = vmatpush1.msra.mxu0 0.0
    %2490 = vmatprep.subr.mxu0 0.0
    %2491 = vmatpush1.msra.mxu0 0.0
    %2492 = vmatprep.subr.mxu0 0.0
    %2493 = vmatpush1.msra.mxu0 0.0
    %2494 = vmatprep.subr.mxu0 0.0
    %2495 = vmatpush1.msra.mxu0 0.0
    %2496 = vmatprep.subr.mxu0 0.0
    %2497 = vmatpush1.msra.mxu0 0.0
    %2498 = vmatprep.subr.mxu0 0.0
    %2499 = vmatpush1.msra.mxu0 0.0
    %2500 = vmatprep.subr.mxu0 0.0
    %2501 = vmatpush1.msra.mxu0 0.0
    %2502 = vmatprep.subr.mxu0 0.0
    %2503 = vmatpush1.msra.mxu0 0.0
    %2504 = vmatprep.subr.mxu0 0.0
    %2505 = vmatpush1.msra.mxu0 0.0
    %2506 = vmatprep.subr.mxu0 0.0
    %2507 = vmatpush1.msra.mxu0 0.0
    %2508 = vmatprep.subr.mxu0 0.0
    %2509 = vmatpush1.msra.mxu0 0.0
    %2510 = vmatprep.subr.mxu0 0.0
    %2511 = vmatpush1.msra.mxu0 0.0
    %2512 = vmatprep.subr.mxu0 0.0
    %2513 = vmatpush1.msra.mxu0 0.0
    %2514 = vmatprep.subr.mxu0 0.0
    %2515 = vmatpush1.msra.mxu0 0.0
    %2516 = vmatprep.subr.mxu0 0.0
    %2517 = vmatpush1.msra.mxu0 0.0
    %2518 = vmatprep.subr.mxu0 0.0
    %2519 = vmatpush1.msra.mxu0 0.0
    %2520 = vmatprep.subr.mxu0 0.0
    %2521 = vmatpush1.msra.mxu0 0.0
    %2522 = vmatprep.subr.mxu0 0.0
    %2523 = vmatpush1.msra.mxu0 0.0
    %2524 = vmatprep.subr.mxu0 0.0
    %2525 = vmatpush1.msra.mxu0 0.0
    %2526 = vmatprep.mubr.f32.mxu0 0.0
    %2527 = vmatmul.mubr.f32.gmra.mrb[0].mxu0 %v2252
    %v2528 = vpop.f32.mrb[0].mxu0
    %v2529 = vadd.f32 0.0, %v2528
    %v2530 = vpop.f32.mrb[0].mxu0
    %2531 = vmatprep.mubr.f32.mxu0 0.0
    %2532 = vmatmul.mubr.f32.gmra.mrb[0].mxu0 %v2255
    %v2533 = vpop.f32.mrb[0].mxu0
    %v2534 = vadd.f32 0.0, %v2533
    %v2535 = vpop.f32.mrb[0].mxu0
    %2536 = vmatprep.mubr.f32.mxu0 0.0
    %2537 = vmatmul.mubr.f32.gmra.mrb[0].mxu0 %v2258
    %v2538 = vpop.f32.mrb[0].mxu0
    %v2539 = vadd.f32 0.0, %v2538
    %v2540 = vpop.f32.mrb[0].mxu0
    %2541 = vmatprep.mubr.f32.mxu0 0.0
    %2542 = vmatmul.mubr.f32.gmra.mrb[0].mxu0 %v2261
    %v2543 = vpop.f32.mrb[0].mxu0
    %v2544 = vadd.f32 0.0, %v2543
    %v2545 = vpop.f32.mrb[0].mxu0
    %2546 = vdwg.mxu0
    %v2547 = vmax.f32 %v2529, 0.0
    %v2548 = vmax.f32 %v2534, 0.0
    %v2549 = vmax.f32 %v2539, 0.0
    %v2550 = vmax.f32 %v2544, 0.0
    %v2551 = vadd.f32 %v2547, %v2356
    %v2552 = vadd.f32 %v2548, %v2357
    %v2553 = vadd.f32 %v2549, %v2358
    %v2554 = vadd.f32 %v2550, %v2359
    %s2555 = scalar_lea.vmem %s6, 64
    %v2556 = vld [vmem:[%s2555] sm:$0xff]
    %v2557 = vld [vmem:[%s2555 + $0x8] sm:$0xff]
    %v2558 = vld [vmem:[%s2555 + $0x10] sm:$0xff]
    %v2559 = vld [vmem:[%s2555 + $0x18] sm:$0xff]
    %v2561 = vsel %vm447, %v2551, 0
    %v2564 = vsel %vm447, %v2552, 0
    %v2567 = vsel %vm447, %v2553, 0
    %v2570 = vsel %vm447, %v2554, 0
    %2572 = vmatprep.subr.mxu0 0.0
    %2573 = vmatpush1.msra.mxu0 %v2556
    %2574 = vmatprep.subr.mxu0 0.0
    %2575 = vmatpush1.msra.mxu0 %v2557
    %2576 = vmatprep.subr.mxu0 0.0
    %2577 = vmatpush1.msra.mxu0 %v2558
    %2578 = vmatprep.subr.mxu0 0.0
    %2579 = vmatpush1.msra.mxu0 %v2559
    %2580 = vmatprep.subr.mxu0 0.0
    %2581 = vmatpush1.msra.mxu0 0.0
    %2582 = vmatprep.subr.mxu0 0.0
    %2583 = vmatpush1.msra.mxu0 0.0
    %2584 = vmatprep.subr.mxu0 0.0
    %2585 = vmatpush1.msra.mxu0 0.0
    %2586 = vmatprep.subr.mxu0 0.0
    %2587 = vmatpush1.msra.mxu0 0.0
    %2588 = vmatprep.subr.mxu0 0.0
    %2589 = vmatpush1.msra.mxu0 0.0
    %2590 = vmatprep.subr.mxu0 0.0
    %2591 = vmatpush1.msra.mxu0 0.0
    %2592 = vmatprep.subr.mxu0 0.0
    %2593 = vmatpush1.msra.mxu0 0.0
    %2594 = vmatprep.subr.mxu0 0.0
    %2595 = vmatpush1.msra.mxu0 0.0
    %2596 = vmatprep.subr.mxu0 0.0
    %2597 = vmatpush1.msra.mxu0 0.0
    %2598 = vmatprep.subr.mxu0 0.0
    %2599 = vmatpush1.msra.mxu0 0.0
    %2600 = vmatprep.subr.mxu0 0.0
    %2601 = vmatpush1.msra.mxu0 0.0
    %2602 = vmatprep.subr.mxu0 0.0
    %2603 = vmatpush1.msra.mxu0 0.0
    %2604 = vmatprep.subr.mxu0 0.0
    %2605 = vmatpush1.msra.mxu0 0.0
    %2606 = vmatprep.subr.mxu0 0.0
    %2607 = vmatpush1.msra.mxu0 0.0
    %2608 = vmatprep.subr.mxu0 0.0
    %2609 = vmatpush1.msra.mxu0 0.0
    %2610 = vmatprep.subr.mxu0 0.0
    %2611 = vmatpush1.msra.mxu0 0.0
    %2612 = vmatprep.subr.mxu0 0.0
    %2613 = vmatpush1.msra.mxu0 0.0
    %2614 = vmatprep.subr.mxu0 0.0
    %2615 = vmatpush1.msra.mxu0 0.0
    %2616 = vmatprep.subr.mxu0 0.0
    %2617 = vmatpush1.msra.mxu0 0.0
    %2618 = vmatprep.subr.mxu0 0.0
    %2619 = vmatpush1.msra.mxu0 0.0
    %2620 = vmatprep.subr.mxu0 0.0
    %2621 = vmatpush1.msra.mxu0 0.0
    %2622 = vmatprep.subr.mxu0 0.0
    %2623 = vmatpush1.msra.mxu0 0.0
    %2624 = vmatprep.subr.mxu0 0.0
    %2625 = vmatpush1.msra.mxu0 0.0
    %2626 = vmatprep.subr.mxu0 0.0
    %2627 = vmatpush1.msra.mxu0 0.0
    %2628 = vmatprep.subr.mxu0 0.0
    %2629 = vmatpush1.msra.mxu0 0.0
    %2630 = vmatprep.subr.mxu0 0.0
    %2631 = vmatpush1.msra.mxu0 0.0
    %2632 = vmatprep.subr.mxu0 0.0
    %2633 = vmatpush1.msra.mxu0 0.0
    %2634 = vmatprep.subr.mxu0 0.0
    %2635 = vmatpush1.msra.mxu0 0.0
    %2636 = vmatprep.mubr.f32.mxu0 0.0
    %2637 = vmatmul.mubr.f32.gmra.mrb[0].mxu0 %v2561
    %v2638 = vpop.f32.mrb[0].mxu0
    %v2639 = vadd.f32 0.0, %v2638
    %v2640 = vpop.f32.mrb[0].mxu0
    %2641 = vmatprep.mubr.f32.mxu0 0.0
    %2642 = vmatmul.mubr.f32.gmra.mrb[0].mxu0 %v2564
    %v2643 = vpop.f32.mrb[0].mxu0
    %v2644 = vadd.f32 0.0, %v2643
    %v2645 = vpop.f32.mrb[0].mxu0
    %2646 = vmatprep.mubr.f32.mxu0 0.0
    %2647 = vmatmul.mubr.f32.gmra.mrb[0].mxu0 %v2567
    %v2648 = vpop.f32.mrb[0].mxu0
    %v2649 = vadd.f32 0.0, %v2648
    %v2650 = vpop.f32.mrb[0].mxu0
    %2651 = vmatprep.mubr.f32.mxu0 0.0
    %2652 = vmatmul.mubr.f32.gmra.mrb[0].mxu0 %v2570
    %v2653 = vpop.f32.mrb[0].mxu0
    %v2654 = vadd.f32 0.0, %v2653
    %v2655 = vpop.f32.mrb[0].mxu0
    %2656 = vdwg.mxu0
    %2657 = vmatprep.subr.mxu0 0.0
    %2658 = vmatpush1.msra.mxu0 %v2639
    %2659 = vmatprep.subr.mxu0 0.0
    %2660 = vmatpush1.msra.mxu0 %v2644
    %2661 = vmatprep.subr.mxu0 0.0
    %2662 = vmatpush1.msra.mxu0 %v2649
    %2663 = vmatprep.subr.mxu0 0.0
    %2664 = vmatpush1.msra.mxu0 %v2654
    %2665 = vmatprep.subr.mxu0 0.0
    %2666 = vmatpush1.msra.mxu0 0.0
    %2667 = vmatprep.subr.mxu0 0.0
    %2668 = vmatpush1.msra.mxu0 0.0
    %2669 = vmatprep.subr.mxu0 0.0
    %2670 = vmatpush1.msra.mxu0 0.0
    %2671 = vmatprep.subr.mxu0 0.0
    %2672 = vmatpush1.msra.mxu0 0.0
    %2673 = vmatprep.subr.mxu0 0.0
    %2674 = vmatpush1.msra.mxu0 0.0
    %2675 = vmatprep.subr.mxu0 0.0
    %2676 = vmatpush1.msra.mxu0 0.0
    %2677 = vmatprep.subr.mxu0 0.0
    %2678 = vmatpush1.msra.mxu0 0.0
    %2679 = vmatprep.subr.mxu0 0.0
    %2680 = vmatpush1.msra.mxu0 0.0
    %2681 = vmatprep.subr.mxu0 0.0
    %2682 = vmatpush1.msra.mxu0 0.0
    %2683 = vmatprep.subr.mxu0 0.0
    %2684 = vmatpush1.msra.mxu0 0.0
    %2685 = vmatprep.subr.mxu0 0.0
    %2686 = vmatpush1.msra.mxu0 0.0
    %2687 = vmatprep.subr.mxu0 0.0
    %2688 = vmatpush1.msra.mxu0 0.0
    %2689 = vmatprep.subr.mxu0 0.0
    %2690 = vmatpush1.msra.mxu0 0.0
    %2691 = vmatprep.subr.mxu0 0.0
    %2692 = vmatpush1.msra.mxu0 0.0
    %2693 = vmatprep.subr.mxu0 0.0
    %2694 = vmatpush1.msra.mxu0 0.0
    %2695 = vmatprep.subr.mxu0 0.0
    %2696 = vmatpush1.msra.mxu0 0.0
    %2697 = vmatprep.subr.mxu0 0.0
    %2698 = vmatpush1.msra.mxu0 0.0
    %2699 = vmatprep.subr.mxu0 0.0
    %2700 = vmatpush1.msra.mxu0 0.0
    %2701 = vmatprep.subr.mxu0 0.0
    %2702 = vmatpush1.msra.mxu0 0.0
    %2703 = vmatprep.subr.mxu0 0.0
    %2704 = vmatpush1.msra.mxu0 0.0
    %2705 = vmatprep.subr.mxu0 0.0
    %2706 = vmatpush1.msra.mxu0 0.0
    %2707 = vmatprep.subr.mxu0 0.0
    %2708 = vmatpush1.msra.mxu0 0.0
    %2709 = vmatprep.subr.mxu0 0.0
    %2710 = vmatpush1.msra.mxu0 0.0
    %2711 = vmatprep.subr.mxu0 0.0
    %2712 = vmatpush1.msra.mxu0 0.0
    %2713 = vmatprep.subr.mxu0 0.0
    %2714 = vmatpush1.msra.mxu0 0.0
    %2715 = vmatprep.subr.mxu0 0.0
    %2716 = vmatpush1.msra.mxu0 0.0
    %2717 = vmatprep.subr.mxu0 0.0
    %2718 = vmatpush1.msra.mxu0 0.0
    %2719 = vmatprep.subr.mxu0 0.0
    %2720 = vmatpush1.msra.mxu0 0.0
    %2721 = vmatprep.mubr.f32.mxu0 0.0
    %2722 = vmatmul.mubr.f32.gmra.mrb[0].mxu0 %v2252
    %v2723 = vpop.f32.mrb[0].mxu0
    %v2724 = vadd.f32 0.0, %v2723
    %v2725 = vpop.f32.mrb[0].mxu0
    %2726 = vmatprep.mubr.f32.mxu0 0.0
    %2727 = vmatmul.mubr.f32.gmra.mrb[0].mxu0 %v2255
    %v2728 = vpop.f32.mrb[0].mxu0
    %v2729 = vadd.f32 0.0, %v2728
    %v2730 = vpop.f32.mrb[0].mxu0
    %2731 = vmatprep.mubr.f32.mxu0 0.0
    %2732 = vmatmul.mubr.f32.gmra.mrb[0].mxu0 %v2258
    %v2733 = vpop.f32.mrb[0].mxu0
    %v2734 = vadd.f32 0.0, %v2733
    %v2735 = vpop.f32.mrb[0].mxu0
    %2736 = vmatprep.mubr.f32.mxu0 0.0
    %2737 = vmatmul.mubr.f32.gmra.mrb[0].mxu0 %v2261
    %v2738 = vpop.f32.mrb[0].mxu0
    %v2739 = vadd.f32 0.0, %v2738
    %v2740 = vpop.f32.mrb[0].mxu0
    %2741 = vdwg.mxu0
    %v2742 = vmax.f32 %v2724, 0.0
    %v2743 = vmax.f32 %v2729, 0.0
    %v2744 = vmax.f32 %v2734, 0.0
    %v2745 = vmax.f32 %v2739, 0.0
    %v2746 = vadd.f32 %v2742, %v2551
    %v2747 = vadd.f32 %v2743, %v2552
    %v2748 = vadd.f32 %v2744, %v2553
    %v2749 = vadd.f32 %v2745, %v2554
    %v2750 = vld [vmem:[%s7] sm:$0xff]
    %v2751 = vld [vmem:[%s7 + $0x8] sm:$0xff]
    %v2752 = vld [vmem:[%s7 + $0x10] sm:$0xff]
    %v2753 = vld [vmem:[%s7 + $0x18] sm:$0xff]
    %v2754 = vld [vmem:[%s8] sm:$0x1]
    %v2756 = vlaneseq
    %v2757 = vshrl.u32 %v2756, 7
    %v2758 = vsub.s32 0, %v2757
    %v2759 = vrot.slane %v2754, %v2758
    %v2762 = vsel %vm447, %v2746, 0
    %v2765 = vsel %vm447, %v2747, 0
    %v2768 = vsel %vm447, %v2748, 0
    %v2771 = vsel %vm447, %v2749, 0
    %2773 = vmatprep.subr.mxu0 0.0
    %2774 = vmatpush1.msra.mxu0 %v2750
    %2775 = vmatprep.subr.mxu0 0.0
    %2776 = vmatpush1.msra.mxu0 %v2751
    %2777 = vmatprep.subr.mxu0 0.0
    %2778 = vmatpush1.msra.mxu0 %v2752
    %2779 = vmatprep.subr.mxu0 0.0
    %2780 = vmatpush1.msra.mxu0 %v2753
    %2781 = vmatprep.subr.mxu0 0.0
    %2782 = vmatpush1.msra.mxu0 0.0
    %2783 = vmatprep.subr.mxu0 0.0
    %2784 = vmatpush1.msra.mxu0 0.0
    %2785 = vmatprep.subr.mxu0 0.0
    %2786 = vmatpush1.msra.mxu0 0.0
    %2787 = vmatprep.subr.mxu0 0.0
    %2788 = vmatpush1.msra.mxu0 0.0
    %2789 = vmatprep.subr.mxu0 0.0
    %2790 = vmatpush1.msra.mxu0 0.0
    %2791 = vmatprep.subr.mxu0 0.0
    %2792 = vmatpush1.msra.mxu0 0.0
    %2793 = vmatprep.subr.mxu0 0.0
    %2794 = vmatpush1.msra.mxu0 0.0
    %2795 = vmatprep.subr.mxu0 0.0
    %2796 = vmatpush1.msra.mxu0 0.0
    %2797 = vmatprep.subr.mxu0 0.0
    %2798 = vmatpush1.msra.mxu0 0.0
    %2799 = vmatprep.subr.mxu0 0.0
    %2800 = vmatpush1.msra.mxu0 0.0
    %2801 = vmatprep.subr.mxu0 0.0
    %2802 = vmatpush1.msra.mxu0 0.0
    %2803 = vmatprep.subr.mxu0 0.0
    %2804 = vmatpush1.msra.mxu0 0.0
    %2805 = vmatprep.subr.mxu0 0.0
    %2806 = vmatpush1.msra.mxu0 0.0
    %2807 = vmatprep.subr.mxu0 0.0
    %2808 = vmatpush1.msra.mxu0 0.0
    %2809 = vmatprep.subr.mxu0 0.0
    %2810 = vmatpush1.msra.mxu0 0.0
    %2811 = vmatprep.subr.mxu0 0.0
    %2812 = vmatpush1.msra.mxu0 0.0
    %2813 = vmatprep.subr.mxu0 0.0
    %2814 = vmatpush1.msra.mxu0 0.0
    %2815 = vmatprep.subr.mxu0 0.0
    %2816 = vmatpush1.msra.mxu0 0.0
    %2817 = vmatprep.subr.mxu0 0.0
    %2818 = vmatpush1.msra.mxu0 0.0
    %2819 = vmatprep.subr.mxu0 0.0
    %2820 = vmatpush1.msra.mxu0 0.0
    %2821 = vmatprep.subr.mxu0 0.0
    %2822 = vmatpush1.msra.mxu0 0.0
    %2823 = vmatprep.subr.mxu0 0.0
    %2824 = vmatpush1.msra.mxu0 0.0
    %2825 = vmatprep.subr.mxu0 0.0
    %2826 = vmatpush1.msra.mxu0 0.0
    %2827 = vmatprep.subr.mxu0 0.0
    %2828 = vmatpush1.msra.mxu0 0.0
    %2829 = vmatprep.subr.mxu0 0.0
    %2830 = vmatpush1.msra.mxu0 0.0
    %2831 = vmatprep.subr.mxu0 0.0
    %2832 = vmatpush1.msra.mxu0 0.0
    %2833 = vmatprep.subr.mxu0 0.0
    %2834 = vmatpush1.msra.mxu0 0.0
    %2835 = vmatprep.subr.mxu0 0.0
    %2836 = vmatpush1.msra.mxu0 0.0
    %2837 = vmatprep.mubr.f32.mxu0 0.0
    %2838 = vmatmul.mubr.f32.gmra.mrb[0].mxu0 %v2762
    %v2839 = vpop.f32.mrb[0].mxu0
    %v2840 = vadd.f32 %v2759, %v2839
    %v2841 = vpop.f32.mrb[0].mxu0
    %2842 = vmatprep.mubr.f32.mxu0 0.0
    %2843 = vmatmul.mubr.f32.gmra.mrb[0].mxu0 %v2765
    %v2844 = vpop.f32.mrb[0].mxu0
    %v2845 = vadd.f32 %v2759, %v2844
    %v2846 = vpop.f32.mrb[0].mxu0
    %2847 = vmatprep.mubr.f32.mxu0 0.0
    %2848 = vmatmul.mubr.f32.gmra.mrb[0].mxu0 %v2768
    %v2849 = vpop.f32.mrb[0].mxu0
    %v2850 = vadd.f32 %v2759, %v2849
    %v2851 = vpop.f32.mrb[0].mxu0
    %2852 = vmatprep.mubr.f32.mxu0 0.0
    %2853 = vmatmul.mubr.f32.gmra.mrb[0].mxu0 %v2771
    %v2854 = vpop.f32.mrb[0].mxu0
    %v2855 = vadd.f32 %v2759, %v2854
    %v2856 = vpop.f32.mrb[0].mxu0
    %2857 = vdwg.mxu0
    %2858 = vst [vmem:[#allocation3] sm:$0xff] %v2840
    %2859 = vst [vmem:[#allocation3 + $0x8] sm:$0xff] %v2845
    %2860 = vst [vmem:[#allocation3 + $0x10] sm:$0xff] %v2850
    %2861 = vst [vmem:[#allocation3 + $0x18] sm:$0xff] %v2855
    // Predicated region
    $region38: #{tpu_custom_call.1} parent=1 // pred_check
      _
    $region39: #{tpu_custom_call.1} parent=1 // pred_check_branch
      %2863 = sbr.rel (0) target = $region41
    $region40: #{tpu_custom_call.1} parent=1 // pred_region
      %s2865 = ssub.s32 512, 512
      %2866 = vsyncadd [#allocation4], %s2865
      %s2867 = sshll.u32 [#allocation3], 4
      %s2868 = int_to_ptr.vmem [resolvable:$true] %s2867
      %2873 = dma.vmem_to_hbm [thread:$0]  %s2868, 512, %s9, [#allocation4], 128, 128, 8
    $region41: #{tpu_custom_call.1} parent=1 // pred_fallthru
      _
    // Predicated region
    $region42: #{tpu_custom_call.1} parent=1 // pred_check
      _
    $region43: #{tpu_custom_call.1} parent=1 // pred_check_branch
      %2875 = sbr.rel (0) target = $region45
    $region44: #{tpu_custom_call.1} parent=1 // pred_region
      %2876 = dma.done [#allocation4], 512
    $region45: #{tpu_custom_call.1} parent=1 // pred_fallthru
      _
    %2877 = vsyncpa [#allocation4], 1

</llo_original>
